<compile_context>
chip_gen: v5e
topology: v5e:2x2
jax: 0.10.0
libtpu: 0.0.40
codegen_flags: <defaults>
</compile_context>

<pallas_src>
import math

import numpy as np
import jax
import jax.numpy as jnp
from jax import lax
from jax.experimental import pallas as pl
from jax.experimental.pallas import tpu as pltpu

VMEM = pltpu.MemorySpace.VMEM


# --------------------------- fused forward kernel ----------------------------
def _make_fused_kernel(num_heads):
    def kernel(emb_ref,
               wih_e_ref, whh_e_ref, b_e_ref,          # encoder LSTM
               wih_d_ref, whh_d_ref, b_d_ref,          # decoder LSTM
               wqkv_ref, bqkv_ref, wo_ref, bo_ref,     # self-attention
               wfc_ref, bfc_ref,                       # final linear
               out_ref, dec_out_ref,                   # outputs
               enc_scr):                               # VMEM scratch (B,S,H)
        B, S, E = emb_ref.shape
        H = whh_e_ref.shape[0]
        HG = 4 * H

        emb_flat = emb_ref[...].reshape(B * S, E)      # (B*S, E)

        def run_lstm(wih_ref, whh_ref, b_ref, h0, c0, y_ref):
            # Hoisted input projection: one (B*S,E)@(E,4H) matmul + bias,
            # instead of S tiny per-step matmuls inside the serial chain.
            xw = (jnp.dot(emb_flat, wih_ref[...],
                          preferred_element_type=jnp.float32)
                  + b_ref[...]).reshape(B, S, HG)      # (B, S, 4H)
            whh = whh_ref[...]                          # (H, 4H)
            h, c = h0, c0
            # Fully unrolled recurrence (S static): same effect as
            # lax.fori_loop(..., unroll=True) but with concrete step indices,
            # so all ref/value accesses below are static slices.
            for t in range(S):
                gates = xw[:, t, :] + jnp.dot(
                    h, whh, preferred_element_type=jnp.float32)  # (B, 4H)
                # Gate columns pre-permuted to [i, f, o, g] in prepare_params.
                sig = jax.nn.sigmoid(gates[:, :3 * H])
                i_g = sig[:, 0:H]
                f_g = sig[:, H:2 * H]
                o_g = sig[:, 2 * H:3 * H]
                g_g = jnp.tanh(gates[:, 3 * H:])
                c = f_g * c + i_g * g_g
                h = o_g * jnp.tanh(c)
                y_ref[:, t, :] = h
            return h, c

        zeros = jnp.zeros((B, H), jnp.float32)
        h_n, c_n = run_lstm(wih_e_ref, whh_e_ref, b_e_ref, zeros, zeros, enc_scr)

        # ---------------- multi-head self-attention + seq-sum + FC ----------------
        hd = H // num_heads
        scale = 1.0 / math.sqrt(hd)

        x2 = enc_scr[...].reshape(B * S, H)             # (B*S, H)
        # Fused QKV projection: one (B*S,H)@(H,3H) matmul.
        qkv = jnp.dot(x2, wqkv_ref[...],
                      preferred_element_type=jnp.float32) + bqkv_ref[...]
        q3 = qkv[:, 0:H].reshape(B, S, H)
        k3 = qkv[:, H:2 * H].reshape(B, S, H)
        v3 = qkv[:, 2 * H:3 * H].reshape(B, S, H)

        # context = sum_s[(concat_h oh)[b,s,:] @ Wo + bo]
        #         = sum_h (sum_s oh_h[b,s,:]) @ Wo[h*hd:(h+1)*hd,:] + S*bo
        # -> no in-kernel concatenates; batched over B via einsum per head.
        ctx = jnp.zeros((B, H), jnp.float32)
        for h_i in range(num_heads):
            c0, c1 = h_i * hd, (h_i + 1) * hd
            qh = q3[:, :, c0:c1]                        # (B, S, hd)
            kh = k3[:, :, c0:c1]
            vh = v3[:, :, c0:c1]
            s = jnp.einsum('bqd,bkd->bqk', qh, kh,
                           preferred_element_type=jnp.float32) * scale
            m = jnp.max(s, axis=-1, keepdims=True)
            e = jnp.exp(s - m)
            p = e * pl.reciprocal(jnp.sum(e, axis=-1, keepdims=True),
                                  approx=True)
            oh = jnp.einsum('bqk,bkd->bqd', p, vh,
                            preferred_element_type=jnp.float32)  # (B, S, hd)
            ctx = ctx + jnp.dot(jnp.sum(oh, axis=1), wo_ref[c0:c1, :],
                                preferred_element_type=jnp.float32)
        ctx = ctx + float(S) * bo_ref[...]              # (B, H)

        out_ref[...] = (jnp.dot(ctx, wfc_ref[...],
                                preferred_element_type=jnp.float32)
                        + bfc_ref[...])                 # (B, O)

        # ---- decoder LSTM (its output is discarded by the PyTorch module's
        #      return value; computed here for forward-pass parity) ----
        # TODO(synk): on v7x, run this branch on the second TensorCore
        # (core-parallel grid axis / pl.core_map) concurrently with attention.
        run_lstm(wih_d_ref, whh_d_ref, b_d_ref, h_n, c_n, dec_out_ref)

    return kernel


# ------------------------ one-time parameter preparation ---------------------
def prepare_params(params):
    """Convert torch-layout params into kernel-ready layout once:
    gate blocks reordered [i,f,g,o]->[i,f,o,g], weights pre-transposed to
    x@W form, biases combined, QKV stacked."""
    H = params["encoder"][1].shape[1]

    def lstm_prep(w_ih, w_hh, b_ih, b_hh):
        def reorder(m):  # torch rows [i,f,g,o] -> [i,f,o,g]
            return jnp.concatenate([m[0:2 * H], m[3 * H:4 * H], m[2 * H:3 * H]],
                                   axis=0)
        return (reorder(w_ih).T,                       # (E, 4H)
                reorder(w_hh).T,                       # (H, 4H)
                reorder(b_ih + b_hh).reshape(1, 4 * H))

    wq, wk, wv, bq, bk, bv, wo, bo = params["mha"]
    w_fc, b_fc = params["fc"]
    return {
        "embedding": params["embedding"],
        "encoder": lstm_prep(*params["encoder"]),
        "decoder": lstm_prep(*params["decoder"]),
        "w_qkv": jnp.concatenate([wq, wk, wv], axis=1),          # (H, 3H)
        "b_qkv": jnp.concatenate([bq, bk, bv]).reshape(1, -1),   # (1, 3H)
        "w_o": wo,                                               # (H, H)
        "b_o": bo.reshape(1, -1),                                # (1, H)
        "w_fc": w_fc,                                            # (H, O)
        "b_fc": b_fc.reshape(1, -1),                             # (1, O)
    }


# ------------------------------- forward pass --------------------------------
def seq2seq_attention_forward(x_idx, prep, num_heads):
    B, S = x_idx.shape
    H = prep["encoder"][1].shape[0]
    O = prep["w_fc"].shape[1]

    # Embedding lookup: pure data movement -> plain XLA gather (no kernel needed).
    emb = jnp.take(prep["embedding"], x_idx, axis=0)    # (B, S, E)

    kernel = _make_fused_kernel(num_heads)
    n_in = 13
    out, dec_out = pl.pallas_call(
        kernel,
        out_shape=(jax.ShapeDtypeStruct((B, O), jnp.float32),
                   jax.ShapeDtypeStruct((B, S, H), jnp.float32)),
        in_specs=[pl.BlockSpec(memory_space=VMEM)] * n_in,
        out_specs=(pl.BlockSpec(memory_space=VMEM),
                   pl.BlockSpec(memory_space=VMEM)),
        scratch_shapes=[pltpu.VMEM((B, S, H), jnp.float32)],
    )(emb,
      *prep["encoder"], *prep["decoder"],
      prep["w_qkv"], prep["b_qkv"], prep["w_o"], prep["b_o"],
      prep["w_fc"], prep["b_fc"])
    return out, dec_out


# ----------------------------- pure-JAX reference -----------------------------
def _ref_lstm(emb, w_ih, w_hh, b_ih, b_hh, h0, c0):
    H = h0.shape[1]

    def step(carry, x_t):
        h, c = carry
        gates = x_t @ w_ih.T + h @ w_hh.T + b_ih + b_hh
        i = jax.nn.sigmoid(gates[:, :H])
        f = jax.nn.sigmoid(gates[:, H:2 * H])
        g = jnp.tanh(gates[:, 2 * H:3 * H])
        o = jax.nn.sigmoid(gates[:, 3 * H:])
        c = f * c + i * g
        h = o * jnp.tanh(c)
        return (h, c), h

    (hN, cN), outs = lax.scan(step, (h0, c0), jnp.transpose(emb, (1, 0, 2)))
    return jnp.transpose(outs, (1, 0, 2)), hN, cN


def ref_forward(x_idx, params, num_heads):
    emb = params["embedding"][x_idx]
    B, S, _ = emb.shape
    H = params["encoder"][1].shape[1]
    h0 = jnp.zeros((B, H), jnp.float32)
    enc_out, hN, cN = _ref_lstm(emb, *params["encoder"], h0, h0)
    wq, wk, wv, bq, bk, bv, wo, bo = params["mha"]
    q, k, v = enc_out @ wq + bq, enc_out @ wk + bk, enc_out @ wv + bv
    hd = H // num_heads

    def split(t):
        return t.reshape(B, S, num_heads, hd).transpose(0, 2, 1, 3)

    qh, kh, vh = split(q), split(k), split(v)
    s = jnp.einsum('bhqd,bhkd->bhqk', qh, kh) / math.sqrt(hd)
    p = jax.nn.softmax(s, axis=-1)
    o = jnp.einsum('bhqk,bhkd->bhqd', p, vh).transpose(0, 2, 1, 3).reshape(B, S, H)
    attn = o @ wo + bo
    ctx = jnp.sum(attn, axis=1)
    out = ctx @ params["fc"][0] + params["fc"][1]
    dec_out, _, _ = _ref_lstm(emb, *params["decoder"], hN, cN)
    return out, dec_out


if __name__ == "__main__":
    V, E, H, O, NH = 50, 16, 32, 10, 4       # vocab, embed, hidden, output, heads
    B, S = 2, 8                              # batch, sequence length

    key = jax.random.PRNGKey(0)
    ks = jax.random.split(key, 24)
    scale = 0.1

    def rnd(k, shape):
        return jax.random.normal(k, shape, jnp.float32) * scale

    params = {
        "embedding": rnd(ks[0], (V, E)),
        # LSTM weights in torch layout: (4H, E)/(4H, H), gate order i,f,g,o.
        "encoder": (rnd(ks[1], (4 * H, E)), rnd(ks[2], (4 * H, H)),
                    rnd(ks[3], (4 * H,)), rnd(ks[4], (4 * H,))),
        "decoder": (rnd(ks[5], (4 * H, E)), rnd(ks[6], (4 * H, H)),
                    rnd(ks[7], (4 * H,)), rnd(ks[8], (4 * H,))),
        # MHA weights stored in "x @ W" form (already transposed vs torch's W^T).
        "mha": (rnd(ks[9], (H, H)), rnd(ks[10], (H, H)), rnd(ks[11], (H, H)),
                rnd(ks[12], (H,)), rnd(ks[13], (H,)), rnd(ks[14], (H,)),
                rnd(ks[15], (H, H)), rnd(ks[16], (H,))),
        "fc": (rnd(ks[17], (H, O)), rnd(ks[18], (O,))),
    }
    x_idx = jax.random.randint(ks[19], (B, S), 0, V, dtype=jnp.int32)

    prep = prepare_params(params)            # one-time layout conversion
    forward = jax.jit(seq2seq_attention_forward, static_argnums=2)
    out, dec_out = forward(x_idx, prep, NH)
    jax.block_until_ready((out, dec_out))

    ref_out, ref_dec = ref_forward(x_idx, params, NH)
    np.testing.assert_allclose(np.asarray(out), np.asarray(ref_out),
                               rtol=1e-2, atol=1e-2)
    np.testing.assert_allclose(np.asarray(dec_out), np.asarray(ref_dec),
                               rtol=1e-2, atol=1e-2)
    print("KERNEL_OK")
</pallas_src>

<mosaic_0001>
module attributes {stable_mosaic.version = 11 : i64} {
  func.func @kernel(%arg0: memref<2x8x16xf32, #tpu.memory_space<vmem>>, %arg1: memref<16x128xf32, #tpu.memory_space<vmem>>, %arg2: memref<32x128xf32, #tpu.memory_space<vmem>>, %arg3: memref<1x128xf32, #tpu.memory_space<vmem>>, %arg4: memref<16x128xf32, #tpu.memory_space<vmem>>, %arg5: memref<32x128xf32, #tpu.memory_space<vmem>>, %arg6: memref<1x128xf32, #tpu.memory_space<vmem>>, %arg7: memref<32x96xf32, #tpu.memory_space<vmem>>, %arg8: memref<1x96xf32, #tpu.memory_space<vmem>>, %arg9: memref<32x32xf32, #tpu.memory_space<vmem>>, %arg10: memref<1x32xf32, #tpu.memory_space<vmem>>, %arg11: memref<32x10xf32, #tpu.memory_space<vmem>>, %arg12: memref<1x10xf32, #tpu.memory_space<vmem>>, %arg13: memref<2x10xf32, #tpu.memory_space<vmem>>, %arg14: memref<2x8x32xf32, #tpu.memory_space<vmem>>, %arg15: memref<2x8x32xf32, #tpu.memory_space<vmem>>) attributes {dimension_semantics = [], scalar_prefetch = 0 : i64, scratch_operands = 1 : i64, tpu.core_type = #tpu.core_type<tc>} {
    %c0 = arith.constant 0 : index
    %c0_0 = arith.constant 0 : index
    %c0_1 = arith.constant 0 : index
    %0 = vector.load %arg0[%c0, %c0_0, %c0_1] : memref<2x8x16xf32, #tpu.memory_space<vmem>>, vector<2x8x16xf32>
    %1 = vector.shape_cast %0 : vector<2x8x16xf32> to vector<16x16xf32>
    %cst = arith.constant 0.000000e+00 : f32
    %2 = vector.broadcast %cst : f32 to vector<2x32xf32>
    %c0_2 = arith.constant 0 : index
    %c0_3 = arith.constant 0 : index
    %3 = vector.load %arg1[%c0_2, %c0_3] : memref<16x128xf32, #tpu.memory_space<vmem>>, vector<16x128xf32>
    %cst_4 = arith.constant dense<0.000000e+00> : vector<16x128xf32>
    %4 = tpu.matmul %1, %3, %cst_4 {dimension_numbers = #tpu.dot_dimension_numbers<[1], [0], [0], [1], [0, 0, 1, 1], [], []>} : vector<16x16xf32>, vector<16x128xf32>, vector<16x128xf32> -> vector<16x128xf32>
    %c0_5 = arith.constant 0 : index
    %c0_6 = arith.constant 0 : index
    %5 = vector.load %arg3[%c0_5, %c0_6] : memref<1x128xf32, #tpu.memory_space<vmem>>, vector<1x128xf32>
    %6 = vector.broadcast %5 : vector<1x128xf32> to vector<16x128xf32>
    %7 = arith.addf %4, %6 : vector<16x128xf32>
    %8 = vector.shape_cast %7 : vector<16x128xf32> to vector<2x8x128xf32>
    %c0_7 = arith.constant 0 : index
    %c0_8 = arith.constant 0 : index
    %9 = vector.load %arg2[%c0_7, %c0_8] : memref<32x128xf32, #tpu.memory_space<vmem>>, vector<32x128xf32>
    %10 = vector.extract_strided_slice %8 {offsets = [0, 0, 0], sizes = [2, 1, 128], strides = [1, 1, 1]} : vector<2x8x128xf32> to vector<2x1x128xf32>
    %11 = vector.shape_cast %10 : vector<2x1x128xf32> to vector<2x128xf32>
    %cst_9 = arith.constant dense<0.000000e+00> : vector<2x128xf32>
    %12 = tpu.matmul %2, %9, %cst_9 {dimension_numbers = #tpu.dot_dimension_numbers<[1], [0], [0], [1], [0, 0, 1, 1], [], []>} : vector<2x32xf32>, vector<32x128xf32>, vector<2x128xf32> -> vector<2x128xf32>
    %13 = arith.addf %11, %12 : vector<2x128xf32>
    %14 = vector.extract_strided_slice %13 {offsets = [0, 0], sizes = [2, 96], strides = [1, 1]} : vector<2x128xf32> to vector<2x96xf32>
    %15 = arith.negf %14 : vector<2x96xf32>
    %16 = math.exp %15 : vector<2x96xf32>
    %cst_10 = arith.constant 1.000000e+00 : f32
    %17 = vector.broadcast %cst_10 : f32 to vector<2x96xf32>
    %18 = arith.addf %17, %16 : vector<2x96xf32>
    %19 = arith.divf %17, %18 : vector<2x96xf32>
    %20 = vector.extract_strided_slice %19 {offsets = [0, 0], sizes = [2, 32], strides = [1, 1]} : vector<2x96xf32> to vector<2x32xf32>
    %21 = vector.extract_strided_slice %19 {offsets = [0, 32], sizes = [2, 32], strides = [1, 1]} : vector<2x96xf32> to vector<2x32xf32>
    %22 = vector.extract_strided_slice %19 {offsets = [0, 64], sizes = [2, 32], strides = [1, 1]} : vector<2x96xf32> to vector<2x32xf32>
    %23 = vector.extract_strided_slice %13 {offsets = [0, 96], sizes = [2, 32], strides = [1, 1]} : vector<2x128xf32> to vector<2x32xf32>
    %24 = math.tanh %23 : vector<2x32xf32>
    %25 = arith.mulf %21, %2 : vector<2x32xf32>
    %26 = arith.mulf %20, %24 : vector<2x32xf32>
    %27 = arith.addf %25, %26 : vector<2x32xf32>
    %28 = math.tanh %27 : vector<2x32xf32>
    %29 = arith.mulf %22, %28 : vector<2x32xf32>
    %c0_11 = arith.constant 0 : index
    %c0_12 = arith.constant 0 : index
    %c0_13 = arith.constant 0 : index
    %30 = vector.load %arg15[%c0_11, %c0_12, %c0_13] : memref<2x8x32xf32, #tpu.memory_space<vmem>>, vector<2x1x32xf32>
    %31 = vector.shape_cast %30 : vector<2x1x32xf32> to vector<2x32xf32>
    %32 = vector.shape_cast %29 : vector<2x32xf32> to vector<2x1x32xf32>
    tpu.vector_store %arg15[%c0_11, %c0_12, %c0_13], %32 {strides = array<i32>} : memref<2x8x32xf32, #tpu.memory_space<vmem>>, vector<2x1x32xf32>,
    %33 = vector.extract_strided_slice %8 {offsets = [0, 1, 0], sizes = [2, 1, 128], strides = [1, 1, 1]} : vector<2x8x128xf32> to vector<2x1x128xf32>
    %34 = vector.shape_cast %33 : vector<2x1x128xf32> to vector<2x128xf32>
    %cst_14 = arith.constant dense<0.000000e+00> : vector<2x128xf32>
    %35 = tpu.matmul %29, %9, %cst_14 {dimension_numbers = #tpu.dot_dimension_numbers<[1], [0], [0], [1], [0, 0, 1, 1], [], []>} : vector<2x32xf32>, vector<32x128xf32>, vector<2x128xf32> -> vector<2x128xf32>
    %36 = arith.addf %34, %35 : vector<2x128xf32>
    %37 = vector.extract_strided_slice %36 {offsets = [0, 0], sizes = [2, 96], strides = [1, 1]} : vector<2x128xf32> to vector<2x96xf32>
    %38 = arith.negf %37 : vector<2x96xf32>
    %39 = math.exp %38 : vector<2x96xf32>
    %cst_15 = arith.constant 1.000000e+00 : f32
    %40 = vector.broadcast %cst_15 : f32 to vector<2x96xf32>
    %41 = arith.addf %40, %39 : vector<2x96xf32>
    %42 = arith.divf %40, %41 : vector<2x96xf32>
    %43 = vector.extract_strided_slice %42 {offsets = [0, 0], sizes = [2, 32], strides = [1, 1]} : vector<2x96xf32> to vector<2x32xf32>
    %44 = vector.extract_strided_slice %42 {offsets = [0, 32], sizes = [2, 32], strides = [1, 1]} : vector<2x96xf32> to vector<2x32xf32>
    %45 = vector.extract_strided_slice %42 {offsets = [0, 64], sizes = [2, 32], strides = [1, 1]} : vector<2x96xf32> to vector<2x32xf32>
    %46 = vector.extract_strided_slice %36 {offsets = [0, 96], sizes = [2, 32], strides = [1, 1]} : vector<2x128xf32> to vector<2x32xf32>
    %47 = math.tanh %46 : vector<2x32xf32>
    %48 = arith.mulf %44, %27 : vector<2x32xf32>
    %49 = arith.mulf %43, %47 : vector<2x32xf32>
    %50 = arith.addf %48, %49 : vector<2x32xf32>
    %51 = math.tanh %50 : vector<2x32xf32>
    %52 = arith.mulf %45, %51 : vector<2x32xf32>
    %c0_16 = arith.constant 0 : index
    %c1 = arith.constant 1 : index
    %c0_17 = arith.constant 0 : index
    %53 = vector.load %arg15[%c0_16, %c1, %c0_17] : memref<2x8x32xf32, #tpu.memory_space<vmem>>, vector<2x1x32xf32>
    %54 = vector.shape_cast %53 : vector<2x1x32xf32> to vector<2x32xf32>
    %55 = vector.shape_cast %52 : vector<2x32xf32> to vector<2x1x32xf32>
    tpu.vector_store %arg15[%c0_16, %c1, %c0_17], %55 {strides = array<i32>} : memref<2x8x32xf32, #tpu.memory_space<vmem>>, vector<2x1x32xf32>,
    %56 = vector.extract_strided_slice %8 {offsets = [0, 2, 0], sizes = [2, 1, 128], strides = [1, 1, 1]} : vector<2x8x128xf32> to vector<2x1x128xf32>
    %57 = vector.shape_cast %56 : vector<2x1x128xf32> to vector<2x128xf32>
    %cst_18 = arith.constant dense<0.000000e+00> : vector<2x128xf32>
    %58 = tpu.matmul %52, %9, %cst_18 {dimension_numbers = #tpu.dot_dimension_numbers<[1], [0], [0], [1], [0, 0, 1, 1], [], []>} : vector<2x32xf32>, vector<32x128xf32>, vector<2x128xf32> -> vector<2x128xf32>
    %59 = arith.addf %57, %58 : vector<2x128xf32>
    %60 = vector.extract_strided_slice %59 {offsets = [0, 0], sizes = [2, 96], strides = [1, 1]} : vector<2x128xf32> to vector<2x96xf32>
    %61 = arith.negf %60 : vector<2x96xf32>
    %62 = math.exp %61 : vector<2x96xf32>
    %cst_19 = arith.constant 1.000000e+00 : f32
    %63 = vector.broadcast %cst_19 : f32 to vector<2x96xf32>
    %64 = arith.addf %63, %62 : vector<2x96xf32>
    %65 = arith.divf %63, %64 : vector<2x96xf32>
    %66 = vector.extract_strided_slice %65 {offsets = [0, 0], sizes = [2, 32], strides = [1, 1]} : vector<2x96xf32> to vector<2x32xf32>
    %67 = vector.extract_strided_slice %65 {offsets = [0, 32], sizes = [2, 32], strides = [1, 1]} : vector<2x96xf32> to vector<2x32xf32>
    %68 = vector.extract_strided_slice %65 {offsets = [0, 64], sizes = [2, 32], strides = [1, 1]} : vector<2x96xf32> to vector<2x32xf32>
    %69 = vector.extract_strided_slice %59 {offsets = [0, 96], sizes = [2, 32], strides = [1, 1]} : vector<2x128xf32> to vector<2x32xf32>
    %70 = math.tanh %69 : vector<2x32xf32>
    %71 = arith.mulf %67, %50 : vector<2x32xf32>
    %72 = arith.mulf %66, %70 : vector<2x32xf32>
    %73 = arith.addf %71, %72 : vector<2x32xf32>
    %74 = math.tanh %73 : vector<2x32xf32>
    %75 = arith.mulf %68, %74 : vector<2x32xf32>
    %c0_20 = arith.constant 0 : index
    %c2 = arith.constant 2 : index
    %c0_21 = arith.constant 0 : index
    %76 = vector.load %arg15[%c0_20, %c2, %c0_21] : memref<2x8x32xf32, #tpu.memory_space<vmem>>, vector<2x1x32xf32>
    %77 = vector.shape_cast %76 : vector<2x1x32xf32> to vector<2x32xf32>
    %78 = vector.shape_cast %75 : vector<2x32xf32> to vector<2x1x32xf32>
    tpu.vector_store %arg15[%c0_20, %c2, %c0_21], %78 {strides = array<i32>} : memref<2x8x32xf32, #tpu.memory_space<vmem>>, vector<2x1x32xf32>,
    %79 = vector.extract_strided_slice %8 {offsets = [0, 3, 0], sizes = [2, 1, 128], strides = [1, 1, 1]} : vector<2x8x128xf32> to vector<2x1x128xf32>
    %80 = vector.shape_cast %79 : vector<2x1x128xf32> to vector<2x128xf32>
    %cst_22 = arith.constant dense<0.000000e+00> : vector<2x128xf32>
    %81 = tpu.matmul %75, %9, %cst_22 {dimension_numbers = #tpu.dot_dimension_numbers<[1], [0], [0], [1], [0, 0, 1, 1], [], []>} : vector<2x32xf32>, vector<32x128xf32>, vector<2x128xf32> -> vector<2x128xf32>
    %82 = arith.addf %80, %81 : vector<2x128xf32>
    %83 = vector.extract_strided_slice %82 {offsets = [0, 0], sizes = [2, 96], strides = [1, 1]} : vector<2x128xf32> to vector<2x96xf32>
    %84 = arith.negf %83 : vector<2x96xf32>
    %85 = math.exp %84 : vector<2x96xf32>
    %cst_23 = arith.constant 1.000000e+00 : f32
    %86 = vector.broadcast %cst_23 : f32 to vector<2x96xf32>
    %87 = arith.addf %86, %85 : vector<2x96xf32>
    %88 = arith.divf %86, %87 : vector<2x96xf32>
    %89 = vector.extract_strided_slice %88 {offsets = [0, 0], sizes = [2, 32], strides = [1, 1]} : vector<2x96xf32> to vector<2x32xf32>
    %90 = vector.extract_strided_slice %88 {offsets = [0, 32], sizes = [2, 32], strides = [1, 1]} : vector<2x96xf32> to vector<2x32xf32>
    %91 = vector.extract_strided_slice %88 {offsets = [0, 64], sizes = [2, 32], strides = [1, 1]} : vector<2x96xf32> to vector<2x32xf32>
    %92 = vector.extract_strided_slice %82 {offsets = [0, 96], sizes = [2, 32], strides = [1, 1]} : vector<2x128xf32> to vector<2x32xf32>
    %93 = math.tanh %92 : vector<2x32xf32>
    %94 = arith.mulf %90, %73 : vector<2x32xf32>
    %95 = arith.mulf %89, %93 : vector<2x32xf32>
    %96 = arith.addf %94, %95 : vector<2x32xf32>
    %97 = math.tanh %96 : vector<2x32xf32>
    %98 = arith.mulf %91, %97 : vector<2x32xf32>
    %c0_24 = arith.constant 0 : index
    %c3 = arith.constant 3 : index
    %c0_25 = arith.constant 0 : index
    %99 = vector.load %arg15[%c0_24, %c3, %c0_25] : memref<2x8x32xf32, #tpu.memory_space<vmem>>, vector<2x1x32xf32>
    %100 = vector.shape_cast %99 : vector<2x1x32xf32> to vector<2x32xf32>
    %101 = vector.shape_cast %98 : vector<2x32xf32> to vector<2x1x32xf32>
    tpu.vector_store %arg15[%c0_24, %c3, %c0_25], %101 {strides = array<i32>} : memref<2x8x32xf32, #tpu.memory_space<vmem>>, vector<2x1x32xf32>,
    %102 = vector.extract_strided_slice %8 {offsets = [0, 4, 0], sizes = [2, 1, 128], strides = [1, 1, 1]} : vector<2x8x128xf32> to vector<2x1x128xf32>
    %103 = vector.shape_cast %102 : vector<2x1x128xf32> to vector<2x128xf32>
    %cst_26 = arith.constant dense<0.000000e+00> : vector<2x128xf32>
    %104 = tpu.matmul %98, %9, %cst_26 {dimension_numbers = #tpu.dot_dimension_numbers<[1], [0], [0], [1], [0, 0, 1, 1], [], []>} : vector<2x32xf32>, vector<32x128xf32>, vector<2x128xf32> -> vector<2x128xf32>
    %105 = arith.addf %103, %104 : vector<2x128xf32>
    %106 = vector.extract_strided_slice %105 {offsets = [0, 0], sizes = [2, 96], strides = [1, 1]} : vector<2x128xf32> to vector<2x96xf32>
    %107 = arith.negf %106 : vector<2x96xf32>
    %108 = math.exp %107 : vector<2x96xf32>
    %cst_27 = arith.constant 1.000000e+00 : f32
    %109 = vector.broadcast %cst_27 : f32 to vector<2x96xf32>
    %110 = arith.addf %109, %108 : vector<2x96xf32>
    %111 = arith.divf %109, %110 : vector<2x96xf32>
    %112 = vector.extract_strided_slice %111 {offsets = [0, 0], sizes = [2, 32], strides = [1, 1]} : vector<2x96xf32> to vector<2x32xf32>
    %113 = vector.extract_strided_slice %111 {offsets = [0, 32], sizes = [2, 32], strides = [1, 1]} : vector<2x96xf32> to vector<2x32xf32>
    %114 = vector.extract_strided_slice %111 {offsets = [0, 64], sizes = [2, 32], strides = [1, 1]} : vector<2x96xf32> to vector<2x32xf32>
    %115 = vector.extract_strided_slice %105 {offsets = [0, 96], sizes = [2, 32], strides = [1, 1]} : vector<2x128xf32> to vector<2x32xf32>
    %116 = math.tanh %115 : vector<2x32xf32>
    %117 = arith.mulf %113, %96 : vector<2x32xf32>
    %118 = arith.mulf %112, %116 : vector<2x32xf32>
    %119 = arith.addf %117, %118 : vector<2x32xf32>
    %120 = math.tanh %119 : vector<2x32xf32>
    %121 = arith.mulf %114, %120 : vector<2x32xf32>
    %c0_28 = arith.constant 0 : index
    %c4 = arith.constant 4 : index
    %c0_29 = arith.constant 0 : index
    %122 = vector.load %arg15[%c0_28, %c4, %c0_29] : memref<2x8x32xf32, #tpu.memory_space<vmem>>, vector<2x1x32xf32>
    %123 = vector.shape_cast %122 : vector<2x1x32xf32> to vector<2x32xf32>
    %124 = vector.shape_cast %121 : vector<2x32xf32> to vector<2x1x32xf32>
    tpu.vector_store %arg15[%c0_28, %c4, %c0_29], %124 {strides = array<i32>} : memref<2x8x32xf32, #tpu.memory_space<vmem>>, vector<2x1x32xf32>,
    %125 = vector.extract_strided_slice %8 {offsets = [0, 5, 0], sizes = [2, 1, 128], strides = [1, 1, 1]} : vector<2x8x128xf32> to vector<2x1x128xf32>
    %126 = vector.shape_cast %125 : vector<2x1x128xf32> to vector<2x128xf32>
    %cst_30 = arith.constant dense<0.000000e+00> : vector<2x128xf32>
    %127 = tpu.matmul %121, %9, %cst_30 {dimension_numbers = #tpu.dot_dimension_numbers<[1], [0], [0], [1], [0, 0, 1, 1], [], []>} : vector<2x32xf32>, vector<32x128xf32>, vector<2x128xf32> -> vector<2x128xf32>
    %128 = arith.addf %126, %127 : vector<2x128xf32>
    %129 = vector.extract_strided_slice %128 {offsets = [0, 0], sizes = [2, 96], strides = [1, 1]} : vector<2x128xf32> to vector<2x96xf32>
    %130 = arith.negf %129 : vector<2x96xf32>
    %131 = math.exp %130 : vector<2x96xf32>
    %cst_31 = arith.constant 1.000000e+00 : f32
    %132 = vector.broadcast %cst_31 : f32 to vector<2x96xf32>
    %133 = arith.addf %132, %131 : vector<2x96xf32>
    %134 = arith.divf %132, %133 : vector<2x96xf32>
    %135 = vector.extract_strided_slice %134 {offsets = [0, 0], sizes = [2, 32], strides = [1, 1]} : vector<2x96xf32> to vector<2x32xf32>
    %136 = vector.extract_strided_slice %134 {offsets = [0, 32], sizes = [2, 32], strides = [1, 1]} : vector<2x96xf32> to vector<2x32xf32>
    %137 = vector.extract_strided_slice %134 {offsets = [0, 64], sizes = [2, 32], strides = [1, 1]} : vector<2x96xf32> to vector<2x32xf32>
    %138 = vector.extract_strided_slice %128 {offsets = [0, 96], sizes = [2, 32], strides = [1, 1]} : vector<2x128xf32> to vector<2x32xf32>
    %139 = math.tanh %138 : vector<2x32xf32>
    %140 = arith.mulf %136, %119 : vector<2x32xf32>
    %141 = arith.mulf %135, %139 : vector<2x32xf32>
    %142 = arith.addf %140, %141 : vector<2x32xf32>
    %143 = math.tanh %142 : vector<2x32xf32>
    %144 = arith.mulf %137, %143 : vector<2x32xf32>
    %c0_32 = arith.constant 0 : index
    %c5 = arith.constant 5 : index
    %c0_33 = arith.constant 0 : index
    %145 = vector.load %arg15[%c0_32, %c5, %c0_33] : memref<2x8x32xf32, #tpu.memory_space<vmem>>, vector<2x1x32xf32>
    %146 = vector.shape_cast %145 : vector<2x1x32xf32> to vector<2x32xf32>
    %147 = vector.shape_cast %144 : vector<2x32xf32> to vector<2x1x32xf32>
    tpu.vector_store %arg15[%c0_32, %c5, %c0_33], %147 {strides = array<i32>} : memref<2x8x32xf32, #tpu.memory_space<vmem>>, vector<2x1x32xf32>,
    %148 = vector.extract_strided_slice %8 {offsets = [0, 6, 0], sizes = [2, 1, 128], strides = [1, 1, 1]} : vector<2x8x128xf32> to vector<2x1x128xf32>
    %149 = vector.shape_cast %148 : vector<2x1x128xf32> to vector<2x128xf32>
    %cst_34 = arith.constant dense<0.000000e+00> : vector<2x128xf32>
    %150 = tpu.matmul %144, %9, %cst_34 {dimension_numbers = #tpu.dot_dimension_numbers<[1], [0], [0], [1], [0, 0, 1, 1], [], []>} : vector<2x32xf32>, vector<32x128xf32>, vector<2x128xf32> -> vector<2x128xf32>
    %151 = arith.addf %149, %150 : vector<2x128xf32>
    %152 = vector.extract_strided_slice %151 {offsets = [0, 0], sizes = [2, 96], strides = [1, 1]} : vector<2x128xf32> to vector<2x96xf32>
    %153 = arith.negf %152 : vector<2x96xf32>
    %154 = math.exp %153 : vector<2x96xf32>
    %cst_35 = arith.constant 1.000000e+00 : f32
    %155 = vector.broadcast %cst_35 : f32 to vector<2x96xf32>
    %156 = arith.addf %155, %154 : vector<2x96xf32>
    %157 = arith.divf %155, %156 : vector<2x96xf32>
    %158 = vector.extract_strided_slice %157 {offsets = [0, 0], sizes = [2, 32], strides = [1, 1]} : vector<2x96xf32> to vector<2x32xf32>
    %159 = vector.extract_strided_slice %157 {offsets = [0, 32], sizes = [2, 32], strides = [1, 1]} : vector<2x96xf32> to vector<2x32xf32>
    %160 = vector.extract_strided_slice %157 {offsets = [0, 64], sizes = [2, 32], strides = [1, 1]} : vector<2x96xf32> to vector<2x32xf32>
    %161 = vector.extract_strided_slice %151 {offsets = [0, 96], sizes = [2, 32], strides = [1, 1]} : vector<2x128xf32> to vector<2x32xf32>
    %162 = math.tanh %161 : vector<2x32xf32>
    %163 = arith.mulf %159, %142 : vector<2x32xf32>
    %164 = arith.mulf %158, %162 : vector<2x32xf32>
    %165 = arith.addf %163, %164 : vector<2x32xf32>
    %166 = math.tanh %165 : vector<2x32xf32>
    %167 = arith.mulf %160, %166 : vector<2x32xf32>
    %c0_36 = arith.constant 0 : index
    %c6 = arith.constant 6 : index
    %c0_37 = arith.constant 0 : index
    %168 = vector.load %arg15[%c0_36, %c6, %c0_37] : memref<2x8x32xf32, #tpu.memory_space<vmem>>, vector<2x1x32xf32>
    %169 = vector.shape_cast %168 : vector<2x1x32xf32> to vector<2x32xf32>
    %170 = vector.shape_cast %167 : vector<2x32xf32> to vector<2x1x32xf32>
    tpu.vector_store %arg15[%c0_36, %c6, %c0_37], %170 {strides = array<i32>} : memref<2x8x32xf32, #tpu.memory_space<vmem>>, vector<2x1x32xf32>,
    %171 = vector.extract_strided_slice %8 {offsets = [0, 7, 0], sizes = [2, 1, 128], strides = [1, 1, 1]} : vector<2x8x128xf32> to vector<2x1x128xf32>
    %172 = vector.shape_cast %171 : vector<2x1x128xf32> to vector<2x128xf32>
    %cst_38 = arith.constant dense<0.000000e+00> : vector<2x128xf32>
    %173 = tpu.matmul %167, %9, %cst_38 {dimension_numbers = #tpu.dot_dimension_numbers<[1], [0], [0], [1], [0, 0, 1, 1], [], []>} : vector<2x32xf32>, vector<32x128xf32>, vector<2x128xf32> -> vector<2x128xf32>
    %174 = arith.addf %172, %173 : vector<2x128xf32>
    %175 = vector.extract_strided_slice %174 {offsets = [0, 0], sizes = [2, 96], strides = [1, 1]} : vector<2x128xf32> to vector<2x96xf32>
    %176 = arith.negf %175 : vector<2x96xf32>
    %177 = math.exp %176 : vector<2x96xf32>
    %cst_39 = arith.constant 1.000000e+00 : f32
    %178 = vector.broadcast %cst_39 : f32 to vector<2x96xf32>
    %179 = arith.addf %178, %177 : vector<2x96xf32>
    %180 = arith.divf %178, %179 : vector<2x96xf32>
    %181 = vector.extract_strided_slice %180 {offsets = [0, 0], sizes = [2, 32], strides = [1, 1]} : vector<2x96xf32> to vector<2x32xf32>
    %182 = vector.extract_strided_slice %180 {offsets = [0, 32], sizes = [2, 32], strides = [1, 1]} : vector<2x96xf32> to vector<2x32xf32>
    %183 = vector.extract_strided_slice %180 {offsets = [0, 64], sizes = [2, 32], strides = [1, 1]} : vector<2x96xf32> to vector<2x32xf32>
    %184 = vector.extract_strided_slice %174 {offsets = [0, 96], sizes = [2, 32], strides = [1, 1]} : vector<2x128xf32> to vector<2x32xf32>
    %185 = math.tanh %184 : vector<2x32xf32>
    %186 = arith.mulf %182, %165 : vector<2x32xf32>
    %187 = arith.mulf %181, %185 : vector<2x32xf32>
    %188 = arith.addf %186, %187 : vector<2x32xf32>
    %189 = math.tanh %188 : vector<2x32xf32>
    %190 = arith.mulf %183, %189 : vector<2x32xf32>
    %c0_40 = arith.constant 0 : index
    %c7 = arith.constant 7 : index
    %c0_41 = arith.constant 0 : index
    %191 = vector.load %arg15[%c0_40, %c7, %c0_41] : memref<2x8x32xf32, #tpu.memory_space<vmem>>, vector<2x1x32xf32>
    %192 = vector.shape_cast %191 : vector<2x1x32xf32> to vector<2x32xf32>
    %193 = vector.shape_cast %190 : vector<2x32xf32> to vector<2x1x32xf32>
    tpu.vector_store %arg15[%c0_40, %c7, %c0_41], %193 {strides = array<i32>} : memref<2x8x32xf32, #tpu.memory_space<vmem>>, vector<2x1x32xf32>,
    %c0_42 = arith.constant 0 : index
    %c0_43 = arith.constant 0 : index
    %c0_44 = arith.constant 0 : index
    %194 = vector.load %arg15[%c0_42, %c0_43, %c0_44] : memref<2x8x32xf32, #tpu.memory_space<vmem>>, vector<2x8x32xf32>
    %195 = vector.shape_cast %194 : vector<2x8x32xf32> to vector<16x32xf32>
    %c0_45 = arith.constant 0 : index
    %c0_46 = arith.constant 0 : index
    %196 = vector.load %arg7[%c0_45, %c0_46] : memref<32x96xf32, #tpu.memory_space<vmem>>, vector<32x96xf32>
    %cst_47 = arith.constant dense<0.000000e+00> : vector<16x96xf32>
    %197 = tpu.matmul %195, %196, %cst_47 {dimension_numbers = #tpu.dot_dimension_numbers<[1], [0], [0], [1], [0, 0, 1, 1], [], []>} : vector<16x32xf32>, vector<32x96xf32>, vector<16x96xf32> -> vector<16x96xf32>
    %c0_48 = arith.constant 0 : index
    %c0_49 = arith.constant 0 : index
    %198 = vector.load %arg8[%c0_48, %c0_49] : memref<1x96xf32, #tpu.memory_space<vmem>>, vector<1x96xf32>
    %199 = vector.broadcast %198 : vector<1x96xf32> to vector<16x96xf32>
    %200 = arith.addf %197, %199 : vector<16x96xf32>
    %201 = vector.extract_strided_slice %200 {offsets = [0, 0], sizes = [16, 32], strides = [1, 1]} : vector<16x96xf32> to vector<16x32xf32>
    %202 = vector.shape_cast %201 : vector<16x32xf32> to vector<2x8x32xf32>
    %203 = vector.extract_strided_slice %200 {offsets = [0, 32], sizes = [16, 32], strides = [1, 1]} : vector<16x96xf32> to vector<16x32xf32>
    %204 = vector.shape_cast %203 : vector<16x32xf32> to vector<2x8x32xf32>
    %205 = vector.extract_strided_slice %200 {offsets = [0, 64], sizes = [16, 32], strides = [1, 1]} : vector<16x96xf32> to vector<16x32xf32>
    %206 = vector.shape_cast %205 : vector<16x32xf32> to vector<2x8x32xf32>
    %cst_50 = arith.constant 0.000000e+00 : f32
    %207 = vector.broadcast %cst_50 : f32 to vector<2x32xf32>
    %208 = vector.extract_strided_slice %202 {offsets = [0, 0, 0], sizes = [2, 8, 8], strides = [1, 1, 1]} : vector<2x8x32xf32> to vector<2x8x8xf32>
    %209 = vector.extract_strided_slice %204 {offsets = [0, 0, 0], sizes = [2, 8, 8], strides = [1, 1, 1]} : vector<2x8x32xf32> to vector<2x8x8xf32>
    %210 = vector.extract_strided_slice %206 {offsets = [0, 0, 0], sizes = [2, 8, 8], strides = [1, 1, 1]} : vector<2x8x32xf32> to vector<2x8x8xf32>
    "tpu.trace_start"() <{level = 10 : i32, message = "bqd,bkd->bqk"}> : () -> ()
    %cst_51 = arith.constant dense<0.000000e+00> : vector<2x8x8xf32>
    %211 = tpu.matmul %208, %209, %cst_51 {dimension_numbers = #tpu.dot_dimension_numbers<[2], [2], [1], [1], [0, 0, 0, 1, 1, 1], [0], [0]>} : vector<2x8x8xf32>, vector<2x8x8xf32>, vector<2x8x8xf32> -> vector<2x8x8xf32>
    "tpu.trace_stop"() : () -> ()
    %cst_52 = arith.constant 0.353553385 : f32
    %212 = vector.broadcast %cst_52 : f32 to vector<2x8x8xf32>
    %213 = arith.mulf %211, %212 : vector<2x8x8xf32>
    %cst_53 = arith.constant dense<0xFF800000> : vector<2x8xf32>
    %214 = vector.multi_reduction <maximumf>, %213, %cst_53 [2] : vector<2x8x8xf32> to vector<2x8xf32>
    %215 = vector.shape_cast %214 : vector<2x8xf32> to vector<2x8x1xf32>
    %216 = vector.broadcast %215 : vector<2x8x1xf32> to vector<2x8x8xf32>
    %217 = arith.subf %213, %216 : vector<2x8x8xf32>
    %218 = math.exp %217 : vector<2x8x8xf32>
    %cst_54 = arith.constant dense<0.000000e+00> : vector<2x8xf32>
    %219 = vector.multi_reduction <add>, %218, %cst_54 [2] : vector<2x8x8xf32> to vector<2x8xf32>
    %220 = vector.shape_cast %219 : vector<2x8xf32> to vector<2x8x1xf32>
    %221 = tpu.reciprocal %220 {approx = true} : vector<2x8x1xf32> -> vector<2x8x1xf32>
    %222 = vector.broadcast %221 : vector<2x8x1xf32> to vector<2x8x8xf32>
    %223 = arith.mulf %218, %222 : vector<2x8x8xf32>
    "tpu.trace_start"() <{level = 10 : i32, message = "bqk,bkd->bqd"}> : () -> ()
    %cst_55 = arith.constant dense<0.000000e+00> : vector<2x8x8xf32>
    %224 = tpu.matmul %223, %210, %cst_55 {dimension_numbers = #tpu.dot_dimension_numbers<[2], [1], [1], [2], [0, 0, 0, 1, 1, 2], [0], [0]>} : vector<2x8x8xf32>, vector<2x8x8xf32>, vector<2x8x8xf32> -> vector<2x8x8xf32>
    "tpu.trace_stop"() : () -> ()
    %cst_56 = arith.constant dense<0.000000e+00> : vector<2x8xf32>
    %225 = vector.multi_reduction <add>, %224, %cst_56 [1] : vector<2x8x8xf32> to vector<2x8xf32>
    %c0_57 = arith.constant 0 : index
    %c0_58 = arith.constant 0 : index
    %226 = vector.load %arg9[%c0_57, %c0_58] : memref<32x32xf32, #tpu.memory_space<vmem>>, vector<8x32xf32>
    %cst_59 = arith.constant dense<0.000000e+00> : vector<2x32xf32>
    %227 = tpu.matmul %225, %226, %cst_59 {dimension_numbers = #tpu.dot_dimension_numbers<[1], [0], [0], [1], [0, 0, 1, 1], [], []>} : vector<2x8xf32>, vector<8x32xf32>, vector<2x32xf32> -> vector<2x32xf32>
    %228 = arith.addf %207, %227 : vector<2x32xf32>
    %229 = vector.extract_strided_slice %202 {offsets = [0, 0, 8], sizes = [2, 8, 8], strides = [1, 1, 1]} : vector<2x8x32xf32> to vector<2x8x8xf32>
    %230 = vector.extract_strided_slice %204 {offsets = [0, 0, 8], sizes = [2, 8, 8], strides = [1, 1, 1]} : vector<2x8x32xf32> to vector<2x8x8xf32>
    %231 = vector.extract_strided_slice %206 {offsets = [0, 0, 8], sizes = [2, 8, 8], strides = [1, 1, 1]} : vector<2x8x32xf32> to vector<2x8x8xf32>
    "tpu.trace_start"() <{level = 10 : i32, message = "bqd,bkd->bqk"}> : () -> ()
    %cst_60 = arith.constant dense<0.000000e+00> : vector<2x8x8xf32>
    %232 = tpu.matmul %229, %230, %cst_60 {dimension_numbers = #tpu.dot_dimension_numbers<[2], [2], [1], [1], [0, 0, 0, 1, 1, 1], [0], [0]>} : vector<2x8x8xf32>, vector<2x8x8xf32>, vector<2x8x8xf32> -> vector<2x8x8xf32>
    "tpu.trace_stop"() : () -> ()
    %cst_61 = arith.constant 0.353553385 : f32
    %233 = vector.broadcast %cst_61 : f32 to vector<2x8x8xf32>
    %234 = arith.mulf %232, %233 : vector<2x8x8xf32>
    %cst_62 = arith.constant dense<0xFF800000> : vector<2x8xf32>
    %235 = vector.multi_reduction <maximumf>, %234, %cst_62 [2] : vector<2x8x8xf32> to vector<2x8xf32>
    %236 = vector.shape_cast %235 : vector<2x8xf32> to vector<2x8x1xf32>
    %237 = vector.broadcast %236 : vector<2x8x1xf32> to vector<2x8x8xf32>
    %238 = arith.subf %234, %237 : vector<2x8x8xf32>
    %239 = math.exp %238 : vector<2x8x8xf32>
    %cst_63 = arith.constant dense<0.000000e+00> : vector<2x8xf32>
    %240 = vector.multi_reduction <add>, %239, %cst_63 [2] : vector<2x8x8xf32> to vector<2x8xf32>
    %241 = vector.shape_cast %240 : vector<2x8xf32> to vector<2x8x1xf32>
    %242 = tpu.reciprocal %241 {approx = true} : vector<2x8x1xf32> -> vector<2x8x1xf32>
    %243 = vector.broadcast %242 : vector<2x8x1xf32> to vector<2x8x8xf32>
    %244 = arith.mulf %239, %243 : vector<2x8x8xf32>
    "tpu.trace_start"() <{level = 10 : i32, message = "bqk,bkd->bqd"}> : () -> ()
    %cst_64 = arith.constant dense<0.000000e+00> : vector<2x8x8xf32>
    %245 = tpu.matmul %244, %231, %cst_64 {dimension_numbers = #tpu.dot_dimension_numbers<[2], [1], [1], [2], [0, 0, 0, 1, 1, 2], [0], [0]>} : vector<2x8x8xf32>, vector<2x8x8xf32>, vector<2x8x8xf32> -> vector<2x8x8xf32>
    "tpu.trace_stop"() : () -> ()
    %cst_65 = arith.constant dense<0.000000e+00> : vector<2x8xf32>
    %246 = vector.multi_reduction <add>, %245, %cst_65 [1] : vector<2x8x8xf32> to vector<2x8xf32>
    %c8 = arith.constant 8 : index
    %c0_66 = arith.constant 0 : index
    %247 = vector.load %arg9[%c8, %c0_66] : memref<32x32xf32, #tpu.memory_space<vmem>>, vector<8x32xf32>
    %cst_67 = arith.constant dense<0.000000e+00> : vector<2x32xf32>
    %248 = tpu.matmul %246, %247, %cst_67 {dimension_numbers = #tpu.dot_dimension_numbers<[1], [0], [0], [1], [0, 0, 1, 1], [], []>} : vector<2x8xf32>, vector<8x32xf32>, vector<2x32xf32> -> vector<2x32xf32>
    %249 = arith.addf %228, %248 : vector<2x32xf32>
    %250 = vector.extract_strided_slice %202 {offsets = [0, 0, 16], sizes = [2, 8, 8], strides = [1, 1, 1]} : vector<2x8x32xf32> to vector<2x8x8xf32>
    %251 = vector.extract_strided_slice %204 {offsets = [0, 0, 16], sizes = [2, 8, 8], strides = [1, 1, 1]} : vector<2x8x32xf32> to vector<2x8x8xf32>
    %252 = vector.extract_strided_slice %206 {offsets = [0, 0, 16], sizes = [2, 8, 8], strides = [1, 1, 1]} : vector<2x8x32xf32> to vector<2x8x8xf32>
    "tpu.trace_start"() <{level = 10 : i32, message = "bqd,bkd->bqk"}> : () -> ()
    %cst_68 = arith.constant dense<0.000000e+00> : vector<2x8x8xf32>
    %253 = tpu.matmul %250, %251, %cst_68 {dimension_numbers = #tpu.dot_dimension_numbers<[2], [2], [1], [1], [0, 0, 0, 1, 1, 1], [0], [0]>} : vector<2x8x8xf32>, vector<2x8x8xf32>, vector<2x8x8xf32> -> vector<2x8x8xf32>
    "tpu.trace_stop"() : () -> ()
    %cst_69 = arith.constant 0.353553385 : f32
    %254 = vector.broadcast %cst_69 : f32 to vector<2x8x8xf32>
    %255 = arith.mulf %253, %254 : vector<2x8x8xf32>
    %cst_70 = arith.constant dense<0xFF800000> : vector<2x8xf32>
    %256 = vector.multi_reduction <maximumf>, %255, %cst_70 [2] : vector<2x8x8xf32> to vector<2x8xf32>
    %257 = vector.shape_cast %256 : vector<2x8xf32> to vector<2x8x1xf32>
    %258 = vector.broadcast %257 : vector<2x8x1xf32> to vector<2x8x8xf32>
    %259 = arith.subf %255, %258 : vector<2x8x8xf32>
    %260 = math.exp %259 : vector<2x8x8xf32>
    %cst_71 = arith.constant dense<0.000000e+00> : vector<2x8xf32>
    %261 = vector.multi_reduction <add>, %260, %cst_71 [2] : vector<2x8x8xf32> to vector<2x8xf32>
    %262 = vector.shape_cast %261 : vector<2x8xf32> to vector<2x8x1xf32>
    %263 = tpu.reciprocal %262 {approx = true} : vector<2x8x1xf32> -> vector<2x8x1xf32>
    %264 = vector.broadcast %263 : vector<2x8x1xf32> to vector<2x8x8xf32>
    %265 = arith.mulf %260, %264 : vector<2x8x8xf32>
    "tpu.trace_start"() <{level = 10 : i32, message = "bqk,bkd->bqd"}> : () -> ()
    %cst_72 = arith.constant dense<0.000000e+00> : vector<2x8x8xf32>
    %266 = tpu.matmul %265, %252, %cst_72 {dimension_numbers = #tpu.dot_dimension_numbers<[2], [1], [1], [2], [0, 0, 0, 1, 1, 2], [0], [0]>} : vector<2x8x8xf32>, vector<2x8x8xf32>, vector<2x8x8xf32> -> vector<2x8x8xf32>
    "tpu.trace_stop"() : () -> ()
    %cst_73 = arith.constant dense<0.000000e+00> : vector<2x8xf32>
    %267 = vector.multi_reduction <add>, %266, %cst_73 [1] : vector<2x8x8xf32> to vector<2x8xf32>
    %c16 = arith.constant 16 : index
    %c0_74 = arith.constant 0 : index
    %268 = vector.load %arg9[%c16, %c0_74] : memref<32x32xf32, #tpu.memory_space<vmem>>, vector<8x32xf32>
    %cst_75 = arith.constant dense<0.000000e+00> : vector<2x32xf32>
    %269 = tpu.matmul %267, %268, %cst_75 {dimension_numbers = #tpu.dot_dimension_numbers<[1], [0], [0], [1], [0, 0, 1, 1], [], []>} : vector<2x8xf32>, vector<8x32xf32>, vector<2x32xf32> -> vector<2x32xf32>
    %270 = arith.addf %249, %269 : vector<2x32xf32>
    %271 = vector.extract_strided_slice %202 {offsets = [0, 0, 24], sizes = [2, 8, 8], strides = [1, 1, 1]} : vector<2x8x32xf32> to vector<2x8x8xf32>
    %272 = vector.extract_strided_slice %204 {offsets = [0, 0, 24], sizes = [2, 8, 8], strides = [1, 1, 1]} : vector<2x8x32xf32> to vector<2x8x8xf32>
    %273 = vector.extract_strided_slice %206 {offsets = [0, 0, 24], sizes = [2, 8, 8], strides = [1, 1, 1]} : vector<2x8x32xf32> to vector<2x8x8xf32>
    "tpu.trace_start"() <{level = 10 : i32, message = "bqd,bkd->bqk"}> : () -> ()
    %cst_76 = arith.constant dense<0.000000e+00> : vector<2x8x8xf32>
    %274 = tpu.matmul %271, %272, %cst_76 {dimension_numbers = #tpu.dot_dimension_numbers<[2], [2], [1], [1], [0, 0, 0, 1, 1, 1], [0], [0]>} : vector<2x8x8xf32>, vector<2x8x8xf32>, vector<2x8x8xf32> -> vector<2x8x8xf32>
    "tpu.trace_stop"() : () -> ()
    %cst_77 = arith.constant 0.353553385 : f32
    %275 = vector.broadcast %cst_77 : f32 to vector<2x8x8xf32>
    %276 = arith.mulf %274, %275 : vector<2x8x8xf32>
    %cst_78 = arith.constant dense<0xFF800000> : vector<2x8xf32>
    %277 = vector.multi_reduction <maximumf>, %276, %cst_78 [2] : vector<2x8x8xf32> to vector<2x8xf32>
    %278 = vector.shape_cast %277 : vector<2x8xf32> to vector<2x8x1xf32>
    %279 = vector.broadcast %278 : vector<2x8x1xf32> to vector<2x8x8xf32>
    %280 = arith.subf %276, %279 : vector<2x8x8xf32>
    %281 = math.exp %280 : vector<2x8x8xf32>
    %cst_79 = arith.constant dense<0.000000e+00> : vector<2x8xf32>
    %282 = vector.multi_reduction <add>, %281, %cst_79 [2] : vector<2x8x8xf32> to vector<2x8xf32>
    %283 = vector.shape_cast %282 : vector<2x8xf32> to vector<2x8x1xf32>
    %284 = tpu.reciprocal %283 {approx = true} : vector<2x8x1xf32> -> vector<2x8x1xf32>
    %285 = vector.broadcast %284 : vector<2x8x1xf32> to vector<2x8x8xf32>
    %286 = arith.mulf %281, %285 : vector<2x8x8xf32>
    "tpu.trace_start"() <{level = 10 : i32, message = "bqk,bkd->bqd"}> : () -> ()
    %cst_80 = arith.constant dense<0.000000e+00> : vector<2x8x8xf32>
    %287 = tpu.matmul %286, %273, %cst_80 {dimension_numbers = #tpu.dot_dimension_numbers<[2], [1], [1], [2], [0, 0, 0, 1, 1, 2], [0], [0]>} : vector<2x8x8xf32>, vector<2x8x8xf32>, vector<2x8x8xf32> -> vector<2x8x8xf32>
    "tpu.trace_stop"() : () -> ()
    %cst_81 = arith.constant dense<0.000000e+00> : vector<2x8xf32>
    %288 = vector.multi_reduction <add>, %287, %cst_81 [1] : vector<2x8x8xf32> to vector<2x8xf32>
    %c24 = arith.constant 24 : index
    %c0_82 = arith.constant 0 : index
    %289 = vector.load %arg9[%c24, %c0_82] : memref<32x32xf32, #tpu.memory_space<vmem>>, vector<8x32xf32>
    %cst_83 = arith.constant dense<0.000000e+00> : vector<2x32xf32>
    %290 = tpu.matmul %288, %289, %cst_83 {dimension_numbers = #tpu.dot_dimension_numbers<[1], [0], [0], [1], [0, 0, 1, 1], [], []>} : vector<2x8xf32>, vector<8x32xf32>, vector<2x32xf32> -> vector<2x32xf32>
    %291 = arith.addf %270, %290 : vector<2x32xf32>
    %c0_84 = arith.constant 0 : index
    %c0_85 = arith.constant 0 : index
    %292 = vector.load %arg10[%c0_84, %c0_85] : memref<1x32xf32, #tpu.memory_space<vmem>>, vector<1x32xf32>
    %cst_86 = arith.constant 8.000000e+00 : f32
    %293 = vector.broadcast %cst_86 : f32 to vector<1x32xf32>
    %294 = arith.mulf %293, %292 : vector<1x32xf32>
    %295 = vector.broadcast %294 : vector<1x32xf32> to vector<2x32xf32>
    %296 = arith.addf %291, %295 : vector<2x32xf32>
    %c0_87 = arith.constant 0 : index
    %c0_88 = arith.constant 0 : index
    %297 = vector.load %arg11[%c0_87, %c0_88] : memref<32x10xf32, #tpu.memory_space<vmem>>, vector<32x10xf32>
    %cst_89 = arith.constant dense<0.000000e+00> : vector<2x10xf32>
    %298 = tpu.matmul %296, %297, %cst_89 {dimension_numbers = #tpu.dot_dimension_numbers<[1], [0], [0], [1], [0, 0, 1, 1], [], []>} : vector<2x32xf32>, vector<32x10xf32>, vector<2x10xf32> -> vector<2x10xf32>
    %c0_90 = arith.constant 0 : index
    %c0_91 = arith.constant 0 : index
    %299 = vector.load %arg12[%c0_90, %c0_91] : memref<1x10xf32, #tpu.memory_space<vmem>>, vector<1x10xf32>
    %300 = vector.broadcast %299 : vector<1x10xf32> to vector<2x10xf32>
    %301 = arith.addf %298, %300 : vector<2x10xf32>
    %c0_92 = arith.constant 0 : index
    %c0_93 = arith.constant 0 : index
    %302 = vector.load %arg13[%c0_92, %c0_93] : memref<2x10xf32, #tpu.memory_space<vmem>>, vector<2x10xf32>
    tpu.vector_store %arg13[%c0_92, %c0_93], %301 {strides = array<i32>} : memref<2x10xf32, #tpu.memory_space<vmem>>, vector<2x10xf32>,
    %c0_94 = arith.constant 0 : index
    %c0_95 = arith.constant 0 : index
    %303 = vector.load %arg4[%c0_94, %c0_95] : memref<16x128xf32, #tpu.memory_space<vmem>>, vector<16x128xf32>
    %cst_96 = arith.constant dense<0.000000e+00> : vector<16x128xf32>
    %304 = tpu.matmul %1, %303, %cst_96 {dimension_numbers = #tpu.dot_dimension_numbers<[1], [0], [0], [1], [0, 0, 1, 1], [], []>} : vector<16x16xf32>, vector<16x128xf32>, vector<16x128xf32> -> vector<16x128xf32>
    %c0_97 = arith.constant 0 : index
    %c0_98 = arith.constant 0 : index
    %305 = vector.load %arg6[%c0_97, %c0_98] : memref<1x128xf32, #tpu.memory_space<vmem>>, vector<1x128xf32>
    %306 = vector.broadcast %305 : vector<1x128xf32> to vector<16x128xf32>
    %307 = arith.addf %304, %306 : vector<16x128xf32>
    %308 = vector.shape_cast %307 : vector<16x128xf32> to vector<2x8x128xf32>
    %c0_99 = arith.constant 0 : index
    %c0_100 = arith.constant 0 : index
    %309 = vector.load %arg5[%c0_99, %c0_100] : memref<32x128xf32, #tpu.memory_space<vmem>>, vector<32x128xf32>
    %310 = vector.extract_strided_slice %308 {offsets = [0, 0, 0], sizes = [2, 1, 128], strides = [1, 1, 1]} : vector<2x8x128xf32> to vector<2x1x128xf32>
    %311 = vector.shape_cast %310 : vector<2x1x128xf32> to vector<2x128xf32>
    %cst_101 = arith.constant dense<0.000000e+00> : vector<2x128xf32>
    %312 = tpu.matmul %190, %309, %cst_101 {dimension_numbers = #tpu.dot_dimension_numbers<[1], [0], [0], [1], [0, 0, 1, 1], [], []>} : vector<2x32xf32>, vector<32x128xf32>, vector<2x128xf32> -> vector<2x128xf32>
    %313 = arith.addf %311, %312 : vector<2x128xf32>
    %314 = vector.extract_strided_slice %313 {offsets = [0, 0], sizes = [2, 96], strides = [1, 1]} : vector<2x128xf32> to vector<2x96xf32>
    %315 = arith.negf %314 : vector<2x96xf32>
    %316 = math.exp %315 : vector<2x96xf32>
    %cst_102 = arith.constant 1.000000e+00 : f32
    %317 = vector.broadcast %cst_102 : f32 to vector<2x96xf32>
    %318 = arith.addf %317, %316 : vector<2x96xf32>
    %319 = arith.divf %317, %318 : vector<2x96xf32>
    %320 = vector.extract_strided_slice %319 {offsets = [0, 0], sizes = [2, 32], strides = [1, 1]} : vector<2x96xf32> to vector<2x32xf32>
    %321 = vector.extract_strided_slice %319 {offsets = [0, 32], sizes = [2, 32], strides = [1, 1]} : vector<2x96xf32> to vector<2x32xf32>
    %322 = vector.extract_strided_slice %319 {offsets = [0, 64], sizes = [2, 32], strides = [1, 1]} : vector<2x96xf32> to vector<2x32xf32>
    %323 = vector.extract_strided_slice %313 {offsets = [0, 96], sizes = [2, 32], strides = [1, 1]} : vector<2x128xf32> to vector<2x32xf32>
    %324 = math.tanh %323 : vector<2x32xf32>
    %325 = arith.mulf %321, %188 : vector<2x32xf32>
    %326 = arith.mulf %320, %324 : vector<2x32xf32>
    %327 = arith.addf %325, %326 : vector<2x32xf32>
    %328 = math.tanh %327 : vector<2x32xf32>
    %329 = arith.mulf %322, %328 : vector<2x32xf32>
    %c0_103 = arith.constant 0 : index
    %c0_104 = arith.constant 0 : index
    %c0_105 = arith.constant 0 : index
    %330 = vector.load %arg14[%c0_103, %c0_104, %c0_105] : memref<2x8x32xf32, #tpu.memory_space<vmem>>, vector<2x1x32xf32>
    %331 = vector.shape_cast %330 : vector<2x1x32xf32> to vector<2x32xf32>
    %332 = vector.shape_cast %329 : vector<2x32xf32> to vector<2x1x32xf32>
    tpu.vector_store %arg14[%c0_103, %c0_104, %c0_105], %332 {strides = array<i32>} : memref<2x8x32xf32, #tpu.memory_space<vmem>>, vector<2x1x32xf32>,
    %333 = vector.extract_strided_slice %308 {offsets = [0, 1, 0], sizes = [2, 1, 128], strides = [1, 1, 1]} : vector<2x8x128xf32> to vector<2x1x128xf32>
    %334 = vector.shape_cast %333 : vector<2x1x128xf32> to vector<2x128xf32>
    %cst_106 = arith.constant dense<0.000000e+00> : vector<2x128xf32>
    %335 = tpu.matmul %329, %309, %cst_106 {dimension_numbers = #tpu.dot_dimension_numbers<[1], [0], [0], [1], [0, 0, 1, 1], [], []>} : vector<2x32xf32>, vector<32x128xf32>, vector<2x128xf32> -> vector<2x128xf32>
    %336 = arith.addf %334, %335 : vector<2x128xf32>
    %337 = vector.extract_strided_slice %336 {offsets = [0, 0], sizes = [2, 96], strides = [1, 1]} : vector<2x128xf32> to vector<2x96xf32>
    %338 = arith.negf %337 : vector<2x96xf32>
    %339 = math.exp %338 : vector<2x96xf32>
    %cst_107 = arith.constant 1.000000e+00 : f32
    %340 = vector.broadcast %cst_107 : f32 to vector<2x96xf32>
    %341 = arith.addf %340, %339 : vector<2x96xf32>
    %342 = arith.divf %340, %341 : vector<2x96xf32>
    %343 = vector.extract_strided_slice %342 {offsets = [0, 0], sizes = [2, 32], strides = [1, 1]} : vector<2x96xf32> to vector<2x32xf32>
    %344 = vector.extract_strided_slice %342 {offsets = [0, 32], sizes = [2, 32], strides = [1, 1]} : vector<2x96xf32> to vector<2x32xf32>
    %345 = vector.extract_strided_slice %342 {offsets = [0, 64], sizes = [2, 32], strides = [1, 1]} : vector<2x96xf32> to vector<2x32xf32>
    %346 = vector.extract_strided_slice %336 {offsets = [0, 96], sizes = [2, 32], strides = [1, 1]} : vector<2x128xf32> to vector<2x32xf32>
    %347 = math.tanh %346 : vector<2x32xf32>
    %348 = arith.mulf %344, %327 : vector<2x32xf32>
    %349 = arith.mulf %343, %347 : vector<2x32xf32>
    %350 = arith.addf %348, %349 : vector<2x32xf32>
    %351 = math.tanh %350 : vector<2x32xf32>
    %352 = arith.mulf %345, %351 : vector<2x32xf32>
    %c0_108 = arith.constant 0 : index
    %c1_109 = arith.constant 1 : index
    %c0_110 = arith.constant 0 : index
    %353 = vector.load %arg14[%c0_108, %c1_109, %c0_110] : memref<2x8x32xf32, #tpu.memory_space<vmem>>, vector<2x1x32xf32>
    %354 = vector.shape_cast %353 : vector<2x1x32xf32> to vector<2x32xf32>
    %355 = vector.shape_cast %352 : vector<2x32xf32> to vector<2x1x32xf32>
    tpu.vector_store %arg14[%c0_108, %c1_109, %c0_110], %355 {strides = array<i32>} : memref<2x8x32xf32, #tpu.memory_space<vmem>>, vector<2x1x32xf32>,
    %356 = vector.extract_strided_slice %308 {offsets = [0, 2, 0], sizes = [2, 1, 128], strides = [1, 1, 1]} : vector<2x8x128xf32> to vector<2x1x128xf32>
    %357 = vector.shape_cast %356 : vector<2x1x128xf32> to vector<2x128xf32>
    %cst_111 = arith.constant dense<0.000000e+00> : vector<2x128xf32>
    %358 = tpu.matmul %352, %309, %cst_111 {dimension_numbers = #tpu.dot_dimension_numbers<[1], [0], [0], [1], [0, 0, 1, 1], [], []>} : vector<2x32xf32>, vector<32x128xf32>, vector<2x128xf32> -> vector<2x128xf32>
    %359 = arith.addf %357, %358 : vector<2x128xf32>
    %360 = vector.extract_strided_slice %359 {offsets = [0, 0], sizes = [2, 96], strides = [1, 1]} : vector<2x128xf32> to vector<2x96xf32>
    %361 = arith.negf %360 : vector<2x96xf32>
    %362 = math.exp %361 : vector<2x96xf32>
    %cst_112 = arith.constant 1.000000e+00 : f32
    %363 = vector.broadcast %cst_112 : f32 to vector<2x96xf32>
    %364 = arith.addf %363, %362 : vector<2x96xf32>
    %365 = arith.divf %363, %364 : vector<2x96xf32>
    %366 = vector.extract_strided_slice %365 {offsets = [0, 0], sizes = [2, 32], strides = [1, 1]} : vector<2x96xf32> to vector<2x32xf32>
    %367 = vector.extract_strided_slice %365 {offsets = [0, 32], sizes = [2, 32], strides = [1, 1]} : vector<2x96xf32> to vector<2x32xf32>
    %368 = vector.extract_strided_slice %365 {offsets = [0, 64], sizes = [2, 32], strides = [1, 1]} : vector<2x96xf32> to vector<2x32xf32>
    %369 = vector.extract_strided_slice %359 {offsets = [0, 96], sizes = [2, 32], strides = [1, 1]} : vector<2x128xf32> to vector<2x32xf32>
    %370 = math.tanh %369 : vector<2x32xf32>
    %371 = arith.mulf %367, %350 : vector<2x32xf32>
    %372 = arith.mulf %366, %370 : vector<2x32xf32>
    %373 = arith.addf %371, %372 : vector<2x32xf32>
    %374 = math.tanh %373 : vector<2x32xf32>
    %375 = arith.mulf %368, %374 : vector<2x32xf32>
    %c0_113 = arith.constant 0 : index
    %c2_114 = arith.constant 2 : index
    %c0_115 = arith.constant 0 : index
    %376 = vector.load %arg14[%c0_113, %c2_114, %c0_115] : memref<2x8x32xf32, #tpu.memory_space<vmem>>, vector<2x1x32xf32>
    %377 = vector.shape_cast %376 : vector<2x1x32xf32> to vector<2x32xf32>
    %378 = vector.shape_cast %375 : vector<2x32xf32> to vector<2x1x32xf32>
    tpu.vector_store %arg14[%c0_113, %c2_114, %c0_115], %378 {strides = array<i32>} : memref<2x8x32xf32, #tpu.memory_space<vmem>>, vector<2x1x32xf32>,
    %379 = vector.extract_strided_slice %308 {offsets = [0, 3, 0], sizes = [2, 1, 128], strides = [1, 1, 1]} : vector<2x8x128xf32> to vector<2x1x128xf32>
    %380 = vector.shape_cast %379 : vector<2x1x128xf32> to vector<2x128xf32>
    %cst_116 = arith.constant dense<0.000000e+00> : vector<2x128xf32>
    %381 = tpu.matmul %375, %309, %cst_116 {dimension_numbers = #tpu.dot_dimension_numbers<[1], [0], [0], [1], [0, 0, 1, 1], [], []>} : vector<2x32xf32>, vector<32x128xf32>, vector<2x128xf32> -> vector<2x128xf32>
    %382 = arith.addf %380, %381 : vector<2x128xf32>
    %383 = vector.extract_strided_slice %382 {offsets = [0, 0], sizes = [2, 96], strides = [1, 1]} : vector<2x128xf32> to vector<2x96xf32>
    %384 = arith.negf %383 : vector<2x96xf32>
    %385 = math.exp %384 : vector<2x96xf32>
    %cst_117 = arith.constant 1.000000e+00 : f32
    %386 = vector.broadcast %cst_117 : f32 to vector<2x96xf32>
    %387 = arith.addf %386, %385 : vector<2x96xf32>
    %388 = arith.divf %386, %387 : vector<2x96xf32>
    %389 = vector.extract_strided_slice %388 {offsets = [0, 0], sizes = [2, 32], strides = [1, 1]} : vector<2x96xf32> to vector<2x32xf32>
    %390 = vector.extract_strided_slice %388 {offsets = [0, 32], sizes = [2, 32], strides = [1, 1]} : vector<2x96xf32> to vector<2x32xf32>
    %391 = vector.extract_strided_slice %388 {offsets = [0, 64], sizes = [2, 32], strides = [1, 1]} : vector<2x96xf32> to vector<2x32xf32>
    %392 = vector.extract_strided_slice %382 {offsets = [0, 96], sizes = [2, 32], strides = [1, 1]} : vector<2x128xf32> to vector<2x32xf32>
    %393 = math.tanh %392 : vector<2x32xf32>
    %394 = arith.mulf %390, %373 : vector<2x32xf32>
    %395 = arith.mulf %389, %393 : vector<2x32xf32>
    %396 = arith.addf %394, %395 : vector<2x32xf32>
    %397 = math.tanh %396 : vector<2x32xf32>
    %398 = arith.mulf %391, %397 : vector<2x32xf32>
    %c0_118 = arith.constant 0 : index
    %c3_119 = arith.constant 3 : index
    %c0_120 = arith.constant 0 : index
    %399 = vector.load %arg14[%c0_118, %c3_119, %c0_120] : memref<2x8x32xf32, #tpu.memory_space<vmem>>, vector<2x1x32xf32>
    %400 = vector.shape_cast %399 : vector<2x1x32xf32> to vector<2x32xf32>
    %401 = vector.shape_cast %398 : vector<2x32xf32> to vector<2x1x32xf32>
    tpu.vector_store %arg14[%c0_118, %c3_119, %c0_120], %401 {strides = array<i32>} : memref<2x8x32xf32, #tpu.memory_space<vmem>>, vector<2x1x32xf32>,
    %402 = vector.extract_strided_slice %308 {offsets = [0, 4, 0], sizes = [2, 1, 128], strides = [1, 1, 1]} : vector<2x8x128xf32> to vector<2x1x128xf32>
    %403 = vector.shape_cast %402 : vector<2x1x128xf32> to vector<2x128xf32>
    %cst_121 = arith.constant dense<0.000000e+00> : vector<2x128xf32>
    %404 = tpu.matmul %398, %309, %cst_121 {dimension_numbers = #tpu.dot_dimension_numbers<[1], [0], [0], [1], [0, 0, 1, 1], [], []>} : vector<2x32xf32>, vector<32x128xf32>, vector<2x128xf32> -> vector<2x128xf32>
    %405 = arith.addf %403, %404 : vector<2x128xf32>
    %406 = vector.extract_strided_slice %405 {offsets = [0, 0], sizes = [2, 96], strides = [1, 1]} : vector<2x128xf32> to vector<2x96xf32>
    %407 = arith.negf %406 : vector<2x96xf32>
    %408 = math.exp %407 : vector<2x96xf32>
    %cst_122 = arith.constant 1.000000e+00 : f32
    %409 = vector.broadcast %cst_122 : f32 to vector<2x96xf32>
    %410 = arith.addf %409, %408 : vector<2x96xf32>
    %411 = arith.divf %409, %410 : vector<2x96xf32>
    %412 = vector.extract_strided_slice %411 {offsets = [0, 0], sizes = [2, 32], strides = [1, 1]} : vector<2x96xf32> to vector<2x32xf32>
    %413 = vector.extract_strided_slice %411 {offsets = [0, 32], sizes = [2, 32], strides = [1, 1]} : vector<2x96xf32> to vector<2x32xf32>
    %414 = vector.extract_strided_slice %411 {offsets = [0, 64], sizes = [2, 32], strides = [1, 1]} : vector<2x96xf32> to vector<2x32xf32>
    %415 = vector.extract_strided_slice %405 {offsets = [0, 96], sizes = [2, 32], strides = [1, 1]} : vector<2x128xf32> to vector<2x32xf32>
    %416 = math.tanh %415 : vector<2x32xf32>
    %417 = arith.mulf %413, %396 : vector<2x32xf32>
    %418 = arith.mulf %412, %416 : vector<2x32xf32>
    %419 = arith.addf %417, %418 : vector<2x32xf32>
    %420 = math.tanh %419 : vector<2x32xf32>
    %421 = arith.mulf %414, %420 : vector<2x32xf32>
    %c0_123 = arith.constant 0 : index
    %c4_124 = arith.constant 4 : index
    %c0_125 = arith.constant 0 : index
    %422 = vector.load %arg14[%c0_123, %c4_124, %c0_125] : memref<2x8x32xf32, #tpu.memory_space<vmem>>, vector<2x1x32xf32>
    %423 = vector.shape_cast %422 : vector<2x1x32xf32> to vector<2x32xf32>
    %424 = vector.shape_cast %421 : vector<2x32xf32> to vector<2x1x32xf32>
    tpu.vector_store %arg14[%c0_123, %c4_124, %c0_125], %424 {strides = array<i32>} : memref<2x8x32xf32, #tpu.memory_space<vmem>>, vector<2x1x32xf32>,
    %425 = vector.extract_strided_slice %308 {offsets = [0, 5, 0], sizes = [2, 1, 128], strides = [1, 1, 1]} : vector<2x8x128xf32> to vector<2x1x128xf32>
    %426 = vector.shape_cast %425 : vector<2x1x128xf32> to vector<2x128xf32>
    %cst_126 = arith.constant dense<0.000000e+00> : vector<2x128xf32>
    %427 = tpu.matmul %421, %309, %cst_126 {dimension_numbers = #tpu.dot_dimension_numbers<[1], [0], [0], [1], [0, 0, 1, 1], [], []>} : vector<2x32xf32>, vector<32x128xf32>, vector<2x128xf32> -> vector<2x128xf32>
    %428 = arith.addf %426, %427 : vector<2x128xf32>
    %429 = vector.extract_strided_slice %428 {offsets = [0, 0], sizes = [2, 96], strides = [1, 1]} : vector<2x128xf32> to vector<2x96xf32>
    %430 = arith.negf %429 : vector<2x96xf32>
    %431 = math.exp %430 : vector<2x96xf32>
    %cst_127 = arith.constant 1.000000e+00 : f32
    %432 = vector.broadcast %cst_127 : f32 to vector<2x96xf32>
    %433 = arith.addf %432, %431 : vector<2x96xf32>
    %434 = arith.divf %432, %433 : vector<2x96xf32>
    %435 = vector.extract_strided_slice %434 {offsets = [0, 0], sizes = [2, 32], strides = [1, 1]} : vector<2x96xf32> to vector<2x32xf32>
    %436 = vector.extract_strided_slice %434 {offsets = [0, 32], sizes = [2, 32], strides = [1, 1]} : vector<2x96xf32> to vector<2x32xf32>
    %437 = vector.extract_strided_slice %434 {offsets = [0, 64], sizes = [2, 32], strides = [1, 1]} : vector<2x96xf32> to vector<2x32xf32>
    %438 = vector.extract_strided_slice %428 {offsets = [0, 96], sizes = [2, 32], strides = [1, 1]} : vector<2x128xf32> to vector<2x32xf32>
    %439 = math.tanh %438 : vector<2x32xf32>
    %440 = arith.mulf %436, %419 : vector<2x32xf32>
    %441 = arith.mulf %435, %439 : vector<2x32xf32>
    %442 = arith.addf %440, %441 : vector<2x32xf32>
    %443 = math.tanh %442 : vector<2x32xf32>
    %444 = arith.mulf %437, %443 : vector<2x32xf32>
    %c0_128 = arith.constant 0 : index
    %c5_129 = arith.constant 5 : index
    %c0_130 = arith.constant 0 : index
    %445 = vector.load %arg14[%c0_128, %c5_129, %c0_130] : memref<2x8x32xf32, #tpu.memory_space<vmem>>, vector<2x1x32xf32>
    %446 = vector.shape_cast %445 : vector<2x1x32xf32> to vector<2x32xf32>
    %447 = vector.shape_cast %444 : vector<2x32xf32> to vector<2x1x32xf32>
    tpu.vector_store %arg14[%c0_128, %c5_129, %c0_130], %447 {strides = array<i32>} : memref<2x8x32xf32, #tpu.memory_space<vmem>>, vector<2x1x32xf32>,
    %448 = vector.extract_strided_slice %308 {offsets = [0, 6, 0], sizes = [2, 1, 128], strides = [1, 1, 1]} : vector<2x8x128xf32> to vector<2x1x128xf32>
    %449 = vector.shape_cast %448 : vector<2x1x128xf32> to vector<2x128xf32>
    %cst_131 = arith.constant dense<0.000000e+00> : vector<2x128xf32>
    %450 = tpu.matmul %444, %309, %cst_131 {dimension_numbers = #tpu.dot_dimension_numbers<[1], [0], [0], [1], [0, 0, 1, 1], [], []>} : vector<2x32xf32>, vector<32x128xf32>, vector<2x128xf32> -> vector<2x128xf32>
    %451 = arith.addf %449, %450 : vector<2x128xf32>
    %452 = vector.extract_strided_slice %451 {offsets = [0, 0], sizes = [2, 96], strides = [1, 1]} : vector<2x128xf32> to vector<2x96xf32>
    %453 = arith.negf %452 : vector<2x96xf32>
    %454 = math.exp %453 : vector<2x96xf32>
    %cst_132 = arith.constant 1.000000e+00 : f32
    %455 = vector.broadcast %cst_132 : f32 to vector<2x96xf32>
    %456 = arith.addf %455, %454 : vector<2x96xf32>
    %457 = arith.divf %455, %456 : vector<2x96xf32>
    %458 = vector.extract_strided_slice %457 {offsets = [0, 0], sizes = [2, 32], strides = [1, 1]} : vector<2x96xf32> to vector<2x32xf32>
    %459 = vector.extract_strided_slice %457 {offsets = [0, 32], sizes = [2, 32], strides = [1, 1]} : vector<2x96xf32> to vector<2x32xf32>
    %460 = vector.extract_strided_slice %457 {offsets = [0, 64], sizes = [2, 32], strides = [1, 1]} : vector<2x96xf32> to vector<2x32xf32>
    %461 = vector.extract_strided_slice %451 {offsets = [0, 96], sizes = [2, 32], strides = [1, 1]} : vector<2x128xf32> to vector<2x32xf32>
    %462 = math.tanh %461 : vector<2x32xf32>
    %463 = arith.mulf %459, %442 : vector<2x32xf32>
    %464 = arith.mulf %458, %462 : vector<2x32xf32>
    %465 = arith.addf %463, %464 : vector<2x32xf32>
    %466 = math.tanh %465 : vector<2x32xf32>
    %467 = arith.mulf %460, %466 : vector<2x32xf32>
    %c0_133 = arith.constant 0 : index
    %c6_134 = arith.constant 6 : index
    %c0_135 = arith.constant 0 : index
    %468 = vector.load %arg14[%c0_133, %c6_134, %c0_135] : memref<2x8x32xf32, #tpu.memory_space<vmem>>, vector<2x1x32xf32>
    %469 = vector.shape_cast %468 : vector<2x1x32xf32> to vector<2x32xf32>
    %470 = vector.shape_cast %467 : vector<2x32xf32> to vector<2x1x32xf32>
    tpu.vector_store %arg14[%c0_133, %c6_134, %c0_135], %470 {strides = array<i32>} : memref<2x8x32xf32, #tpu.memory_space<vmem>>, vector<2x1x32xf32>,
    %471 = vector.extract_strided_slice %308 {offsets = [0, 7, 0], sizes = [2, 1, 128], strides = [1, 1, 1]} : vector<2x8x128xf32> to vector<2x1x128xf32>
    %472 = vector.shape_cast %471 : vector<2x1x128xf32> to vector<2x128xf32>
    %cst_136 = arith.constant dense<0.000000e+00> : vector<2x128xf32>
    %473 = tpu.matmul %467, %309, %cst_136 {dimension_numbers = #tpu.dot_dimension_numbers<[1], [0], [0], [1], [0, 0, 1, 1], [], []>} : vector<2x32xf32>, vector<32x128xf32>, vector<2x128xf32> -> vector<2x128xf32>
    %474 = arith.addf %472, %473 : vector<2x128xf32>
    %475 = vector.extract_strided_slice %474 {offsets = [0, 0], sizes = [2, 96], strides = [1, 1]} : vector<2x128xf32> to vector<2x96xf32>
    %476 = arith.negf %475 : vector<2x96xf32>
    %477 = math.exp %476 : vector<2x96xf32>
    %cst_137 = arith.constant 1.000000e+00 : f32
    %478 = vector.broadcast %cst_137 : f32 to vector<2x96xf32>
    %479 = arith.addf %478, %477 : vector<2x96xf32>
    %480 = arith.divf %478, %479 : vector<2x96xf32>
    %481 = vector.extract_strided_slice %480 {offsets = [0, 0], sizes = [2, 32], strides = [1, 1]} : vector<2x96xf32> to vector<2x32xf32>
    %482 = vector.extract_strided_slice %480 {offsets = [0, 32], sizes = [2, 32], strides = [1, 1]} : vector<2x96xf32> to vector<2x32xf32>
    %483 = vector.extract_strided_slice %480 {offsets = [0, 64], sizes = [2, 32], strides = [1, 1]} : vector<2x96xf32> to vector<2x32xf32>
    %484 = vector.extract_strided_slice %474 {offsets = [0, 96], sizes = [2, 32], strides = [1, 1]} : vector<2x128xf32> to vector<2x32xf32>
    %485 = math.tanh %484 : vector<2x32xf32>
    %486 = arith.mulf %482, %465 : vector<2x32xf32>
    %487 = arith.mulf %481, %485 : vector<2x32xf32>
    %488 = arith.addf %486, %487 : vector<2x32xf32>
    %489 = math.tanh %488 : vector<2x32xf32>
    %490 = arith.mulf %483, %489 : vector<2x32xf32>
    %c0_138 = arith.constant 0 : index
    %c7_139 = arith.constant 7 : index
    %c0_140 = arith.constant 0 : index
    %491 = vector.load %arg14[%c0_138, %c7_139, %c0_140] : memref<2x8x32xf32, #tpu.memory_space<vmem>>, vector<2x1x32xf32>
    %492 = vector.shape_cast %491 : vector<2x1x32xf32> to vector<2x32xf32>
    %493 = vector.shape_cast %490 : vector<2x32xf32> to vector<2x1x32xf32>
    tpu.vector_store %arg14[%c0_138, %c7_139, %c0_140], %493 {strides = array<i32>} : memref<2x8x32xf32, #tpu.memory_space<vmem>>, vector<2x1x32xf32>,
    return
  }
}

</mosaic_0001>

<llo_original>
// kernel: seq2seq_attention_forward.1
$region0: #{seq2seq_attention_forward.1}
  #allocation0 [shape = 'u32[]', space=smem, size = 0x4, offset = 0x4, fixed_abs, tag = 'smem constant byte address 0x4 - core index']
  #allocation1 [shape = 'u32[72,128]{1,0:T(1,128)}', space=vmem, size = 0x9000, scoped, tag = 'internal scratch']
  #allocation2 [shape = 'f32[2,8,32]{2,1,0:T(8,128)}', space=vmem, size = 0x2000, scoped, tag = 'scratch operand']
  %s0 = inlined_call_operand.vmem [shape: f32[2,8,16], index: 0, kind: input, shape index: {}]
  %s1 = inlined_call_operand.vmem [shape: f32[16,128], index: 1, kind: input, shape index: {}]
  %s2 = inlined_call_operand.vmem [shape: f32[32,128], index: 2, kind: input, shape index: {}]
  %s3 = inlined_call_operand.vmem [shape: f32[1,128], index: 3, kind: input, shape index: {}]
  %s4 = inlined_call_operand.vmem [shape: f32[16,128], index: 4, kind: input, shape index: {}]
  %s5 = inlined_call_operand.vmem [shape: f32[32,128], index: 5, kind: input, shape index: {}]
  %s6 = inlined_call_operand.vmem [shape: f32[1,128], index: 6, kind: input, shape index: {}]
  %s7 = inlined_call_operand.vmem [shape: f32[32,96], index: 7, kind: input, shape index: {}]
  %s8 = inlined_call_operand.vmem [shape: f32[1,96], index: 8, kind: input, shape index: {}]
  %s9 = inlined_call_operand.vmem [shape: f32[32,32], index: 9, kind: input, shape index: {}]
  %s10 = inlined_call_operand.vmem [shape: f32[1,32], index: 10, kind: input, shape index: {}]
  %s11 = inlined_call_operand.vmem [shape: f32[32,10], index: 11, kind: input, shape index: {}]
  %s12 = inlined_call_operand.vmem [shape: f32[1,10], index: 12, kind: input, shape index: {}]
  %s13 = inlined_call_operand.hbm [shape: f32[2,10], index: 13, kind: output, shape index: {0}]
  %s14 = inlined_call_operand.hbm [shape: f32[2,8,32], index: 14, kind: output, shape index: {1}]
  %15 = xla_tuple %s13, %s14
  %s16 = sld [smem:[#allocation0]]
  $region70: #{seq2seq_attention_forward.1} parent=0
    _
  %s18 = ssub.s32 1, %s16
  %s19 = scalar_select 0, %s18, %s16
  $region1: #{seq2seq_attention_forward.1} parent=0
    #allocation3 [shape = 'u8[1024]{0}', space=vmem, size = 0x400, scoped, tag = 'output window, operand 0, single buffered']
    #allocation4 [shape = 's32[1]{0}', space=sflag, size = 0x4, scoped, tag = 'scoped memory for seq2seq_attention_forward.1']
    #allocation5 [shape = 'u8[8192]{0}', space=vmem, size = 0x2000, scoped, tag = 'output window, operand 1, single buffered']
    #allocation6 [shape = 's32[1]{0}', space=sflag, size = 0x4, scoped, tag = 'scoped memory for seq2seq_attention_forward.1']
    %20 = vsyncpa [#allocation4], 0
    %21 = vsyncpa [#allocation6], 0
    // Predicated region
    $region2: #{seq2seq_attention_forward.1} parent=1 // pred_check
      _
    $region3: #{seq2seq_attention_forward.1} parent=1 // pred_check_branch
      %23 = sbr.rel (0) target = $region5
    $region4: #{seq2seq_attention_forward.1} parent=1 // pred_region
      _
    $region5: #{seq2seq_attention_forward.1} parent=1 // pred_fallthru
      _
    // Predicated region
    $region6: #{seq2seq_attention_forward.1} parent=1 // pred_check
      _
    $region7: #{seq2seq_attention_forward.1} parent=1 // pred_check_branch
      %25 = sbr.rel (0) target = $region9
    $region8: #{seq2seq_attention_forward.1} parent=1 // pred_region
      _
    $region9: #{seq2seq_attention_forward.1} parent=1 // pred_fallthru
      _
    // Predicated region
    $region10: #{seq2seq_attention_forward.1} parent=1 // pred_check
      _
    $region11: #{seq2seq_attention_forward.1} parent=1 // pred_check_branch
      %27 = sbr.rel (0) target = $region13
    $region12: #{seq2seq_attention_forward.1} parent=1 // pred_region
      _
    $region13: #{seq2seq_attention_forward.1} parent=1 // pred_fallthru
      _
    // Predicated region
    $region14: #{seq2seq_attention_forward.1} parent=1 // pred_check
      _
    $region15: #{seq2seq_attention_forward.1} parent=1 // pred_check_branch
      %29 = sbr.rel (0) target = $region17
    $region16: #{seq2seq_attention_forward.1} parent=1 // pred_region
      _
    $region17: #{seq2seq_attention_forward.1} parent=1 // pred_fallthru
      _
    // Predicated region
    $region18: #{seq2seq_attention_forward.1} parent=1 // pred_check
      _
    $region19: #{seq2seq_attention_forward.1} parent=1 // pred_check_branch
      %31 = sbr.rel (0) target = $region21
    $region20: #{seq2seq_attention_forward.1} parent=1 // pred_region
      _
    $region21: #{seq2seq_attention_forward.1} parent=1 // pred_fallthru
      _
    // Predicated region
    $region22: #{seq2seq_attention_forward.1} parent=1 // pred_check
      _
    $region23: #{seq2seq_attention_forward.1} parent=1 // pred_check_branch
      %33 = sbr.rel (0) target = $region25
    $region24: #{seq2seq_attention_forward.1} parent=1 // pred_region
      _
    $region25: #{seq2seq_attention_forward.1} parent=1 // pred_fallthru
      _
    // Predicated region
    $region26: #{seq2seq_attention_forward.1} parent=1 // pred_check
      _
    $region27: #{seq2seq_attention_forward.1} parent=1 // pred_check_branch
      %35 = sbr.rel (0) target = $region29
    $region28: #{seq2seq_attention_forward.1} parent=1 // pred_region
      _
    $region29: #{seq2seq_attention_forward.1} parent=1 // pred_fallthru
      _
    // Predicated region
    $region30: #{seq2seq_attention_forward.1} parent=1 // pred_check
      _
    $region31: #{seq2seq_attention_forward.1} parent=1 // pred_check_branch
      %37 = sbr.rel (0) target = $region33
    $region32: #{seq2seq_attention_forward.1} parent=1 // pred_region
      _
    $region33: #{seq2seq_attention_forward.1} parent=1 // pred_fallthru
      _
    // Predicated region
    $region34: #{seq2seq_attention_forward.1} parent=1 // pred_check
      _
    $region35: #{seq2seq_attention_forward.1} parent=1 // pred_check_branch
      %39 = sbr.rel (0) target = $region37
    $region36: #{seq2seq_attention_forward.1} parent=1 // pred_region
      _
    $region37: #{seq2seq_attention_forward.1} parent=1 // pred_fallthru
      _
    // Predicated region
    $region38: #{seq2seq_attention_forward.1} parent=1 // pred_check
      _
    $region39: #{seq2seq_attention_forward.1} parent=1 // pred_check_branch
      %41 = sbr.rel (0) target = $region41
    $region40: #{seq2seq_attention_forward.1} parent=1 // pred_region
      _
    $region41: #{seq2seq_attention_forward.1} parent=1 // pred_fallthru
      _
    // Predicated region
    $region42: #{seq2seq_attention_forward.1} parent=1 // pred_check
      _
    $region43: #{seq2seq_attention_forward.1} parent=1 // pred_check_branch
      %43 = sbr.rel (0) target = $region45
    $region44: #{seq2seq_attention_forward.1} parent=1 // pred_region
      _
    $region45: #{seq2seq_attention_forward.1} parent=1 // pred_fallthru
      _
    // Predicated region
    $region46: #{seq2seq_attention_forward.1} parent=1 // pred_check
      _
    $region47: #{seq2seq_attention_forward.1} parent=1 // pred_check_branch
      %45 = sbr.rel (0) target = $region49
    $region48: #{seq2seq_attention_forward.1} parent=1 // pred_region
      _
    $region49: #{seq2seq_attention_forward.1} parent=1 // pred_fallthru
      _
    // Predicated region
    $region50: #{seq2seq_attention_forward.1} parent=1 // pred_check
      _
    $region51: #{seq2seq_attention_forward.1} parent=1 // pred_check_branch
      %47 = sbr.rel (0) target = $region53
    $region52: #{seq2seq_attention_forward.1} parent=1 // pred_region
      _
    $region53: #{seq2seq_attention_forward.1} parent=1 // pred_fallthru
      _
    %v48 = vld [vmem:[%s0] sm:$0xff]
    %v49 = vld [vmem:[%s0 + $0x8] sm:$0xff]
    %v50 = vld [vmem:[%s1] sm:$0xff]
    %v51 = vld [vmem:[%s1 + $0x8] sm:$0xff]
    %v52 = vld [vmem:[%s3] sm:$0x1]
    %v54 = vperm.slane %v52, 0
    %vm56 = vcmask 130048
    %v58 = vsel %vm56, %v48, 0
    %v61 = vsel %vm56, %v49, 0
    %63 = vmatpush.msra.mxu0 0.0
    %64 = vmatpush.msra.mxu0 0.0
    %65 = vmatpush.msra.mxu0 0.0
    %66 = vmatpush.msra.mxu0 0.0
    %67 = vmatpush.msra.mxu0 0.0
    %68 = vmatpush.msra.mxu0 0.0
    %69 = vmatpush.msra.mxu0 0.0
    %70 = vmatpush.msra.mxu0 0.0
    %71 = vmatpush.msra.mxu0 0.0
    %72 = vmatpush.msra.mxu0 0.0
    %73 = vmatpush.msra.mxu0 0.0
    %74 = vmatpush.msra.mxu0 0.0
    %75 = vmatpush.msra.mxu0 0.0
    %76 = vmatpush.msra.mxu0 0.0
    %77 = vmatpush.msra.mxu0 %v51
    %78 = vmatpush.msra.mxu0 %v50
    %79 = vmatmul.f32.gmra.mxu0 %v58
    %v80 = vpop.f32.mrf.mxu0
    %v81 = vadd.f32 %v54, %v80
    %82 = vmatmul.f32.gmra.mxu0 %v61
    %v83 = vpop.f32.mrf.mxu0
    %v84 = vadd.f32 %v54, %v83
    %85 = vdwg.mxu0
    %v86 = vld [vmem:[%s2] sm:$0xff]
    %v87 = vld [vmem:[%s2 + $0x8] sm:$0xff]
    %v88 = vld [vmem:[%s2 + $0x10] sm:$0xff]
    %v89 = vld [vmem:[%s2 + $0x18] sm:$0xff]
    %vm90 = vcmask 261120
    %v92 = vsel %vm90, 0.0, 0
    %94 = vmatpush.msra.mxu0 0.0
    %95 = vmatpush.msra.mxu0 0.0
    %96 = vmatpush.msra.mxu0 0.0
    %97 = vmatpush.msra.mxu0 0.0
    %98 = vmatpush.msra.mxu0 0.0
    %99 = vmatpush.msra.mxu0 0.0
    %100 = vmatpush.msra.mxu0 0.0
    %101 = vmatpush.msra.mxu0 0.0
    %102 = vmatpush.msra.mxu0 0.0
    %103 = vmatpush.msra.mxu0 0.0
    %104 = vmatpush.msra.mxu0 0.0
    %105 = vmatpush.msra.mxu0 0.0
    %106 = vmatpush.msra.mxu0 %v89
    %107 = vmatpush.msra.mxu0 %v88
    %108 = vmatpush.msra.mxu0 %v87
    %109 = vmatpush.msra.mxu0 %v86
    %110 = vmatmul.f32.gmra.mxu0 %v92
    %v111 = vpop.f32.mrf.mxu0
    %v112 = vadd.f32 0.0, %v111
    %113 = vdwg.mxu0
    %v115 = vrot.slane %v112, 1
    %v118 = vadd.f32 %v81, %v112
    %v119 = vadd.f32 %v84, %v115
    %v120 = vxor.u32 %v118, 2147483648
    %v121 = vxor.u32 %v119, 2147483648
    %v122 = vmul.f32 %v120, 1.442695
    %v123 = vpow.pop %v122
    %v124 = vmul.f32 %v121, 1.442695
    %v125 = vpow.pop %v124
    %v126 = vadd.f32 %v123, 1.0
    %v127 = vadd.f32 %v125, 1.0
    %v128 = vrcp.pop %v126
    %v129 = vmul.f32 %v126, %v128
    %v130 = vsub.f32 1.0, %v129
    %v131 = vmul.f32 %v128, %v130
    %v132 = vadd.f32 %v128, %v131
    %vm133 = vweird.f32 %v126
    %vm134 = vweird.f32 %v128
    %vm135 = vmor %vm133, %vm134
    %v136 = vsel %vm135, %v128, %v132
    %v137 = vand.u32 2147483647, %v126
    %vm138 = vcmp.eq.f32.partialorder %v137, 8.507059e+37
    %v139 = vand.u32 %v126, 2147483648
    %v140 = vor.u32 1.1754944e-38, %v139
    %v141 = vsel %vm138, %v140, %v136
    %v142 = vmul.f32 1.0, %v141
    %v143 = vrcp.pop %v127
    %v144 = vmul.f32 %v127, %v143
    %v145 = vsub.f32 1.0, %v144
    %v146 = vmul.f32 %v143, %v145
    %v147 = vadd.f32 %v143, %v146
    %vm148 = vweird.f32 %v127
    %vm149 = vweird.f32 %v143
    %vm150 = vmor %vm148, %vm149
    %v151 = vsel %vm150, %v143, %v147
    %v152 = vand.u32 2147483647, %v127
    %vm153 = vcmp.eq.f32.partialorder %v152, 8.507059e+37
    %v154 = vand.u32 %v127, 2147483648
    %v155 = vor.u32 1.1754944e-38, %v154
    %v156 = vsel %vm153, %v155, %v151
    %v157 = vmul.f32 1.0, %v156
    %v158 = vtanh.pop %v118
    %v159 = vtanh.pop %v119
    %v160 = vmul.f32 %v142, 0.0
    %v161 = vmul.f32 %v157, 0.0
    %164 = vrot.lane.b32.xlu0 %v158, 32
    %v165 = vpop.permute.xlu0 %164
    %166 = vrot.lane.b32.xlu0 %v159, 32
    %v167 = vpop.permute.xlu0 %166
    %v170 = vmul.f32 %v142, %v165
    %v171 = vmul.f32 %v157, %v167
    %174 = vrot.lane.b32.xlu0 %v170, 32
    %v175 = vpop.permute.xlu0 %174
    %176 = vrot.lane.b32.xlu0 %v171, 32
    %v177 = vpop.permute.xlu0 %176
    %v180 = vadd.f32 %v160, %v175
    %v181 = vadd.f32 %v161, %v177
    %v182 = vtanh.pop %v180
    %v183 = vtanh.pop %v181
    %186 = vrot.lane.b32.xlu0 %v182, 32
    %v187 = vpop.permute.xlu0 %186
    %188 = vrot.lane.b32.xlu0 %v183, 32
    %v189 = vpop.permute.xlu0 %188
    %v192 = vmul.f32 %v142, %v187
    %v193 = vmul.f32 %v157, %v189
    %196 = vrot.lane.b32.xlu0 %v192, 64
    %v197 = vpop.permute.xlu0 %196
    %198 = vrot.lane.b32.xlu0 %v193, 64
    %v199 = vpop.permute.xlu0 %198
    %vm202 = vcmask 253952
    %203 = vst.msk [vmem:[#allocation2] sm:$0x1] %vm202, %v197
    %204 = vst.msk [vmem:[#allocation2 + $0x8] sm:$0x1] %vm202, %v199
    %v205 = vrot.slane %v193, 7
    %vm206 = vcmask 1041409
    %v207 = vsel %vm206, %v205, %v192
    %208 = vrot.lane.b32.xlu0 %v207, 64
    %v209 = vpop.permute.xlu0 %208
    %v210 = vsel %vm90, %v209, 0
    %212 = vmatpush.msra.mxu0 0.0
    %213 = vmatpush.msra.mxu0 0.0
    %214 = vmatpush.msra.mxu0 0.0
    %215 = vmatpush.msra.mxu0 0.0
    %216 = vmatpush.msra.mxu0 0.0
    %217 = vmatpush.msra.mxu0 0.0
    %218 = vmatpush.msra.mxu0 0.0
    %219 = vmatpush.msra.mxu0 0.0
    %220 = vmatpush.msra.mxu0 0.0
    %221 = vmatpush.msra.mxu0 0.0
    %222 = vmatpush.msra.mxu0 0.0
    %223 = vmatpush.msra.mxu0 0.0
    %224 = vmatpush.msra.mxu0 %v89
    %225 = vmatpush.msra.mxu0 %v88
    %226 = vmatpush.msra.mxu0 %v87
    %227 = vmatpush.msra.mxu0 %v86
    %228 = vmatmul.f32.gmra.mxu0 %v210
    %v229 = vpop.f32.mrf.mxu0
    %v230 = vadd.f32 0.0, %v229
    %231 = vdwg.mxu0
    %v233 = vrot.slane %v230, 7
    %v236 = vadd.f32 %v81, %v233
    %v237 = vadd.f32 %v84, %v230
    %v238 = vxor.u32 %v236, 2147483648
    %v239 = vxor.u32 %v237, 2147483648
    %v240 = vmul.f32 %v238, 1.442695
    %v241 = vpow.pop %v240
    %v242 = vmul.f32 %v239, 1.442695
    %v243 = vpow.pop %v242
    %v244 = vadd.f32 %v241, 1.0
    %v245 = vadd.f32 %v243, 1.0
    %v246 = vrcp.pop %v244
    %v247 = vmul.f32 %v244, %v246
    %v248 = vsub.f32 1.0, %v247
    %v249 = vmul.f32 %v246, %v248
    %v250 = vadd.f32 %v246, %v249
    %vm251 = vweird.f32 %v244
    %vm252 = vweird.f32 %v246
    %vm253 = vmor %vm251, %vm252
    %v254 = vsel %vm253, %v246, %v250
    %v255 = vand.u32 2147483647, %v244
    %vm256 = vcmp.eq.f32.partialorder %v255, 8.507059e+37
    %v257 = vand.u32 %v244, 2147483648
    %v258 = vor.u32 1.1754944e-38, %v257
    %v259 = vsel %vm256, %v258, %v254
    %v260 = vmul.f32 1.0, %v259
    %v261 = vrcp.pop %v245
    %v262 = vmul.f32 %v245, %v261
    %v263 = vsub.f32 1.0, %v262
    %v264 = vmul.f32 %v261, %v263
    %v265 = vadd.f32 %v261, %v264
    %vm266 = vweird.f32 %v245
    %vm267 = vweird.f32 %v261
    %vm268 = vmor %vm266, %vm267
    %v269 = vsel %vm268, %v261, %v265
    %v270 = vand.u32 2147483647, %v245
    %vm271 = vcmp.eq.f32.partialorder %v270, 8.507059e+37
    %v272 = vand.u32 %v245, 2147483648
    %v273 = vor.u32 1.1754944e-38, %v272
    %v274 = vsel %vm271, %v273, %v269
    %v275 = vmul.f32 1.0, %v274
    %v276 = vtanh.pop %v236
    %v277 = vtanh.pop %v237
    %v280 = vrot.slane %v180, 7
    %v281 = vrot.slane %v181, 7
    %v284 = vmul.f32 %v260, %v280
    %v285 = vmul.f32 %v275, %v281
    %288 = vrot.lane.b32.xlu0 %v276, 32
    %v289 = vpop.permute.xlu0 %288
    %290 = vrot.lane.b32.xlu0 %v277, 32
    %v291 = vpop.permute.xlu0 %290
    %v294 = vmul.f32 %v260, %v289
    %v295 = vmul.f32 %v275, %v291
    %298 = vrot.lane.b32.xlu0 %v294, 32
    %v299 = vpop.permute.xlu0 %298
    %300 = vrot.lane.b32.xlu0 %v295, 32
    %v301 = vpop.permute.xlu0 %300
    %v304 = vadd.f32 %v284, %v299
    %v305 = vadd.f32 %v285, %v301
    %v306 = vtanh.pop %v304
    %v307 = vtanh.pop %v305
    %310 = vrot.lane.b32.xlu0 %v306, 32
    %v311 = vpop.permute.xlu0 %310
    %312 = vrot.lane.b32.xlu0 %v307, 32
    %v313 = vpop.permute.xlu0 %312
    %v316 = vmul.f32 %v260, %v311
    %v317 = vmul.f32 %v275, %v313
    %320 = vrot.lane.b32.xlu0 %v316, 64
    %v321 = vpop.permute.xlu0 %320
    %322 = vrot.lane.b32.xlu0 %v317, 64
    %v323 = vpop.permute.xlu0 %322
    %vm326 = vcmask 254977
    %327 = vst.msk [vmem:[#allocation2] sm:$0x2] %vm326, %v321
    %328 = vst.msk [vmem:[#allocation2 + $0x8] sm:$0x2] %vm326, %v323
    %v329 = vrot.slane %v316, 1
    %v330 = vsel %vm206, %v317, %v329
    %331 = vrot.lane.b32.xlu0 %v330, 64
    %v332 = vpop.permute.xlu0 %331
    %v333 = vsel %vm90, %v332, 0
    %335 = vmatpush.msra.mxu0 0.0
    %336 = vmatpush.msra.mxu0 0.0
    %337 = vmatpush.msra.mxu0 0.0
    %338 = vmatpush.msra.mxu0 0.0
    %339 = vmatpush.msra.mxu0 0.0
    %340 = vmatpush.msra.mxu0 0.0
    %341 = vmatpush.msra.mxu0 0.0
    %342 = vmatpush.msra.mxu0 0.0
    %343 = vmatpush.msra.mxu0 0.0
    %344 = vmatpush.msra.mxu0 0.0
    %345 = vmatpush.msra.mxu0 0.0
    %346 = vmatpush.msra.mxu0 0.0
    %347 = vmatpush.msra.mxu0 %v89
    %348 = vmatpush.msra.mxu0 %v88
    %349 = vmatpush.msra.mxu0 %v87
    %350 = vmatpush.msra.mxu0 %v86
    %351 = vmatmul.f32.gmra.mxu0 %v333
    %v352 = vpop.f32.mrf.mxu0
    %v353 = vadd.f32 0.0, %v352
    %354 = vdwg.mxu0
    %v356 = vrot.slane %v353, 6
    %v357 = vrot.slane %v353, 7
    %v360 = vadd.f32 %v81, %v356
    %v361 = vadd.f32 %v84, %v357
    %v362 = vxor.u32 %v360, 2147483648
    %v363 = vxor.u32 %v361, 2147483648
    %v364 = vmul.f32 %v362, 1.442695
    %v365 = vpow.pop %v364
    %v366 = vmul.f32 %v363, 1.442695
    %v367 = vpow.pop %v366
    %v368 = vadd.f32 %v365, 1.0
    %v369 = vadd.f32 %v367, 1.0
    %v370 = vrcp.pop %v368
    %v371 = vmul.f32 %v368, %v370
    %v372 = vsub.f32 1.0, %v371
    %v373 = vmul.f32 %v370, %v372
    %v374 = vadd.f32 %v370, %v373
    %vm375 = vweird.f32 %v368
    %vm376 = vweird.f32 %v370
    %vm377 = vmor %vm375, %vm376
    %v378 = vsel %vm377, %v370, %v374
    %v379 = vand.u32 2147483647, %v368
    %vm380 = vcmp.eq.f32.partialorder %v379, 8.507059e+37
    %v381 = vand.u32 %v368, 2147483648
    %v382 = vor.u32 1.1754944e-38, %v381
    %v383 = vsel %vm380, %v382, %v378
    %v384 = vmul.f32 1.0, %v383
    %v385 = vrcp.pop %v369
    %v386 = vmul.f32 %v369, %v385
    %v387 = vsub.f32 1.0, %v386
    %v388 = vmul.f32 %v385, %v387
    %v389 = vadd.f32 %v385, %v388
    %vm390 = vweird.f32 %v369
    %vm391 = vweird.f32 %v385
    %vm392 = vmor %vm390, %vm391
    %v393 = vsel %vm392, %v385, %v389
    %v394 = vand.u32 2147483647, %v369
    %vm395 = vcmp.eq.f32.partialorder %v394, 8.507059e+37
    %v396 = vand.u32 %v369, 2147483648
    %v397 = vor.u32 1.1754944e-38, %v396
    %v398 = vsel %vm395, %v397, %v393
    %v399 = vmul.f32 1.0, %v398
    %v400 = vtanh.pop %v360
    %v401 = vtanh.pop %v361
    %v404 = vrot.slane %v304, 7
    %v405 = vrot.slane %v305, 7
    %v408 = vmul.f32 %v384, %v404
    %v409 = vmul.f32 %v399, %v405
    %412 = vrot.lane.b32.xlu0 %v400, 32
    %v413 = vpop.permute.xlu0 %412
    %414 = vrot.lane.b32.xlu0 %v401, 32
    %v415 = vpop.permute.xlu0 %414
    %v418 = vmul.f32 %v384, %v413
    %v419 = vmul.f32 %v399, %v415
    %422 = vrot.lane.b32.xlu0 %v418, 32
    %v423 = vpop.permute.xlu0 %422
    %424 = vrot.lane.b32.xlu0 %v419, 32
    %v425 = vpop.permute.xlu0 %424
    %v428 = vadd.f32 %v408, %v423
    %v429 = vadd.f32 %v409, %v425
    %v430 = vtanh.pop %v428
    %v431 = vtanh.pop %v429
    %434 = vrot.lane.b32.xlu0 %v430, 32
    %v435 = vpop.permute.xlu0 %434
    %436 = vrot.lane.b32.xlu0 %v431, 32
    %v437 = vpop.permute.xlu0 %436
    %v440 = vmul.f32 %v384, %v435
    %v441 = vmul.f32 %v399, %v437
    %444 = vrot.lane.b32.xlu0 %v440, 64
    %v445 = vpop.permute.xlu0 %444
    %446 = vrot.lane.b32.xlu0 %v441, 64
    %v447 = vpop.permute.xlu0 %446
    %vm450 = vcmask 256002
    %451 = vst.msk [vmem:[#allocation2] sm:$0x4] %vm450, %v445
    %452 = vst.msk [vmem:[#allocation2 + $0x8] sm:$0x4] %vm450, %v447
    %v453 = vrot.slane %v440, 2
    %v454 = vrot.slane %v441, 1
    %v455 = vsel %vm206, %v454, %v453
    %456 = vrot.lane.b32.xlu0 %v455, 64
    %v457 = vpop.permute.xlu0 %456
    %v458 = vsel %vm90, %v457, 0
    %460 = vmatpush.msra.mxu0 0.0
    %461 = vmatpush.msra.mxu0 0.0
    %462 = vmatpush.msra.mxu0 0.0
    %463 = vmatpush.msra.mxu0 0.0
    %464 = vmatpush.msra.mxu0 0.0
    %465 = vmatpush.msra.mxu0 0.0
    %466 = vmatpush.msra.mxu0 0.0
    %467 = vmatpush.msra.mxu0 0.0
    %468 = vmatpush.msra.mxu0 0.0
    %469 = vmatpush.msra.mxu0 0.0
    %470 = vmatpush.msra.mxu0 0.0
    %471 = vmatpush.msra.mxu0 0.0
    %472 = vmatpush.msra.mxu0 %v89
    %473 = vmatpush.msra.mxu0 %v88
    %474 = vmatpush.msra.mxu0 %v87
    %475 = vmatpush.msra.mxu0 %v86
    %476 = vmatmul.f32.gmra.mxu0 %v458
    %v477 = vpop.f32.mrf.mxu0
    %v478 = vadd.f32 0.0, %v477
    %479 = vdwg.mxu0
    %v481 = vrot.slane %v478, 5
    %v482 = vrot.slane %v478, 6
    %v485 = vadd.f32 %v81, %v481
    %v486 = vadd.f32 %v84, %v482
    %v487 = vxor.u32 %v485, 2147483648
    %v488 = vxor.u32 %v486, 2147483648
    %v489 = vmul.f32 %v487, 1.442695
    %v490 = vpow.pop %v489
    %v491 = vmul.f32 %v488, 1.442695
    %v492 = vpow.pop %v491
    %v493 = vadd.f32 %v490, 1.0
    %v494 = vadd.f32 %v492, 1.0
    %v495 = vrcp.pop %v493
    %v496 = vmul.f32 %v493, %v495
    %v497 = vsub.f32 1.0, %v496
    %v498 = vmul.f32 %v495, %v497
    %v499 = vadd.f32 %v495, %v498
    %vm500 = vweird.f32 %v493
    %vm501 = vweird.f32 %v495
    %vm502 = vmor %vm500, %vm501
    %v503 = vsel %vm502, %v495, %v499
    %v504 = vand.u32 2147483647, %v493
    %vm505 = vcmp.eq.f32.partialorder %v504, 8.507059e+37
    %v506 = vand.u32 %v493, 2147483648
    %v507 = vor.u32 1.1754944e-38, %v506
    %v508 = vsel %vm505, %v507, %v503
    %v509 = vmul.f32 1.0, %v508
    %v510 = vrcp.pop %v494
    %v511 = vmul.f32 %v494, %v510
    %v512 = vsub.f32 1.0, %v511
    %v513 = vmul.f32 %v510, %v512
    %v514 = vadd.f32 %v510, %v513
    %vm515 = vweird.f32 %v494
    %vm516 = vweird.f32 %v510
    %vm517 = vmor %vm515, %vm516
    %v518 = vsel %vm517, %v510, %v514
    %v519 = vand.u32 2147483647, %v494
    %vm520 = vcmp.eq.f32.partialorder %v519, 8.507059e+37
    %v521 = vand.u32 %v494, 2147483648
    %v522 = vor.u32 1.1754944e-38, %v521
    %v523 = vsel %vm520, %v522, %v518
    %v524 = vmul.f32 1.0, %v523
    %v525 = vtanh.pop %v485
    %v526 = vtanh.pop %v486
    %v529 = vrot.slane %v428, 7
    %v530 = vrot.slane %v429, 7
    %v533 = vmul.f32 %v509, %v529
    %v534 = vmul.f32 %v524, %v530
    %537 = vrot.lane.b32.xlu0 %v525, 32
    %v538 = vpop.permute.xlu0 %537
    %539 = vrot.lane.b32.xlu0 %v526, 32
    %v540 = vpop.permute.xlu0 %539
    %v543 = vmul.f32 %v509, %v538
    %v544 = vmul.f32 %v524, %v540
    %547 = vrot.lane.b32.xlu0 %v543, 32
    %v548 = vpop.permute.xlu0 %547
    %549 = vrot.lane.b32.xlu0 %v544, 32
    %v550 = vpop.permute.xlu0 %549
    %v553 = vadd.f32 %v533, %v548
    %v554 = vadd.f32 %v534, %v550
    %v555 = vtanh.pop %v553
    %v556 = vtanh.pop %v554
    %559 = vrot.lane.b32.xlu0 %v555, 32
    %v560 = vpop.permute.xlu0 %559
    %561 = vrot.lane.b32.xlu0 %v556, 32
    %v562 = vpop.permute.xlu0 %561
    %v565 = vmul.f32 %v509, %v560
    %v566 = vmul.f32 %v524, %v562
    %569 = vrot.lane.b32.xlu0 %v565, 64
    %v570 = vpop.permute.xlu0 %569
    %571 = vrot.lane.b32.xlu0 %v566, 64
    %v572 = vpop.permute.xlu0 %571
    %vm575 = vcmask 257027
    %576 = vst.msk [vmem:[#allocation2] sm:$0x8] %vm575, %v570
    %577 = vst.msk [vmem:[#allocation2 + $0x8] sm:$0x8] %vm575, %v572
    %v578 = vrot.slane %v565, 3
    %v579 = vrot.slane %v566, 2
    %v580 = vsel %vm206, %v579, %v578
    %581 = vrot.lane.b32.xlu0 %v580, 64
    %v582 = vpop.permute.xlu0 %581
    %v583 = vsel %vm90, %v582, 0
    %585 = vmatpush.msra.mxu0 0.0
    %586 = vmatpush.msra.mxu0 0.0
    %587 = vmatpush.msra.mxu0 0.0
    %588 = vmatpush.msra.mxu0 0.0
    %589 = vmatpush.msra.mxu0 0.0
    %590 = vmatpush.msra.mxu0 0.0
    %591 = vmatpush.msra.mxu0 0.0
    %592 = vmatpush.msra.mxu0 0.0
    %593 = vmatpush.msra.mxu0 0.0
    %594 = vmatpush.msra.mxu0 0.0
    %595 = vmatpush.msra.mxu0 0.0
    %596 = vmatpush.msra.mxu0 0.0
    %597 = vmatpush.msra.mxu0 %v89
    %598 = vmatpush.msra.mxu0 %v88
    %599 = vmatpush.msra.mxu0 %v87
    %600 = vmatpush.msra.mxu0 %v86
    %601 = vmatmul.f32.gmra.mxu0 %v583
    %v602 = vpop.f32.mrf.mxu0
    %v603 = vadd.f32 0.0, %v602
    %604 = vdwg.mxu0
    %v606 = vrot.slane %v603, 4
    %v607 = vrot.slane %v603, 5
    %v610 = vadd.f32 %v81, %v606
    %v611 = vadd.f32 %v84, %v607
    %v612 = vxor.u32 %v610, 2147483648
    %v613 = vxor.u32 %v611, 2147483648
    %v614 = vmul.f32 %v612, 1.442695
    %v615 = vpow.pop %v614
    %v616 = vmul.f32 %v613, 1.442695
    %v617 = vpow.pop %v616
    %v618 = vadd.f32 %v615, 1.0
    %v619 = vadd.f32 %v617, 1.0
    %v620 = vrcp.pop %v618
    %v621 = vmul.f32 %v618, %v620
    %v622 = vsub.f32 1.0, %v621
    %v623 = vmul.f32 %v620, %v622
    %v624 = vadd.f32 %v620, %v623
    %vm625 = vweird.f32 %v618
    %vm626 = vweird.f32 %v620
    %vm627 = vmor %vm625, %vm626
    %v628 = vsel %vm627, %v620, %v624
    %v629 = vand.u32 2147483647, %v618
    %vm630 = vcmp.eq.f32.partialorder %v629, 8.507059e+37
    %v631 = vand.u32 %v618, 2147483648
    %v632 = vor.u32 1.1754944e-38, %v631
    %v633 = vsel %vm630, %v632, %v628
    %v634 = vmul.f32 1.0, %v633
    %v635 = vrcp.pop %v619
    %v636 = vmul.f32 %v619, %v635
    %v637 = vsub.f32 1.0, %v636
    %v638 = vmul.f32 %v635, %v637
    %v639 = vadd.f32 %v635, %v638
    %vm640 = vweird.f32 %v619
    %vm641 = vweird.f32 %v635
    %vm642 = vmor %vm640, %vm641
    %v643 = vsel %vm642, %v635, %v639
    %v644 = vand.u32 2147483647, %v619
    %vm645 = vcmp.eq.f32.partialorder %v644, 8.507059e+37
    %v646 = vand.u32 %v619, 2147483648
    %v647 = vor.u32 1.1754944e-38, %v646
    %v648 = vsel %vm645, %v647, %v643
    %v649 = vmul.f32 1.0, %v648
    %v650 = vtanh.pop %v610
    %v651 = vtanh.pop %v611
    %v654 = vrot.slane %v553, 7
    %v655 = vrot.slane %v554, 7
    %v658 = vmul.f32 %v634, %v654
    %v659 = vmul.f32 %v649, %v655
    %662 = vrot.lane.b32.xlu0 %v650, 32
    %v663 = vpop.permute.xlu0 %662
    %664 = vrot.lane.b32.xlu0 %v651, 32
    %v665 = vpop.permute.xlu0 %664
    %v668 = vmul.f32 %v634, %v663
    %v669 = vmul.f32 %v649, %v665
    %672 = vrot.lane.b32.xlu0 %v668, 32
    %v673 = vpop.permute.xlu0 %672
    %674 = vrot.lane.b32.xlu0 %v669, 32
    %v675 = vpop.permute.xlu0 %674
    %v678 = vadd.f32 %v658, %v673
    %v679 = vadd.f32 %v659, %v675
    %v680 = vtanh.pop %v678
    %v681 = vtanh.pop %v679
    %684 = vrot.lane.b32.xlu0 %v680, 32
    %v685 = vpop.permute.xlu0 %684
    %686 = vrot.lane.b32.xlu0 %v681, 32
    %v687 = vpop.permute.xlu0 %686
    %v690 = vmul.f32 %v634, %v685
    %v691 = vmul.f32 %v649, %v687
    %694 = vrot.lane.b32.xlu0 %v690, 64
    %v695 = vpop.permute.xlu0 %694
    %696 = vrot.lane.b32.xlu0 %v691, 64
    %v697 = vpop.permute.xlu0 %696
    %vm700 = vcmask 258052
    %701 = vst.msk [vmem:[#allocation2] sm:$0x10] %vm700, %v695
    %702 = vst.msk [vmem:[#allocation2 + $0x8] sm:$0x10] %vm700, %v697
    %v703 = vrot.slane %v690, 4
    %v704 = vrot.slane %v691, 3
    %v705 = vsel %vm206, %v704, %v703
    %706 = vrot.lane.b32.xlu0 %v705, 64
    %v707 = vpop.permute.xlu0 %706
    %v708 = vsel %vm90, %v707, 0
    %710 = vmatpush.msra.mxu0 0.0
    %711 = vmatpush.msra.mxu0 0.0
    %712 = vmatpush.msra.mxu0 0.0
    %713 = vmatpush.msra.mxu0 0.0
    %714 = vmatpush.msra.mxu0 0.0
    %715 = vmatpush.msra.mxu0 0.0
    %716 = vmatpush.msra.mxu0 0.0
    %717 = vmatpush.msra.mxu0 0.0
    %718 = vmatpush.msra.mxu0 0.0
    %719 = vmatpush.msra.mxu0 0.0
    %720 = vmatpush.msra.mxu0 0.0
    %721 = vmatpush.msra.mxu0 0.0
    %722 = vmatpush.msra.mxu0 %v89
    %723 = vmatpush.msra.mxu0 %v88
    %724 = vmatpush.msra.mxu0 %v87
    %725 = vmatpush.msra.mxu0 %v86
    %726 = vmatmul.f32.gmra.mxu0 %v708
    %v727 = vpop.f32.mrf.mxu0
    %v728 = vadd.f32 0.0, %v727
    %729 = vdwg.mxu0
    %v731 = vrot.slane %v728, 3
    %v732 = vrot.slane %v728, 4
    %v735 = vadd.f32 %v81, %v731
    %v736 = vadd.f32 %v84, %v732
    %v737 = vxor.u32 %v735, 2147483648
    %v738 = vxor.u32 %v736, 2147483648
    %v739 = vmul.f32 %v737, 1.442695
    %v740 = vpow.pop %v739
    %v741 = vmul.f32 %v738, 1.442695
    %v742 = vpow.pop %v741
    %v743 = vadd.f32 %v740, 1.0
    %v744 = vadd.f32 %v742, 1.0
    %v745 = vrcp.pop %v743
    %v746 = vmul.f32 %v743, %v745
    %v747 = vsub.f32 1.0, %v746
    %v748 = vmul.f32 %v745, %v747
    %v749 = vadd.f32 %v745, %v748
    %vm750 = vweird.f32 %v743
    %vm751 = vweird.f32 %v745
    %vm752 = vmor %vm750, %vm751
    %v753 = vsel %vm752, %v745, %v749
    %v754 = vand.u32 2147483647, %v743
    %vm755 = vcmp.eq.f32.partialorder %v754, 8.507059e+37
    %v756 = vand.u32 %v743, 2147483648
    %v757 = vor.u32 1.1754944e-38, %v756
    %v758 = vsel %vm755, %v757, %v753
    %v759 = vmul.f32 1.0, %v758
    %v760 = vrcp.pop %v744
    %v761 = vmul.f32 %v744, %v760
    %v762 = vsub.f32 1.0, %v761
    %v763 = vmul.f32 %v760, %v762
    %v764 = vadd.f32 %v760, %v763
    %vm765 = vweird.f32 %v744
    %vm766 = vweird.f32 %v760
    %vm767 = vmor %vm765, %vm766
    %v768 = vsel %vm767, %v760, %v764
    %v769 = vand.u32 2147483647, %v744
    %vm770 = vcmp.eq.f32.partialorder %v769, 8.507059e+37
    %v771 = vand.u32 %v744, 2147483648
    %v772 = vor.u32 1.1754944e-38, %v771
    %v773 = vsel %vm770, %v772, %v768
    %v774 = vmul.f32 1.0, %v773
    %v775 = vtanh.pop %v735
    %v776 = vtanh.pop %v736
    %v779 = vrot.slane %v678, 7
    %v780 = vrot.slane %v679, 7
    %v783 = vmul.f32 %v759, %v779
    %v784 = vmul.f32 %v774, %v780
    %787 = vrot.lane.b32.xlu0 %v775, 32
    %v788 = vpop.permute.xlu0 %787
    %789 = vrot.lane.b32.xlu0 %v776, 32
    %v790 = vpop.permute.xlu0 %789
    %v793 = vmul.f32 %v759, %v788
    %v794 = vmul.f32 %v774, %v790
    %797 = vrot.lane.b32.xlu0 %v793, 32
    %v798 = vpop.permute.xlu0 %797
    %799 = vrot.lane.b32.xlu0 %v794, 32
    %v800 = vpop.permute.xlu0 %799
    %v803 = vadd.f32 %v783, %v798
    %v804 = vadd.f32 %v784, %v800
    %v805 = vtanh.pop %v803
    %v806 = vtanh.pop %v804
    %809 = vrot.lane.b32.xlu0 %v805, 32
    %v810 = vpop.permute.xlu0 %809
    %811 = vrot.lane.b32.xlu0 %v806, 32
    %v812 = vpop.permute.xlu0 %811
    %v815 = vmul.f32 %v759, %v810
    %v816 = vmul.f32 %v774, %v812
    %819 = vrot.lane.b32.xlu0 %v815, 64
    %v820 = vpop.permute.xlu0 %819
    %821 = vrot.lane.b32.xlu0 %v816, 64
    %v822 = vpop.permute.xlu0 %821
    %vm825 = vcmask 259077
    %826 = vst.msk [vmem:[#allocation2] sm:$0x20] %vm825, %v820
    %827 = vst.msk [vmem:[#allocation2 + $0x8] sm:$0x20] %vm825, %v822
    %v828 = vrot.slane %v815, 5
    %v829 = vrot.slane %v816, 4
    %v830 = vsel %vm206, %v829, %v828
    %831 = vrot.lane.b32.xlu0 %v830, 64
    %v832 = vpop.permute.xlu0 %831
    %v833 = vsel %vm90, %v832, 0
    %835 = vmatpush.msra.mxu0 0.0
    %836 = vmatpush.msra.mxu0 0.0
    %837 = vmatpush.msra.mxu0 0.0
    %838 = vmatpush.msra.mxu0 0.0
    %839 = vmatpush.msra.mxu0 0.0
    %840 = vmatpush.msra.mxu0 0.0
    %841 = vmatpush.msra.mxu0 0.0
    %842 = vmatpush.msra.mxu0 0.0
    %843 = vmatpush.msra.mxu0 0.0
    %844 = vmatpush.msra.mxu0 0.0
    %845 = vmatpush.msra.mxu0 0.0
    %846 = vmatpush.msra.mxu0 0.0
    %847 = vmatpush.msra.mxu0 %v89
    %848 = vmatpush.msra.mxu0 %v88
    %849 = vmatpush.msra.mxu0 %v87
    %850 = vmatpush.msra.mxu0 %v86
    %851 = vmatmul.f32.gmra.mxu0 %v833
    %v852 = vpop.f32.mrf.mxu0
    %v853 = vadd.f32 0.0, %v852
    %854 = vdwg.mxu0
    %v856 = vrot.slane %v853, 2
    %v857 = vrot.slane %v853, 3
    %v860 = vadd.f32 %v81, %v856
    %v861 = vadd.f32 %v84, %v857
    %v862 = vxor.u32 %v860, 2147483648
    %v863 = vxor.u32 %v861, 2147483648
    %v864 = vmul.f32 %v862, 1.442695
    %v865 = vpow.pop %v864
    %v866 = vmul.f32 %v863, 1.442695
    %v867 = vpow.pop %v866
    %v868 = vadd.f32 %v865, 1.0
    %v869 = vadd.f32 %v867, 1.0
    %v870 = vrcp.pop %v868
    %v871 = vmul.f32 %v868, %v870
    %v872 = vsub.f32 1.0, %v871
    %v873 = vmul.f32 %v870, %v872
    %v874 = vadd.f32 %v870, %v873
    %vm875 = vweird.f32 %v868
    %vm876 = vweird.f32 %v870
    %vm877 = vmor %vm875, %vm876
    %v878 = vsel %vm877, %v870, %v874
    %v879 = vand.u32 2147483647, %v868
    %vm880 = vcmp.eq.f32.partialorder %v879, 8.507059e+37
    %v881 = vand.u32 %v868, 2147483648
    %v882 = vor.u32 1.1754944e-38, %v881
    %v883 = vsel %vm880, %v882, %v878
    %v884 = vmul.f32 1.0, %v883
    %v885 = vrcp.pop %v869
    %v886 = vmul.f32 %v869, %v885
    %v887 = vsub.f32 1.0, %v886
    %v888 = vmul.f32 %v885, %v887
    %v889 = vadd.f32 %v885, %v888
    %vm890 = vweird.f32 %v869
    %vm891 = vweird.f32 %v885
    %vm892 = vmor %vm890, %vm891
    %v893 = vsel %vm892, %v885, %v889
    %v894 = vand.u32 2147483647, %v869
    %vm895 = vcmp.eq.f32.partialorder %v894, 8.507059e+37
    %v896 = vand.u32 %v869, 2147483648
    %v897 = vor.u32 1.1754944e-38, %v896
    %v898 = vsel %vm895, %v897, %v893
    %v899 = vmul.f32 1.0, %v898
    %v900 = vtanh.pop %v860
    %v901 = vtanh.pop %v861
    %v904 = vrot.slane %v803, 7
    %v905 = vrot.slane %v804, 7
    %v908 = vmul.f32 %v884, %v904
    %v909 = vmul.f32 %v899, %v905
    %912 = vrot.lane.b32.xlu0 %v900, 32
    %v913 = vpop.permute.xlu0 %912
    %914 = vrot.lane.b32.xlu0 %v901, 32
    %v915 = vpop.permute.xlu0 %914
    %v918 = vmul.f32 %v884, %v913
    %v919 = vmul.f32 %v899, %v915
    %922 = vrot.lane.b32.xlu0 %v918, 32
    %v923 = vpop.permute.xlu0 %922
    %924 = vrot.lane.b32.xlu0 %v919, 32
    %v925 = vpop.permute.xlu0 %924
    %v928 = vadd.f32 %v908, %v923
    %v929 = vadd.f32 %v909, %v925
    %v930 = vtanh.pop %v928
    %v931 = vtanh.pop %v929
    %934 = vrot.lane.b32.xlu0 %v930, 32
    %v935 = vpop.permute.xlu0 %934
    %936 = vrot.lane.b32.xlu0 %v931, 32
    %v937 = vpop.permute.xlu0 %936
    %v940 = vmul.f32 %v884, %v935
    %v941 = vmul.f32 %v899, %v937
    %944 = vrot.lane.b32.xlu0 %v940, 64
    %v945 = vpop.permute.xlu0 %944
    %946 = vrot.lane.b32.xlu0 %v941, 64
    %v947 = vpop.permute.xlu0 %946
    %vm950 = vcmask 260102
    %951 = vst.msk [vmem:[#allocation2] sm:$0x40] %vm950, %v945
    %952 = vst.msk [vmem:[#allocation2 + $0x8] sm:$0x40] %vm950, %v947
    %v953 = vrot.slane %v940, 6
    %v954 = vrot.slane %v941, 5
    %v955 = vsel %vm206, %v954, %v953
    %956 = vrot.lane.b32.xlu0 %v955, 64
    %v957 = vpop.permute.xlu0 %956
    %v958 = vsel %vm90, %v957, 0
    %960 = vmatpush.msra.mxu0 0.0
    %961 = vmatpush.msra.mxu0 0.0
    %962 = vmatpush.msra.mxu0 0.0
    %963 = vmatpush.msra.mxu0 0.0
    %964 = vmatpush.msra.mxu0 0.0
    %965 = vmatpush.msra.mxu0 0.0
    %966 = vmatpush.msra.mxu0 0.0
    %967 = vmatpush.msra.mxu0 0.0
    %968 = vmatpush.msra.mxu0 0.0
    %969 = vmatpush.msra.mxu0 0.0
    %970 = vmatpush.msra.mxu0 0.0
    %971 = vmatpush.msra.mxu0 0.0
    %972 = vmatpush.msra.mxu0 %v89
    %973 = vmatpush.msra.mxu0 %v88
    %974 = vmatpush.msra.mxu0 %v87
    %975 = vmatpush.msra.mxu0 %v86
    %976 = vmatmul.f32.gmra.mxu0 %v958
    %v977 = vpop.f32.mrf.mxu0
    %v978 = vadd.f32 0.0, %v977
    %979 = vdwg.mxu0
    %v981 = vrot.slane %v978, 1
    %v982 = vrot.slane %v978, 2
    %v985 = vadd.f32 %v81, %v981
    %v986 = vadd.f32 %v84, %v982
    %v987 = vxor.u32 %v985, 2147483648
    %v988 = vxor.u32 %v986, 2147483648
    %v989 = vmul.f32 %v987, 1.442695
    %v990 = vpow.pop %v989
    %v991 = vmul.f32 %v988, 1.442695
    %v992 = vpow.pop %v991
    %v993 = vadd.f32 %v990, 1.0
    %v994 = vadd.f32 %v992, 1.0
    %v995 = vrcp.pop %v993
    %v996 = vmul.f32 %v993, %v995
    %v997 = vsub.f32 1.0, %v996
    %v998 = vmul.f32 %v995, %v997
    %v999 = vadd.f32 %v995, %v998
    %vm1000 = vweird.f32 %v993
    %vm1001 = vweird.f32 %v995
    %vm1002 = vmor %vm1000, %vm1001
    %v1003 = vsel %vm1002, %v995, %v999
    %v1004 = vand.u32 2147483647, %v993
    %vm1005 = vcmp.eq.f32.partialorder %v1004, 8.507059e+37
    %v1006 = vand.u32 %v993, 2147483648
    %v1007 = vor.u32 1.1754944e-38, %v1006
    %v1008 = vsel %vm1005, %v1007, %v1003
    %v1009 = vmul.f32 1.0, %v1008
    %v1010 = vrcp.pop %v994
    %v1011 = vmul.f32 %v994, %v1010
    %v1012 = vsub.f32 1.0, %v1011
    %v1013 = vmul.f32 %v1010, %v1012
    %v1014 = vadd.f32 %v1010, %v1013
    %vm1015 = vweird.f32 %v994
    %vm1016 = vweird.f32 %v1010
    %vm1017 = vmor %vm1015, %vm1016
    %v1018 = vsel %vm1017, %v1010, %v1014
    %v1019 = vand.u32 2147483647, %v994
    %vm1020 = vcmp.eq.f32.partialorder %v1019, 8.507059e+37
    %v1021 = vand.u32 %v994, 2147483648
    %v1022 = vor.u32 1.1754944e-38, %v1021
    %v1023 = vsel %vm1020, %v1022, %v1018
    %v1024 = vmul.f32 1.0, %v1023
    %v1025 = vtanh.pop %v985
    %v1026 = vtanh.pop %v986
    %v1029 = vrot.slane %v928, 7
    %v1030 = vrot.slane %v929, 7
    %v1033 = vmul.f32 %v1009, %v1029
    %v1034 = vmul.f32 %v1024, %v1030
    %1037 = vrot.lane.b32.xlu0 %v1025, 32
    %v1038 = vpop.permute.xlu0 %1037
    %1039 = vrot.lane.b32.xlu0 %v1026, 32
    %v1040 = vpop.permute.xlu0 %1039
    %v1043 = vmul.f32 %v1009, %v1038
    %v1044 = vmul.f32 %v1024, %v1040
    %1047 = vrot.lane.b32.xlu0 %v1043, 32
    %v1048 = vpop.permute.xlu0 %1047
    %1049 = vrot.lane.b32.xlu0 %v1044, 32
    %v1050 = vpop.permute.xlu0 %1049
    %v1053 = vadd.f32 %v1033, %v1048
    %v1054 = vadd.f32 %v1034, %v1050
    %v1055 = vtanh.pop %v1053
    %v1056 = vtanh.pop %v1054
    %1059 = vrot.lane.b32.xlu0 %v1055, 32
    %v1060 = vpop.permute.xlu0 %1059
    %1061 = vrot.lane.b32.xlu0 %v1056, 32
    %v1062 = vpop.permute.xlu0 %1061
    %v1065 = vmul.f32 %v1009, %v1060
    %v1066 = vmul.f32 %v1024, %v1062
    %1069 = vrot.lane.b32.xlu0 %v1065, 64
    %v1070 = vpop.permute.xlu0 %1069
    %1071 = vrot.lane.b32.xlu0 %v1066, 64
    %v1072 = vpop.permute.xlu0 %1071
    %vm1075 = vcmask 261127
    %1076 = vst.msk [vmem:[#allocation2] sm:$0x80] %vm1075, %v1070
    %1077 = vst.msk [vmem:[#allocation2 + $0x8] sm:$0x80] %vm1075, %v1072
    %v1078 = vld [vmem:[#allocation2] sm:$0xff]
    %v1079 = vld [vmem:[#allocation2 + $0x8] sm:$0xff]
    %v1080 = vld [vmem:[%s7] sm:$0xff]
    %v1081 = vld [vmem:[%s7 + $0x8] sm:$0xff]
    %v1082 = vld [vmem:[%s7 + $0x10] sm:$0xff]
    %v1083 = vld [vmem:[%s7 + $0x18] sm:$0xff]
    %v1084 = vld [vmem:[%s8] sm:$0x1]
    %v1086 = vperm.slane %v1084, 0
    %v1089 = vsel %vm90, %v1078, 0
    %v1092 = vsel %vm90, %v1079, 0
    %1094 = vmatpush.msra.mxu0 0.0
    %1095 = vmatpush.msra.mxu0 0.0
    %1096 = vmatpush.msra.mxu0 0.0
    %1097 = vmatpush.msra.mxu0 0.0
    %1098 = vmatpush.msra.mxu0 0.0
    %1099 = vmatpush.msra.mxu0 0.0
    %1100 = vmatpush.msra.mxu0 0.0
    %1101 = vmatpush.msra.mxu0 0.0
    %1102 = vmatpush.msra.mxu0 0.0
    %1103 = vmatpush.msra.mxu0 0.0
    %1104 = vmatpush.msra.mxu0 0.0
    %1105 = vmatpush.msra.mxu0 0.0
    %1106 = vmatpush.msra.mxu0 %v1083
    %1107 = vmatpush.msra.mxu0 %v1082
    %1108 = vmatpush.msra.mxu0 %v1081
    %1109 = vmatpush.msra.mxu0 %v1080
    %1110 = vmatmul.f32.gmra.mxu0 %v1089
    %v1111 = vpop.f32.mrf.mxu0
    %v1112 = vadd.f32 %v1086, %v1111
    %1113 = vmatmul.f32.gmra.mxu0 %v1092
    %v1114 = vpop.f32.mrf.mxu0
    %v1115 = vadd.f32 %v1086, %v1114
    %1116 = vdwg.mxu0
    %1118 = vrot.lane.b32.xlu0 %v1112, 96
    %v1119 = vpop.permute.xlu0 %1118
    %vm1120 = vcmask 64512
    %v1121 = vsel %vm1120, %v1112, 0
    %v1123 = vsel %vm1120, %v1119, 0
    %1125 = vmatpush.xpose.msra.mxu0 0.0
    %1126 = vmatpush.xpose.msra.mxu0 0.0
    %1127 = vmatpush.xpose.msra.mxu0 0.0
    %1128 = vmatpush.xpose.msra.mxu0 0.0
    %1129 = vmatpush.xpose.msra.mxu0 0.0
    %1130 = vmatpush.xpose.msra.mxu0 0.0
    %1131 = vmatpush.xpose.msra.mxu0 0.0
    %1132 = vmatpush.xpose.msra.mxu0 0.0
    %1133 = vmatpush.xpose.msra.mxu0 0.0
    %1134 = vmatpush.xpose.msra.mxu0 0.0
    %1135 = vmatpush.xpose.msra.mxu0 0.0
    %1136 = vmatpush.xpose.msra.mxu0 0.0
    %1137 = vmatpush.xpose.msra.mxu0 0.0
    %1138 = vmatpush.xpose.msra.mxu0 0.0
    %1139 = vmatpush.xpose.msra.mxu0 0.0
    %1140 = vmatpush.xpose.msra.mxu0 %v1123
    %1141 = vmatmul.f32.gmra.mxu0 %v1121
    %v1142 = vpop.f32.mrf.mxu0
    %v1143 = vadd.f32 0.0, %v1142
    %1144 = vdwg.mxu0
    %1146 = vrot.lane.b32.xlu0 %v1115, 96
    %v1147 = vpop.permute.xlu0 %1146
    %v1148 = vsel %vm1120, %v1115, 0
    %v1150 = vsel %vm1120, %v1147, 0
    %1152 = vmatpush.xpose.msra.mxu0 0.0
    %1153 = vmatpush.xpose.msra.mxu0 0.0
    %1154 = vmatpush.xpose.msra.mxu0 0.0
    %1155 = vmatpush.xpose.msra.mxu0 0.0
    %1156 = vmatpush.xpose.msra.mxu0 0.0
    %1157 = vmatpush.xpose.msra.mxu0 0.0
    %1158 = vmatpush.xpose.msra.mxu0 0.0
    %1159 = vmatpush.xpose.msra.mxu0 0.0
    %1160 = vmatpush.xpose.msra.mxu0 0.0
    %1161 = vmatpush.xpose.msra.mxu0 0.0
    %1162 = vmatpush.xpose.msra.mxu0 0.0
    %1163 = vmatpush.xpose.msra.mxu0 0.0
    %1164 = vmatpush.xpose.msra.mxu0 0.0
    %1165 = vmatpush.xpose.msra.mxu0 0.0
    %1166 = vmatpush.xpose.msra.mxu0 0.0
    %1167 = vmatpush.xpose.msra.mxu0 %v1150
    %1168 = vmatmul.f32.gmra.mxu0 %v1148
    %v1169 = vpop.f32.mrf.mxu0
    %v1170 = vadd.f32 0.0, %v1169
    %1171 = vdwg.mxu0
    %v1172 = vmul.f32 %v1143, 0.35355338
    %v1173 = vmul.f32 %v1170, 0.35355338
    %v1174 = vsel %vm1120, %v1172, -inf
    %1175 = vmax.xlane.f32.xlu0 %v1174
    %v1176 = vpop.xlane.xlu0 %1175
    %v1177 = vsel %vm1120, %v1173, -inf
    %1178 = vmax.xlane.f32.xlu0 %v1177
    %v1179 = vpop.xlane.xlu0 %1178
    %v1180 = vsub.f32 %v1172, %v1176
    %v1181 = vsub.f32 %v1173, %v1179
    %v1182 = vmul.f32 %v1180, 1.442695
    %v1183 = vpow.pop %v1182
    %v1184 = vmul.f32 %v1181, 1.442695
    %v1185 = vpow.pop %v1184
    %v1186 = vsel %vm1120, %v1183, 0.0
    %1187 = vadd.xlane.f32.xlu0 %v1186
    %v1188 = vpop.xlane.xlu0 %1187
    %v1189 = vsel %vm1120, %v1185, 0.0
    %1190 = vadd.xlane.f32.xlu0 %v1189
    %v1191 = vpop.xlane.xlu0 %1190
    %v1192 = vrcp.pop %v1188
    %v1193 = vrcp.pop %v1191
    %v1194 = vmul.f32 %v1183, %v1192
    %v1195 = vmul.f32 %v1185, %v1193
    %1196 = vrot.lane.b32.xlu0 %v1112, 64
    %v1197 = vpop.permute.xlu0 %1196
    %v1200 = vsel %vm1120, %v1194, 0
    %1202 = vmatpush.msra.mxu0 0.0
    %1203 = vmatpush.msra.mxu0 0.0
    %1204 = vmatpush.msra.mxu0 0.0
    %1205 = vmatpush.msra.mxu0 0.0
    %1206 = vmatpush.msra.mxu0 0.0
    %1207 = vmatpush.msra.mxu0 0.0
    %1208 = vmatpush.msra.mxu0 0.0
    %1209 = vmatpush.msra.mxu0 0.0
    %1210 = vmatpush.msra.mxu0 0.0
    %1211 = vmatpush.msra.mxu0 0.0
    %1212 = vmatpush.msra.mxu0 0.0
    %1213 = vmatpush.msra.mxu0 0.0
    %1214 = vmatpush.msra.mxu0 0.0
    %1215 = vmatpush.msra.mxu0 0.0
    %1216 = vmatpush.msra.mxu0 0.0
    %1217 = vmatpush.msra.mxu0 %v1197
    %1218 = vmatmul.f32.gmra.mxu0 %v1200
    %v1219 = vpop.f32.mrf.mxu0
    %v1220 = vadd.f32 0.0, %v1219
    %1221 = vdwg.mxu0
    %1222 = vrot.lane.b32.xlu0 %v1115, 64
    %v1223 = vpop.permute.xlu0 %1222
    %v1226 = vsel %vm1120, %v1195, 0
    %1228 = vmatpush.msra.mxu0 0.0
    %1229 = vmatpush.msra.mxu0 0.0
    %1230 = vmatpush.msra.mxu0 0.0
    %1231 = vmatpush.msra.mxu0 0.0
    %1232 = vmatpush.msra.mxu0 0.0
    %1233 = vmatpush.msra.mxu0 0.0
    %1234 = vmatpush.msra.mxu0 0.0
    %1235 = vmatpush.msra.mxu0 0.0
    %1236 = vmatpush.msra.mxu0 0.0
    %1237 = vmatpush.msra.mxu0 0.0
    %1238 = vmatpush.msra.mxu0 0.0
    %1239 = vmatpush.msra.mxu0 0.0
    %1240 = vmatpush.msra.mxu0 0.0
    %1241 = vmatpush.msra.mxu0 0.0
    %1242 = vmatpush.msra.mxu0 0.0
    %1243 = vmatpush.msra.mxu0 %v1223
    %1244 = vmatmul.f32.gmra.mxu0 %v1226
    %v1245 = vpop.f32.mrf.mxu0
    %v1246 = vadd.f32 0.0, %v1245
    %1247 = vdwg.mxu0
    %v1248 = vsel %vm1120, %v1220, 0.0
    %v1249 = vrot.slane %v1248, 4
    %v1250 = vadd.f32 %v1248, %v1249
    %v1251 = vrot.slane %v1250, 2
    %v1252 = vadd.f32 %v1250, %v1251
    %v1253 = vrot.slane %v1252, 1
    %v1254 = vadd.f32 %v1252, %v1253
    %v1255 = vsel %vm1120, %v1246, 0.0
    %v1256 = vrot.slane %v1255, 4
    %v1257 = vadd.f32 %v1255, %v1256
    %v1258 = vrot.slane %v1257, 2
    %v1259 = vadd.f32 %v1257, %v1258
    %v1260 = vrot.slane %v1259, 1
    %v1261 = vadd.f32 %v1259, %v1260
    %v1262 = vld [vmem:[%s9] sm:$0xff]
    %1263 = vrot.lane.b32.xlu0 %v1112, 120
    %v1264 = vpop.permute.xlu0 %1263
    %1265 = vrot.lane.b32.xlu0 %v1112, 88
    %v1266 = vpop.permute.xlu0 %1265
    %v1267 = vsel %vm1120, %v1264, 0
    %v1269 = vsel %vm1120, %v1266, 0
    %1271 = vmatpush.xpose.msra.mxu0 0.0
    %1272 = vmatpush.xpose.msra.mxu0 0.0
    %1273 = vmatpush.xpose.msra.mxu0 0.0
    %1274 = vmatpush.xpose.msra.mxu0 0.0
    %1275 = vmatpush.xpose.msra.mxu0 0.0
    %1276 = vmatpush.xpose.msra.mxu0 0.0
    %1277 = vmatpush.xpose.msra.mxu0 0.0
    %1278 = vmatpush.xpose.msra.mxu0 0.0
    %1279 = vmatpush.xpose.msra.mxu0 0.0
    %1280 = vmatpush.xpose.msra.mxu0 0.0
    %1281 = vmatpush.xpose.msra.mxu0 0.0
    %1282 = vmatpush.xpose.msra.mxu0 0.0
    %1283 = vmatpush.xpose.msra.mxu0 0.0
    %1284 = vmatpush.xpose.msra.mxu0 0.0
    %1285 = vmatpush.xpose.msra.mxu0 0.0
    %1286 = vmatpush.xpose.msra.mxu0 %v1269
    %1287 = vmatmul.f32.gmra.mxu0 %v1267
    %v1288 = vpop.f32.mrf.mxu0
    %v1289 = vadd.f32 0.0, %v1288
    %1290 = vdwg.mxu0
    %1291 = vrot.lane.b32.xlu0 %v1115, 120
    %v1292 = vpop.permute.xlu0 %1291
    %1293 = vrot.lane.b32.xlu0 %v1115, 88
    %v1294 = vpop.permute.xlu0 %1293
    %v1295 = vsel %vm1120, %v1292, 0
    %v1297 = vsel %vm1120, %v1294, 0
    %1299 = vmatpush.xpose.msra.mxu0 0.0
    %1300 = vmatpush.xpose.msra.mxu0 0.0
    %1301 = vmatpush.xpose.msra.mxu0 0.0
    %1302 = vmatpush.xpose.msra.mxu0 0.0
    %1303 = vmatpush.xpose.msra.mxu0 0.0
    %1304 = vmatpush.xpose.msra.mxu0 0.0
    %1305 = vmatpush.xpose.msra.mxu0 0.0
    %1306 = vmatpush.xpose.msra.mxu0 0.0
    %1307 = vmatpush.xpose.msra.mxu0 0.0
    %1308 = vmatpush.xpose.msra.mxu0 0.0
    %1309 = vmatpush.xpose.msra.mxu0 0.0
    %1310 = vmatpush.xpose.msra.mxu0 0.0
    %1311 = vmatpush.xpose.msra.mxu0 0.0
    %1312 = vmatpush.xpose.msra.mxu0 0.0
    %1313 = vmatpush.xpose.msra.mxu0 0.0
    %1314 = vmatpush.xpose.msra.mxu0 %v1297
    %1315 = vmatmul.f32.gmra.mxu0 %v1295
    %v1316 = vpop.f32.mrf.mxu0
    %v1317 = vadd.f32 0.0, %v1316
    %1318 = vdwg.mxu0
    %v1319 = vmul.f32 %v1289, 0.35355338
    %v1320 = vmul.f32 %v1317, 0.35355338
    %v1321 = vsel %vm1120, %v1319, -inf
    %1322 = vmax.xlane.f32.xlu0 %v1321
    %v1323 = vpop.xlane.xlu0 %1322
    %v1324 = vsel %vm1120, %v1320, -inf
    %1325 = vmax.xlane.f32.xlu0 %v1324
    %v1326 = vpop.xlane.xlu0 %1325
    %v1327 = vsub.f32 %v1319, %v1323
    %v1328 = vsub.f32 %v1320, %v1326
    %v1329 = vmul.f32 %v1327, 1.442695
    %v1330 = vpow.pop %v1329
    %v1331 = vmul.f32 %v1328, 1.442695
    %v1332 = vpow.pop %v1331
    %v1333 = vsel %vm1120, %v1330, 0.0
    %1334 = vadd.xlane.f32.xlu0 %v1333
    %v1335 = vpop.xlane.xlu0 %1334
    %v1336 = vsel %vm1120, %v1332, 0.0
    %1337 = vadd.xlane.f32.xlu0 %v1336
    %v1338 = vpop.xlane.xlu0 %1337
    %v1339 = vrcp.pop %v1335
    %v1340 = vrcp.pop %v1338
    %v1341 = vmul.f32 %v1330, %v1339
    %v1342 = vmul.f32 %v1332, %v1340
    %1343 = vrot.lane.b32.xlu0 %v1112, 56
    %v1344 = vpop.permute.xlu0 %1343
    %v1347 = vsel %vm1120, %v1341, 0
    %1349 = vmatpush.msra.mxu0 0.0
    %1350 = vmatpush.msra.mxu0 0.0
    %1351 = vmatpush.msra.mxu0 0.0
    %1352 = vmatpush.msra.mxu0 0.0
    %1353 = vmatpush.msra.mxu0 0.0
    %1354 = vmatpush.msra.mxu0 0.0
    %1355 = vmatpush.msra.mxu0 0.0
    %1356 = vmatpush.msra.mxu0 0.0
    %1357 = vmatpush.msra.mxu0 0.0
    %1358 = vmatpush.msra.mxu0 0.0
    %1359 = vmatpush.msra.mxu0 0.0
    %1360 = vmatpush.msra.mxu0 0.0
    %1361 = vmatpush.msra.mxu0 0.0
    %1362 = vmatpush.msra.mxu0 0.0
    %1363 = vmatpush.msra.mxu0 0.0
    %1364 = vmatpush.msra.mxu0 %v1344
    %1365 = vmatmul.f32.gmra.mxu0 %v1347
    %v1366 = vpop.f32.mrf.mxu0
    %v1367 = vadd.f32 0.0, %v1366
    %1368 = vdwg.mxu0
    %1369 = vrot.lane.b32.xlu0 %v1115, 56
    %v1370 = vpop.permute.xlu0 %1369
    %v1373 = vsel %vm1120, %v1342, 0
    %1375 = vmatpush.msra.mxu0 0.0
    %1376 = vmatpush.msra.mxu0 0.0
    %1377 = vmatpush.msra.mxu0 0.0
    %1378 = vmatpush.msra.mxu0 0.0
    %1379 = vmatpush.msra.mxu0 0.0
    %1380 = vmatpush.msra.mxu0 0.0
    %1381 = vmatpush.msra.mxu0 0.0
    %1382 = vmatpush.msra.mxu0 0.0
    %1383 = vmatpush.msra.mxu0 0.0
    %1384 = vmatpush.msra.mxu0 0.0
    %1385 = vmatpush.msra.mxu0 0.0
    %1386 = vmatpush.msra.mxu0 0.0
    %1387 = vmatpush.msra.mxu0 0.0
    %1388 = vmatpush.msra.mxu0 0.0
    %1389 = vmatpush.msra.mxu0 0.0
    %1390 = vmatpush.msra.mxu0 %v1370
    %1391 = vmatmul.f32.gmra.mxu0 %v1373
    %v1392 = vpop.f32.mrf.mxu0
    %v1393 = vadd.f32 0.0, %v1392
    %1394 = vdwg.mxu0
    %v1395 = vsel %vm1120, %v1367, 0.0
    %v1396 = vrot.slane %v1395, 4
    %v1397 = vadd.f32 %v1395, %v1396
    %v1398 = vrot.slane %v1397, 2
    %v1399 = vadd.f32 %v1397, %v1398
    %v1400 = vrot.slane %v1399, 1
    %v1401 = vadd.f32 %v1399, %v1400
    %v1402 = vsel %vm1120, %v1393, 0.0
    %v1403 = vrot.slane %v1402, 4
    %v1404 = vadd.f32 %v1402, %v1403
    %v1405 = vrot.slane %v1404, 2
    %v1406 = vadd.f32 %v1404, %v1405
    %v1407 = vrot.slane %v1406, 1
    %v1408 = vadd.f32 %v1406, %v1407
    %v1409 = vld [vmem:[%s9 + $0x8] sm:$0xff]
    %v1412 = vsel %vm206, %v1408, %v1401
    %v1413 = vsel %vm1120, %v1412, 0
    %1415 = vmatpush.msra.mxu0 0.0
    %1416 = vmatpush.msra.mxu0 0.0
    %1417 = vmatpush.msra.mxu0 0.0
    %1418 = vmatpush.msra.mxu0 0.0
    %1419 = vmatpush.msra.mxu0 0.0
    %1420 = vmatpush.msra.mxu0 0.0
    %1421 = vmatpush.msra.mxu0 0.0
    %1422 = vmatpush.msra.mxu0 0.0
    %1423 = vmatpush.msra.mxu0 0.0
    %1424 = vmatpush.msra.mxu0 0.0
    %1425 = vmatpush.msra.mxu0 0.0
    %1426 = vmatpush.msra.mxu0 0.0
    %1427 = vmatpush.msra.mxu0 0.0
    %1428 = vmatpush.msra.mxu0 0.0
    %1429 = vmatpush.msra.mxu0 0.0
    %1430 = vmatpush.msra.mxu0 %v1409
    %1431 = vmatmul.f32.gmra.mxu0 %v1413
    %v1432 = vpop.f32.mrf.mxu0
    %v1433 = vadd.f32 0.0, %v1432
    %1434 = vdwg.mxu0
    %v1437 = vsel %vm206, %v1261, %v1254
    %v1438 = vsel %vm1120, %v1437, 0
    %1440 = vmatpush.msra.mxu0 0.0
    %1441 = vmatpush.msra.mxu0 0.0
    %1442 = vmatpush.msra.mxu0 0.0
    %1443 = vmatpush.msra.mxu0 0.0
    %1444 = vmatpush.msra.mxu0 0.0
    %1445 = vmatpush.msra.mxu0 0.0
    %1446 = vmatpush.msra.mxu0 0.0
    %1447 = vmatpush.msra.mxu0 0.0
    %1448 = vmatpush.msra.mxu0 0.0
    %1449 = vmatpush.msra.mxu0 0.0
    %1450 = vmatpush.msra.mxu0 0.0
    %1451 = vmatpush.msra.mxu0 0.0
    %1452 = vmatpush.msra.mxu0 0.0
    %1453 = vmatpush.msra.mxu0 0.0
    %1454 = vmatpush.msra.mxu0 0.0
    %1455 = vmatpush.msra.mxu0 %v1262
    %1456 = vmatmul.f32.gmra.mxu0 %v1438
    %v1457 = vpop.f32.mrf.mxu0
    %v1458 = vadd.f32 %v1433, %v1457
    %1459 = vdwg.mxu0
    %1460 = vrot.lane.b32.xlu0 %v1112, 112
    %v1461 = vpop.permute.xlu0 %1460
    %1462 = vrot.lane.b32.xlu0 %v1112, 80
    %v1463 = vpop.permute.xlu0 %1462
    %v1464 = vsel %vm1120, %v1461, 0
    %v1466 = vsel %vm1120, %v1463, 0
    %1468 = vmatpush.xpose.msra.mxu0 0.0
    %1469 = vmatpush.xpose.msra.mxu0 0.0
    %1470 = vmatpush.xpose.msra.mxu0 0.0
    %1471 = vmatpush.xpose.msra.mxu0 0.0
    %1472 = vmatpush.xpose.msra.mxu0 0.0
    %1473 = vmatpush.xpose.msra.mxu0 0.0
    %1474 = vmatpush.xpose.msra.mxu0 0.0
    %1475 = vmatpush.xpose.msra.mxu0 0.0
    %1476 = vmatpush.xpose.msra.mxu0 0.0
    %1477 = vmatpush.xpose.msra.mxu0 0.0
    %1478 = vmatpush.xpose.msra.mxu0 0.0
    %1479 = vmatpush.xpose.msra.mxu0 0.0
    %1480 = vmatpush.xpose.msra.mxu0 0.0
    %1481 = vmatpush.xpose.msra.mxu0 0.0
    %1482 = vmatpush.xpose.msra.mxu0 0.0
    %1483 = vmatpush.xpose.msra.mxu0 %v1466
    %1484 = vmatmul.f32.gmra.mxu0 %v1464
    %v1485 = vpop.f32.mrf.mxu0
    %v1486 = vadd.f32 0.0, %v1485
    %1487 = vdwg.mxu0
    %1488 = vrot.lane.b32.xlu0 %v1115, 112
    %v1489 = vpop.permute.xlu0 %1488
    %1490 = vrot.lane.b32.xlu0 %v1115, 80
    %v1491 = vpop.permute.xlu0 %1490
    %v1492 = vsel %vm1120, %v1489, 0
    %v1494 = vsel %vm1120, %v1491, 0
    %1496 = vmatpush.xpose.msra.mxu0 0.0
    %1497 = vmatpush.xpose.msra.mxu0 0.0
    %1498 = vmatpush.xpose.msra.mxu0 0.0
    %1499 = vmatpush.xpose.msra.mxu0 0.0
    %1500 = vmatpush.xpose.msra.mxu0 0.0
    %1501 = vmatpush.xpose.msra.mxu0 0.0
    %1502 = vmatpush.xpose.msra.mxu0 0.0
    %1503 = vmatpush.xpose.msra.mxu0 0.0
    %1504 = vmatpush.xpose.msra.mxu0 0.0
    %1505 = vmatpush.xpose.msra.mxu0 0.0
    %1506 = vmatpush.xpose.msra.mxu0 0.0
    %1507 = vmatpush.xpose.msra.mxu0 0.0
    %1508 = vmatpush.xpose.msra.mxu0 0.0
    %1509 = vmatpush.xpose.msra.mxu0 0.0
    %1510 = vmatpush.xpose.msra.mxu0 0.0
    %1511 = vmatpush.xpose.msra.mxu0 %v1494
    %1512 = vmatmul.f32.gmra.mxu0 %v1492
    %v1513 = vpop.f32.mrf.mxu0
    %v1514 = vadd.f32 0.0, %v1513
    %1515 = vdwg.mxu0
    %v1516 = vmul.f32 %v1486, 0.35355338
    %v1517 = vmul.f32 %v1514, 0.35355338
    %v1518 = vsel %vm1120, %v1516, -inf
    %1519 = vmax.xlane.f32.xlu0 %v1518
    %v1520 = vpop.xlane.xlu0 %1519
    %v1521 = vsel %vm1120, %v1517, -inf
    %1522 = vmax.xlane.f32.xlu0 %v1521
    %v1523 = vpop.xlane.xlu0 %1522
    %v1524 = vsub.f32 %v1516, %v1520
    %v1525 = vsub.f32 %v1517, %v1523
    %v1526 = vmul.f32 %v1524, 1.442695
    %v1527 = vpow.pop %v1526
    %v1528 = vmul.f32 %v1525, 1.442695
    %v1529 = vpow.pop %v1528
    %v1530 = vsel %vm1120, %v1527, 0.0
    %1531 = vadd.xlane.f32.xlu0 %v1530
    %v1532 = vpop.xlane.xlu0 %1531
    %v1533 = vsel %vm1120, %v1529, 0.0
    %1534 = vadd.xlane.f32.xlu0 %v1533
    %v1535 = vpop.xlane.xlu0 %1534
    %v1536 = vrcp.pop %v1532
    %v1537 = vrcp.pop %v1535
    %v1538 = vmul.f32 %v1527, %v1536
    %v1539 = vmul.f32 %v1529, %v1537
    %1540 = vrot.lane.b32.xlu0 %v1112, 48
    %v1541 = vpop.permute.xlu0 %1540
    %v1544 = vsel %vm1120, %v1538, 0
    %1546 = vmatpush.msra.mxu0 0.0
    %1547 = vmatpush.msra.mxu0 0.0
    %1548 = vmatpush.msra.mxu0 0.0
    %1549 = vmatpush.msra.mxu0 0.0
    %1550 = vmatpush.msra.mxu0 0.0
    %1551 = vmatpush.msra.mxu0 0.0
    %1552 = vmatpush.msra.mxu0 0.0
    %1553 = vmatpush.msra.mxu0 0.0
    %1554 = vmatpush.msra.mxu0 0.0
    %1555 = vmatpush.msra.mxu0 0.0
    %1556 = vmatpush.msra.mxu0 0.0
    %1557 = vmatpush.msra.mxu0 0.0
    %1558 = vmatpush.msra.mxu0 0.0
    %1559 = vmatpush.msra.mxu0 0.0
    %1560 = vmatpush.msra.mxu0 0.0
    %1561 = vmatpush.msra.mxu0 %v1541
    %1562 = vmatmul.f32.gmra.mxu0 %v1544
    %v1563 = vpop.f32.mrf.mxu0
    %v1564 = vadd.f32 0.0, %v1563
    %1565 = vdwg.mxu0
    %1566 = vrot.lane.b32.xlu0 %v1115, 48
    %v1567 = vpop.permute.xlu0 %1566
    %v1570 = vsel %vm1120, %v1539, 0
    %1572 = vmatpush.msra.mxu0 0.0
    %1573 = vmatpush.msra.mxu0 0.0
    %1574 = vmatpush.msra.mxu0 0.0
    %1575 = vmatpush.msra.mxu0 0.0
    %1576 = vmatpush.msra.mxu0 0.0
    %1577 = vmatpush.msra.mxu0 0.0
    %1578 = vmatpush.msra.mxu0 0.0
    %1579 = vmatpush.msra.mxu0 0.0
    %1580 = vmatpush.msra.mxu0 0.0
    %1581 = vmatpush.msra.mxu0 0.0
    %1582 = vmatpush.msra.mxu0 0.0
    %1583 = vmatpush.msra.mxu0 0.0
    %1584 = vmatpush.msra.mxu0 0.0
    %1585 = vmatpush.msra.mxu0 0.0
    %1586 = vmatpush.msra.mxu0 0.0
    %1587 = vmatpush.msra.mxu0 %v1567
    %1588 = vmatmul.f32.gmra.mxu0 %v1570
    %v1589 = vpop.f32.mrf.mxu0
    %v1590 = vadd.f32 0.0, %v1589
    %1591 = vdwg.mxu0
    %v1592 = vsel %vm1120, %v1564, 0.0
    %v1593 = vrot.slane %v1592, 4
    %v1594 = vadd.f32 %v1592, %v1593
    %v1595 = vrot.slane %v1594, 2
    %v1596 = vadd.f32 %v1594, %v1595
    %v1597 = vrot.slane %v1596, 1
    %v1598 = vadd.f32 %v1596, %v1597
    %v1599 = vsel %vm1120, %v1590, 0.0
    %v1600 = vrot.slane %v1599, 4
    %v1601 = vadd.f32 %v1599, %v1600
    %v1602 = vrot.slane %v1601, 2
    %v1603 = vadd.f32 %v1601, %v1602
    %v1604 = vrot.slane %v1603, 1
    %v1605 = vadd.f32 %v1603, %v1604
    %v1606 = vld [vmem:[%s9 + $0x10] sm:$0xff]
    %v1609 = vsel %vm206, %v1605, %v1598
    %v1610 = vsel %vm1120, %v1609, 0
    %1612 = vmatpush.msra.mxu0 0.0
    %1613 = vmatpush.msra.mxu0 0.0
    %1614 = vmatpush.msra.mxu0 0.0
    %1615 = vmatpush.msra.mxu0 0.0
    %1616 = vmatpush.msra.mxu0 0.0
    %1617 = vmatpush.msra.mxu0 0.0
    %1618 = vmatpush.msra.mxu0 0.0
    %1619 = vmatpush.msra.mxu0 0.0
    %1620 = vmatpush.msra.mxu0 0.0
    %1621 = vmatpush.msra.mxu0 0.0
    %1622 = vmatpush.msra.mxu0 0.0
    %1623 = vmatpush.msra.mxu0 0.0
    %1624 = vmatpush.msra.mxu0 0.0
    %1625 = vmatpush.msra.mxu0 0.0
    %1626 = vmatpush.msra.mxu0 0.0
    %1627 = vmatpush.msra.mxu0 %v1606
    %1628 = vmatmul.f32.gmra.mxu0 %v1610
    %v1629 = vpop.f32.mrf.mxu0
    %v1630 = vadd.f32 0.0, %v1629
    %1631 = vdwg.mxu0
    %v1632 = vadd.f32 %v1458, %v1630
    %1633 = vrot.lane.b32.xlu0 %v1112, 104
    %v1634 = vpop.permute.xlu0 %1633
    %1635 = vrot.lane.b32.xlu0 %v1112, 72
    %v1636 = vpop.permute.xlu0 %1635
    %v1637 = vsel %vm1120, %v1634, 0
    %v1639 = vsel %vm1120, %v1636, 0
    %1641 = vmatpush.xpose.msra.mxu0 0.0
    %1642 = vmatpush.xpose.msra.mxu0 0.0
    %1643 = vmatpush.xpose.msra.mxu0 0.0
    %1644 = vmatpush.xpose.msra.mxu0 0.0
    %1645 = vmatpush.xpose.msra.mxu0 0.0
    %1646 = vmatpush.xpose.msra.mxu0 0.0
    %1647 = vmatpush.xpose.msra.mxu0 0.0
    %1648 = vmatpush.xpose.msra.mxu0 0.0
    %1649 = vmatpush.xpose.msra.mxu0 0.0
    %1650 = vmatpush.xpose.msra.mxu0 0.0
    %1651 = vmatpush.xpose.msra.mxu0 0.0
    %1652 = vmatpush.xpose.msra.mxu0 0.0
    %1653 = vmatpush.xpose.msra.mxu0 0.0
    %1654 = vmatpush.xpose.msra.mxu0 0.0
    %1655 = vmatpush.xpose.msra.mxu0 0.0
    %1656 = vmatpush.xpose.msra.mxu0 %v1639
    %1657 = vmatmul.f32.gmra.mxu0 %v1637
    %v1658 = vpop.f32.mrf.mxu0
    %v1659 = vadd.f32 0.0, %v1658
    %1660 = vdwg.mxu0
    %1661 = vrot.lane.b32.xlu0 %v1115, 104
    %v1662 = vpop.permute.xlu0 %1661
    %1663 = vrot.lane.b32.xlu0 %v1115, 72
    %v1664 = vpop.permute.xlu0 %1663
    %v1665 = vsel %vm1120, %v1662, 0
    %v1667 = vsel %vm1120, %v1664, 0
    %1669 = vmatpush.xpose.msra.mxu0 0.0
    %1670 = vmatpush.xpose.msra.mxu0 0.0
    %1671 = vmatpush.xpose.msra.mxu0 0.0
    %1672 = vmatpush.xpose.msra.mxu0 0.0
    %1673 = vmatpush.xpose.msra.mxu0 0.0
    %1674 = vmatpush.xpose.msra.mxu0 0.0
    %1675 = vmatpush.xpose.msra.mxu0 0.0
    %1676 = vmatpush.xpose.msra.mxu0 0.0
    %1677 = vmatpush.xpose.msra.mxu0 0.0
    %1678 = vmatpush.xpose.msra.mxu0 0.0
    %1679 = vmatpush.xpose.msra.mxu0 0.0
    %1680 = vmatpush.xpose.msra.mxu0 0.0
    %1681 = vmatpush.xpose.msra.mxu0 0.0
    %1682 = vmatpush.xpose.msra.mxu0 0.0
    %1683 = vmatpush.xpose.msra.mxu0 0.0
    %1684 = vmatpush.xpose.msra.mxu0 %v1667
    %1685 = vmatmul.f32.gmra.mxu0 %v1665
    %v1686 = vpop.f32.mrf.mxu0
    %v1687 = vadd.f32 0.0, %v1686
    %1688 = vdwg.mxu0
    %v1689 = vmul.f32 %v1659, 0.35355338
    %v1690 = vmul.f32 %v1687, 0.35355338
    %v1691 = vsel %vm1120, %v1689, -inf
    %1692 = vmax.xlane.f32.xlu0 %v1691
    %v1693 = vpop.xlane.xlu0 %1692
    %v1694 = vsel %vm1120, %v1690, -inf
    %1695 = vmax.xlane.f32.xlu0 %v1694
    %v1696 = vpop.xlane.xlu0 %1695
    %v1697 = vsub.f32 %v1689, %v1693
    %v1698 = vsub.f32 %v1690, %v1696
    %v1699 = vmul.f32 %v1697, 1.442695
    %v1700 = vpow.pop %v1699
    %v1701 = vmul.f32 %v1698, 1.442695
    %v1702 = vpow.pop %v1701
    %v1703 = vsel %vm1120, %v1700, 0.0
    %1704 = vadd.xlane.f32.xlu0 %v1703
    %v1705 = vpop.xlane.xlu0 %1704
    %v1706 = vsel %vm1120, %v1702, 0.0
    %1707 = vadd.xlane.f32.xlu0 %v1706
    %v1708 = vpop.xlane.xlu0 %1707
    %v1709 = vrcp.pop %v1705
    %v1710 = vrcp.pop %v1708
    %v1711 = vmul.f32 %v1700, %v1709
    %v1712 = vmul.f32 %v1702, %v1710
    %1713 = vrot.lane.b32.xlu0 %v1112, 40
    %v1714 = vpop.permute.xlu0 %1713
    %v1717 = vsel %vm1120, %v1711, 0
    %1719 = vmatpush.msra.mxu0 0.0
    %1720 = vmatpush.msra.mxu0 0.0
    %1721 = vmatpush.msra.mxu0 0.0
    %1722 = vmatpush.msra.mxu0 0.0
    %1723 = vmatpush.msra.mxu0 0.0
    %1724 = vmatpush.msra.mxu0 0.0
    %1725 = vmatpush.msra.mxu0 0.0
    %1726 = vmatpush.msra.mxu0 0.0
    %1727 = vmatpush.msra.mxu0 0.0
    %1728 = vmatpush.msra.mxu0 0.0
    %1729 = vmatpush.msra.mxu0 0.0
    %1730 = vmatpush.msra.mxu0 0.0
    %1731 = vmatpush.msra.mxu0 0.0
    %1732 = vmatpush.msra.mxu0 0.0
    %1733 = vmatpush.msra.mxu0 0.0
    %1734 = vmatpush.msra.mxu0 %v1714
    %1735 = vmatmul.f32.gmra.mxu0 %v1717
    %v1736 = vpop.f32.mrf.mxu0
    %v1737 = vadd.f32 0.0, %v1736
    %1738 = vdwg.mxu0
    %1739 = vrot.lane.b32.xlu0 %v1115, 40
    %v1740 = vpop.permute.xlu0 %1739
    %v1743 = vsel %vm1120, %v1712, 0
    %1745 = vmatpush.msra.mxu0 0.0
    %1746 = vmatpush.msra.mxu0 0.0
    %1747 = vmatpush.msra.mxu0 0.0
    %1748 = vmatpush.msra.mxu0 0.0
    %1749 = vmatpush.msra.mxu0 0.0
    %1750 = vmatpush.msra.mxu0 0.0
    %1751 = vmatpush.msra.mxu0 0.0
    %1752 = vmatpush.msra.mxu0 0.0
    %1753 = vmatpush.msra.mxu0 0.0
    %1754 = vmatpush.msra.mxu0 0.0
    %1755 = vmatpush.msra.mxu0 0.0
    %1756 = vmatpush.msra.mxu0 0.0
    %1757 = vmatpush.msra.mxu0 0.0
    %1758 = vmatpush.msra.mxu0 0.0
    %1759 = vmatpush.msra.mxu0 0.0
    %1760 = vmatpush.msra.mxu0 %v1740
    %1761 = vmatmul.f32.gmra.mxu0 %v1743
    %v1762 = vpop.f32.mrf.mxu0
    %v1763 = vadd.f32 0.0, %v1762
    %1764 = vdwg.mxu0
    %v1765 = vsel %vm1120, %v1737, 0.0
    %v1766 = vrot.slane %v1765, 4
    %v1767 = vadd.f32 %v1765, %v1766
    %v1768 = vrot.slane %v1767, 2
    %v1769 = vadd.f32 %v1767, %v1768
    %v1770 = vrot.slane %v1769, 1
    %v1771 = vadd.f32 %v1769, %v1770
    %v1772 = vsel %vm1120, %v1763, 0.0
    %v1773 = vrot.slane %v1772, 4
    %v1774 = vadd.f32 %v1772, %v1773
    %v1775 = vrot.slane %v1774, 2
    %v1776 = vadd.f32 %v1774, %v1775
    %v1777 = vrot.slane %v1776, 1
    %v1778 = vadd.f32 %v1776, %v1777
    %v1779 = vld [vmem:[%s9 + $0x18] sm:$0xff]
    %v1782 = vsel %vm206, %v1778, %v1771
    %v1783 = vsel %vm1120, %v1782, 0
    %1785 = vmatpush.msra.mxu0 0.0
    %1786 = vmatpush.msra.mxu0 0.0
    %1787 = vmatpush.msra.mxu0 0.0
    %1788 = vmatpush.msra.mxu0 0.0
    %1789 = vmatpush.msra.mxu0 0.0
    %1790 = vmatpush.msra.mxu0 0.0
    %1791 = vmatpush.msra.mxu0 0.0
    %1792 = vmatpush.msra.mxu0 0.0
    %1793 = vmatpush.msra.mxu0 0.0
    %1794 = vmatpush.msra.mxu0 0.0
    %1795 = vmatpush.msra.mxu0 0.0
    %1796 = vmatpush.msra.mxu0 0.0
    %1797 = vmatpush.msra.mxu0 0.0
    %1798 = vmatpush.msra.mxu0 0.0
    %1799 = vmatpush.msra.mxu0 0.0
    %1800 = vmatpush.msra.mxu0 %v1779
    %1801 = vmatmul.f32.gmra.mxu0 %v1783
    %v1802 = vpop.f32.mrf.mxu0
    %v1803 = vadd.f32 0.0, %v1802
    %1804 = vdwg.mxu0
    %v1805 = vadd.f32 %v1632, %v1803
    %v1806 = vld [vmem:[%s10] sm:$0x1]
    %v1807 = vmul.f32 %v1806, 8.0
    %v1809 = vperm.slane %v1807, 0
    %v1811 = vadd.f32 %v1805, %v1809
    %v1812 = vld [vmem:[%s11] sm:$0xff]
    %v1813 = vld [vmem:[%s11 + $0x8] sm:$0xff]
    %v1814 = vld [vmem:[%s11 + $0x10] sm:$0xff]
    %v1815 = vld [vmem:[%s11 + $0x18] sm:$0xff]
    %v1816 = vld [vmem:[%s12] sm:$0x1]
    %v1818 = vperm.slane %v1816, 0
    %v1821 = vsel %vm90, %v1811, 0
    %1823 = vmatpush.msra.mxu0 0.0
    %1824 = vmatpush.msra.mxu0 0.0
    %1825 = vmatpush.msra.mxu0 0.0
    %1826 = vmatpush.msra.mxu0 0.0
    %1827 = vmatpush.msra.mxu0 0.0
    %1828 = vmatpush.msra.mxu0 0.0
    %1829 = vmatpush.msra.mxu0 0.0
    %1830 = vmatpush.msra.mxu0 0.0
    %1831 = vmatpush.msra.mxu0 0.0
    %1832 = vmatpush.msra.mxu0 0.0
    %1833 = vmatpush.msra.mxu0 0.0
    %1834 = vmatpush.msra.mxu0 0.0
    %1835 = vmatpush.msra.mxu0 %v1815
    %1836 = vmatpush.msra.mxu0 %v1814
    %1837 = vmatpush.msra.mxu0 %v1813
    %1838 = vmatpush.msra.mxu0 %v1812
    %1839 = vmatmul.f32.gmra.mxu0 %v1821
    %v1840 = vpop.f32.mrf.mxu0
    %v1841 = vadd.f32 %v1818, %v1840
    %1842 = vdwg.mxu0
    %vm1843 = vcmask 74752
    %1844 = vst.msk [vmem:[#allocation3] sm:$0x3] %vm1843, %v1841
    %v1845 = vld [vmem:[%s4] sm:$0xff]
    %v1846 = vld [vmem:[%s4 + $0x8] sm:$0xff]
    %v1847 = vld [vmem:[%s6] sm:$0x1]
    %v1849 = vperm.slane %v1847, 0
    %1851 = vmatpush.msra.mxu0 0.0
    %1852 = vmatpush.msra.mxu0 0.0
    %1853 = vmatpush.msra.mxu0 0.0
    %1854 = vmatpush.msra.mxu0 0.0
    %1855 = vmatpush.msra.mxu0 0.0
    %1856 = vmatpush.msra.mxu0 0.0
    %1857 = vmatpush.msra.mxu0 0.0
    %1858 = vmatpush.msra.mxu0 0.0
    %1859 = vmatpush.msra.mxu0 0.0
    %1860 = vmatpush.msra.mxu0 0.0
    %1861 = vmatpush.msra.mxu0 0.0
    %1862 = vmatpush.msra.mxu0 0.0
    %1863 = vmatpush.msra.mxu0 0.0
    %1864 = vmatpush.msra.mxu0 0.0
    %1865 = vmatpush.msra.mxu0 %v1846
    %1866 = vmatpush.msra.mxu0 %v1845
    %1867 = vmatmul.f32.gmra.mxu0 %v58
    %v1868 = vpop.f32.mrf.mxu0
    %v1869 = vadd.f32 %v1849, %v1868
    %1870 = vmatmul.f32.gmra.mxu0 %v61
    %v1871 = vpop.f32.mrf.mxu0
    %v1872 = vadd.f32 %v1849, %v1871
    %1873 = vdwg.mxu0
    %v1874 = vld [vmem:[%s5] sm:$0xff]
    %v1875 = vld [vmem:[%s5 + $0x8] sm:$0xff]
    %v1876 = vld [vmem:[%s5 + $0x10] sm:$0xff]
    %v1877 = vld [vmem:[%s5 + $0x18] sm:$0xff]
    %v1878 = vrot.slane %v1065, 7
    %v1879 = vrot.slane %v1066, 6
    %v1880 = vsel %vm206, %v1879, %v1878
    %1881 = vrot.lane.b32.xlu0 %v1880, 64
    %v1882 = vpop.permute.xlu0 %1881
    %v1883 = vsel %vm90, %v1882, 0
    %1885 = vmatpush.msra.mxu0 0.0
    %1886 = vmatpush.msra.mxu0 0.0
    %1887 = vmatpush.msra.mxu0 0.0
    %1888 = vmatpush.msra.mxu0 0.0
    %1889 = vmatpush.msra.mxu0 0.0
    %1890 = vmatpush.msra.mxu0 0.0
    %1891 = vmatpush.msra.mxu0 0.0
    %1892 = vmatpush.msra.mxu0 0.0
    %1893 = vmatpush.msra.mxu0 0.0
    %1894 = vmatpush.msra.mxu0 0.0
    %1895 = vmatpush.msra.mxu0 0.0
    %1896 = vmatpush.msra.mxu0 0.0
    %1897 = vmatpush.msra.mxu0 %v1877
    %1898 = vmatpush.msra.mxu0 %v1876
    %1899 = vmatpush.msra.mxu0 %v1875
    %1900 = vmatpush.msra.mxu0 %v1874
    %1901 = vmatmul.f32.gmra.mxu0 %v1883
    %v1902 = vpop.f32.mrf.mxu0
    %v1903 = vadd.f32 0.0, %v1902
    %1904 = vdwg.mxu0
    %v1906 = vrot.slane %v1903, 1
    %v1909 = vadd.f32 %v1869, %v1903
    %v1910 = vadd.f32 %v1872, %v1906
    %v1911 = vxor.u32 %v1909, 2147483648
    %v1912 = vxor.u32 %v1910, 2147483648
    %v1913 = vmul.f32 %v1911, 1.442695
    %v1914 = vpow.pop %v1913
    %v1915 = vmul.f32 %v1912, 1.442695
    %v1916 = vpow.pop %v1915
    %v1917 = vadd.f32 %v1914, 1.0
    %v1918 = vadd.f32 %v1916, 1.0
    %v1919 = vrcp.pop %v1917
    %v1920 = vmul.f32 %v1917, %v1919
    %v1921 = vsub.f32 1.0, %v1920
    %v1922 = vmul.f32 %v1919, %v1921
    %v1923 = vadd.f32 %v1919, %v1922
    %vm1924 = vweird.f32 %v1917
    %vm1925 = vweird.f32 %v1919
    %vm1926 = vmor %vm1924, %vm1925
    %v1927 = vsel %vm1926, %v1919, %v1923
    %v1928 = vand.u32 2147483647, %v1917
    %vm1929 = vcmp.eq.f32.partialorder %v1928, 8.507059e+37
    %v1930 = vand.u32 %v1917, 2147483648
    %v1931 = vor.u32 1.1754944e-38, %v1930
    %v1932 = vsel %vm1929, %v1931, %v1927
    %v1933 = vmul.f32 1.0, %v1932
    %v1934 = vrcp.pop %v1918
    %v1935 = vmul.f32 %v1918, %v1934
    %v1936 = vsub.f32 1.0, %v1935
    %v1937 = vmul.f32 %v1934, %v1936
    %v1938 = vadd.f32 %v1934, %v1937
    %vm1939 = vweird.f32 %v1918
    %vm1940 = vweird.f32 %v1934
    %vm1941 = vmor %vm1939, %vm1940
    %v1942 = vsel %vm1941, %v1934, %v1938
    %v1943 = vand.u32 2147483647, %v1918
    %vm1944 = vcmp.eq.f32.partialorder %v1943, 8.507059e+37
    %v1945 = vand.u32 %v1918, 2147483648
    %v1946 = vor.u32 1.1754944e-38, %v1945
    %v1947 = vsel %vm1944, %v1946, %v1942
    %v1948 = vmul.f32 1.0, %v1947
    %v1949 = vtanh.pop %v1909
    %v1950 = vtanh.pop %v1910
    %v1953 = vrot.slane %v1053, 7
    %v1954 = vrot.slane %v1054, 7
    %v1957 = vmul.f32 %v1933, %v1953
    %v1958 = vmul.f32 %v1948, %v1954
    %1961 = vrot.lane.b32.xlu0 %v1949, 32
    %v1962 = vpop.permute.xlu0 %1961
    %1963 = vrot.lane.b32.xlu0 %v1950, 32
    %v1964 = vpop.permute.xlu0 %1963
    %v1967 = vmul.f32 %v1933, %v1962
    %v1968 = vmul.f32 %v1948, %v1964
    %1971 = vrot.lane.b32.xlu0 %v1967, 32
    %v1972 = vpop.permute.xlu0 %1971
    %1973 = vrot.lane.b32.xlu0 %v1968, 32
    %v1974 = vpop.permute.xlu0 %1973
    %v1977 = vadd.f32 %v1957, %v1972
    %v1978 = vadd.f32 %v1958, %v1974
    %v1979 = vtanh.pop %v1977
    %v1980 = vtanh.pop %v1978
    %1983 = vrot.lane.b32.xlu0 %v1979, 32
    %v1984 = vpop.permute.xlu0 %1983
    %1985 = vrot.lane.b32.xlu0 %v1980, 32
    %v1986 = vpop.permute.xlu0 %1985
    %v1989 = vmul.f32 %v1933, %v1984
    %v1990 = vmul.f32 %v1948, %v1986
    %1993 = vrot.lane.b32.xlu0 %v1989, 64
    %v1994 = vpop.permute.xlu0 %1993
    %1995 = vrot.lane.b32.xlu0 %v1990, 64
    %v1996 = vpop.permute.xlu0 %1995
    %1999 = vst.msk [vmem:[#allocation5] sm:$0x1] %vm202, %v1994
    %2000 = vst.msk [vmem:[#allocation5 + $0x8] sm:$0x1] %vm202, %v1996
    %v2001 = vrot.slane %v1990, 7
    %v2002 = vsel %vm206, %v2001, %v1989
    %2003 = vrot.lane.b32.xlu0 %v2002, 64
    %v2004 = vpop.permute.xlu0 %2003
    %v2005 = vsel %vm90, %v2004, 0
    %2007 = vmatpush.msra.mxu0 0.0
    %2008 = vmatpush.msra.mxu0 0.0
    %2009 = vmatpush.msra.mxu0 0.0
    %2010 = vmatpush.msra.mxu0 0.0
    %2011 = vmatpush.msra.mxu0 0.0
    %2012 = vmatpush.msra.mxu0 0.0
    %2013 = vmatpush.msra.mxu0 0.0
    %2014 = vmatpush.msra.mxu0 0.0
    %2015 = vmatpush.msra.mxu0 0.0
    %2016 = vmatpush.msra.mxu0 0.0
    %2017 = vmatpush.msra.mxu0 0.0
    %2018 = vmatpush.msra.mxu0 0.0
    %2019 = vmatpush.msra.mxu0 %v1877
    %2020 = vmatpush.msra.mxu0 %v1876
    %2021 = vmatpush.msra.mxu0 %v1875
    %2022 = vmatpush.msra.mxu0 %v1874
    %2023 = vmatmul.f32.gmra.mxu0 %v2005
    %v2024 = vpop.f32.mrf.mxu0
    %v2025 = vadd.f32 0.0, %v2024
    %2026 = vdwg.mxu0
    %v2028 = vrot.slane %v2025, 7
    %v2031 = vadd.f32 %v1869, %v2028
    %v2032 = vadd.f32 %v1872, %v2025
    %v2033 = vxor.u32 %v2031, 2147483648
    %v2034 = vxor.u32 %v2032, 2147483648
    %v2035 = vmul.f32 %v2033, 1.442695
    %v2036 = vpow.pop %v2035
    %v2037 = vmul.f32 %v2034, 1.442695
    %v2038 = vpow.pop %v2037
    %v2039 = vadd.f32 %v2036, 1.0
    %v2040 = vadd.f32 %v2038, 1.0
    %v2041 = vrcp.pop %v2039
    %v2042 = vmul.f32 %v2039, %v2041
    %v2043 = vsub.f32 1.0, %v2042
    %v2044 = vmul.f32 %v2041, %v2043
    %v2045 = vadd.f32 %v2041, %v2044
    %vm2046 = vweird.f32 %v2039
    %vm2047 = vweird.f32 %v2041
    %vm2048 = vmor %vm2046, %vm2047
    %v2049 = vsel %vm2048, %v2041, %v2045
    %v2050 = vand.u32 2147483647, %v2039
    %vm2051 = vcmp.eq.f32.partialorder %v2050, 8.507059e+37
    %v2052 = vand.u32 %v2039, 2147483648
    %v2053 = vor.u32 1.1754944e-38, %v2052
    %v2054 = vsel %vm2051, %v2053, %v2049
    %v2055 = vmul.f32 1.0, %v2054
    %v2056 = vrcp.pop %v2040
    %v2057 = vmul.f32 %v2040, %v2056
    %v2058 = vsub.f32 1.0, %v2057
    %v2059 = vmul.f32 %v2056, %v2058
    %v2060 = vadd.f32 %v2056, %v2059
    %vm2061 = vweird.f32 %v2040
    %vm2062 = vweird.f32 %v2056
    %vm2063 = vmor %vm2061, %vm2062
    %v2064 = vsel %vm2063, %v2056, %v2060
    %v2065 = vand.u32 2147483647, %v2040
    %vm2066 = vcmp.eq.f32.partialorder %v2065, 8.507059e+37
    %v2067 = vand.u32 %v2040, 2147483648
    %v2068 = vor.u32 1.1754944e-38, %v2067
    %v2069 = vsel %vm2066, %v2068, %v2064
    %v2070 = vmul.f32 1.0, %v2069
    %v2071 = vtanh.pop %v2031
    %v2072 = vtanh.pop %v2032
    %v2075 = vrot.slane %v1977, 7
    %v2076 = vrot.slane %v1978, 7
    %v2079 = vmul.f32 %v2055, %v2075
    %v2080 = vmul.f32 %v2070, %v2076
    %2083 = vrot.lane.b32.xlu0 %v2071, 32
    %v2084 = vpop.permute.xlu0 %2083
    %2085 = vrot.lane.b32.xlu0 %v2072, 32
    %v2086 = vpop.permute.xlu0 %2085
    %v2089 = vmul.f32 %v2055, %v2084
    %v2090 = vmul.f32 %v2070, %v2086
    %2093 = vrot.lane.b32.xlu0 %v2089, 32
    %v2094 = vpop.permute.xlu0 %2093
    %2095 = vrot.lane.b32.xlu0 %v2090, 32
    %v2096 = vpop.permute.xlu0 %2095
    %v2099 = vadd.f32 %v2079, %v2094
    %v2100 = vadd.f32 %v2080, %v2096
    %v2101 = vtanh.pop %v2099
    %v2102 = vtanh.pop %v2100
    %2105 = vrot.lane.b32.xlu0 %v2101, 32
    %v2106 = vpop.permute.xlu0 %2105
    %2107 = vrot.lane.b32.xlu0 %v2102, 32
    %v2108 = vpop.permute.xlu0 %2107
    %v2111 = vmul.f32 %v2055, %v2106
    %v2112 = vmul.f32 %v2070, %v2108
    %2115 = vrot.lane.b32.xlu0 %v2111, 64
    %v2116 = vpop.permute.xlu0 %2115
    %2117 = vrot.lane.b32.xlu0 %v2112, 64
    %v2118 = vpop.permute.xlu0 %2117
    %2121 = vst.msk [vmem:[#allocation5] sm:$0x2] %vm326, %v2116
    %2122 = vst.msk [vmem:[#allocation5 + $0x8] sm:$0x2] %vm326, %v2118
    %v2123 = vrot.slane %v2111, 1
    %v2124 = vsel %vm206, %v2112, %v2123
    %2125 = vrot.lane.b32.xlu0 %v2124, 64
    %v2126 = vpop.permute.xlu0 %2125
    %v2127 = vsel %vm90, %v2126, 0
    %2129 = vmatpush.msra.mxu0 0.0
    %2130 = vmatpush.msra.mxu0 0.0
    %2131 = vmatpush.msra.mxu0 0.0
    %2132 = vmatpush.msra.mxu0 0.0
    %2133 = vmatpush.msra.mxu0 0.0
    %2134 = vmatpush.msra.mxu0 0.0
    %2135 = vmatpush.msra.mxu0 0.0
    %2136 = vmatpush.msra.mxu0 0.0
    %2137 = vmatpush.msra.mxu0 0.0
    %2138 = vmatpush.msra.mxu0 0.0
    %2139 = vmatpush.msra.mxu0 0.0
    %2140 = vmatpush.msra.mxu0 0.0
    %2141 = vmatpush.msra.mxu0 %v1877
    %2142 = vmatpush.msra.mxu0 %v1876
    %2143 = vmatpush.msra.mxu0 %v1875
    %2144 = vmatpush.msra.mxu0 %v1874
    %2145 = vmatmul.f32.gmra.mxu0 %v2127
    %v2146 = vpop.f32.mrf.mxu0
    %v2147 = vadd.f32 0.0, %v2146
    %2148 = vdwg.mxu0
    %v2150 = vrot.slane %v2147, 6
    %v2151 = vrot.slane %v2147, 7
    %v2154 = vadd.f32 %v1869, %v2150
    %v2155 = vadd.f32 %v1872, %v2151
    %v2156 = vxor.u32 %v2154, 2147483648
    %v2157 = vxor.u32 %v2155, 2147483648
    %v2158 = vmul.f32 %v2156, 1.442695
    %v2159 = vpow.pop %v2158
    %v2160 = vmul.f32 %v2157, 1.442695
    %v2161 = vpow.pop %v2160
    %v2162 = vadd.f32 %v2159, 1.0
    %v2163 = vadd.f32 %v2161, 1.0
    %v2164 = vrcp.pop %v2162
    %v2165 = vmul.f32 %v2162, %v2164
    %v2166 = vsub.f32 1.0, %v2165
    %v2167 = vmul.f32 %v2164, %v2166
    %v2168 = vadd.f32 %v2164, %v2167
    %vm2169 = vweird.f32 %v2162
    %vm2170 = vweird.f32 %v2164
    %vm2171 = vmor %vm2169, %vm2170
    %v2172 = vsel %vm2171, %v2164, %v2168
    %v2173 = vand.u32 2147483647, %v2162
    %vm2174 = vcmp.eq.f32.partialorder %v2173, 8.507059e+37
    %v2175 = vand.u32 %v2162, 2147483648
    %v2176 = vor.u32 1.1754944e-38, %v2175
    %v2177 = vsel %vm2174, %v2176, %v2172
    %v2178 = vmul.f32 1.0, %v2177
    %v2179 = vrcp.pop %v2163
    %v2180 = vmul.f32 %v2163, %v2179
    %v2181 = vsub.f32 1.0, %v2180
    %v2182 = vmul.f32 %v2179, %v2181
    %v2183 = vadd.f32 %v2179, %v2182
    %vm2184 = vweird.f32 %v2163
    %vm2185 = vweird.f32 %v2179
    %vm2186 = vmor %vm2184, %vm2185
    %v2187 = vsel %vm2186, %v2179, %v2183
    %v2188 = vand.u32 2147483647, %v2163
    %vm2189 = vcmp.eq.f32.partialorder %v2188, 8.507059e+37
    %v2190 = vand.u32 %v2163, 2147483648
    %v2191 = vor.u32 1.1754944e-38, %v2190
    %v2192 = vsel %vm2189, %v2191, %v2187
    %v2193 = vmul.f32 1.0, %v2192
    %v2194 = vtanh.pop %v2154
    %v2195 = vtanh.pop %v2155
    %v2198 = vrot.slane %v2099, 7
    %v2199 = vrot.slane %v2100, 7
    %v2202 = vmul.f32 %v2178, %v2198
    %v2203 = vmul.f32 %v2193, %v2199
    %2206 = vrot.lane.b32.xlu0 %v2194, 32
    %v2207 = vpop.permute.xlu0 %2206
    %2208 = vrot.lane.b32.xlu0 %v2195, 32
    %v2209 = vpop.permute.xlu0 %2208
    %v2212 = vmul.f32 %v2178, %v2207
    %v2213 = vmul.f32 %v2193, %v2209
    %2216 = vrot.lane.b32.xlu0 %v2212, 32
    %v2217 = vpop.permute.xlu0 %2216
    %2218 = vrot.lane.b32.xlu0 %v2213, 32
    %v2219 = vpop.permute.xlu0 %2218
    %v2222 = vadd.f32 %v2202, %v2217
    %v2223 = vadd.f32 %v2203, %v2219
    %v2224 = vtanh.pop %v2222
    %v2225 = vtanh.pop %v2223
    %2228 = vrot.lane.b32.xlu0 %v2224, 32
    %v2229 = vpop.permute.xlu0 %2228
    %2230 = vrot.lane.b32.xlu0 %v2225, 32
    %v2231 = vpop.permute.xlu0 %2230
    %v2234 = vmul.f32 %v2178, %v2229
    %v2235 = vmul.f32 %v2193, %v2231
    %2238 = vrot.lane.b32.xlu0 %v2234, 64
    %v2239 = vpop.permute.xlu0 %2238
    %2240 = vrot.lane.b32.xlu0 %v2235, 64
    %v2241 = vpop.permute.xlu0 %2240
    %2244 = vst.msk [vmem:[#allocation5] sm:$0x4] %vm450, %v2239
    %2245 = vst.msk [vmem:[#allocation5 + $0x8] sm:$0x4] %vm450, %v2241
    %v2246 = vrot.slane %v2234, 2
    %v2247 = vrot.slane %v2235, 1
    %v2248 = vsel %vm206, %v2247, %v2246
    %2249 = vrot.lane.b32.xlu0 %v2248, 64
    %v2250 = vpop.permute.xlu0 %2249
    %v2251 = vsel %vm90, %v2250, 0
    %2253 = vmatpush.msra.mxu0 0.0
    %2254 = vmatpush.msra.mxu0 0.0
    %2255 = vmatpush.msra.mxu0 0.0
    %2256 = vmatpush.msra.mxu0 0.0
    %2257 = vmatpush.msra.mxu0 0.0
    %2258 = vmatpush.msra.mxu0 0.0
    %2259 = vmatpush.msra.mxu0 0.0
    %2260 = vmatpush.msra.mxu0 0.0
    %2261 = vmatpush.msra.mxu0 0.0
    %2262 = vmatpush.msra.mxu0 0.0
    %2263 = vmatpush.msra.mxu0 0.0
    %2264 = vmatpush.msra.mxu0 0.0
    %2265 = vmatpush.msra.mxu0 %v1877
    %2266 = vmatpush.msra.mxu0 %v1876
    %2267 = vmatpush.msra.mxu0 %v1875
    %2268 = vmatpush.msra.mxu0 %v1874
    %2269 = vmatmul.f32.gmra.mxu0 %v2251
    %v2270 = vpop.f32.mrf.mxu0
    %v2271 = vadd.f32 0.0, %v2270
    %2272 = vdwg.mxu0
    %v2274 = vrot.slane %v2271, 5
    %v2275 = vrot.slane %v2271, 6
    %v2278 = vadd.f32 %v1869, %v2274
    %v2279 = vadd.f32 %v1872, %v2275
    %v2280 = vxor.u32 %v2278, 2147483648
    %v2281 = vxor.u32 %v2279, 2147483648
    %v2282 = vmul.f32 %v2280, 1.442695
    %v2283 = vpow.pop %v2282
    %v2284 = vmul.f32 %v2281, 1.442695
    %v2285 = vpow.pop %v2284
    %v2286 = vadd.f32 %v2283, 1.0
    %v2287 = vadd.f32 %v2285, 1.0
    %v2288 = vrcp.pop %v2286
    %v2289 = vmul.f32 %v2286, %v2288
    %v2290 = vsub.f32 1.0, %v2289
    %v2291 = vmul.f32 %v2288, %v2290
    %v2292 = vadd.f32 %v2288, %v2291
    %vm2293 = vweird.f32 %v2286
    %vm2294 = vweird.f32 %v2288
    %vm2295 = vmor %vm2293, %vm2294
    %v2296 = vsel %vm2295, %v2288, %v2292
    %v2297 = vand.u32 2147483647, %v2286
    %vm2298 = vcmp.eq.f32.partialorder %v2297, 8.507059e+37
    %v2299 = vand.u32 %v2286, 2147483648
    %v2300 = vor.u32 1.1754944e-38, %v2299
    %v2301 = vsel %vm2298, %v2300, %v2296
    %v2302 = vmul.f32 1.0, %v2301
    %v2303 = vrcp.pop %v2287
    %v2304 = vmul.f32 %v2287, %v2303
    %v2305 = vsub.f32 1.0, %v2304
    %v2306 = vmul.f32 %v2303, %v2305
    %v2307 = vadd.f32 %v2303, %v2306
    %vm2308 = vweird.f32 %v2287
    %vm2309 = vweird.f32 %v2303
    %vm2310 = vmor %vm2308, %vm2309
    %v2311 = vsel %vm2310, %v2303, %v2307
    %v2312 = vand.u32 2147483647, %v2287
    %vm2313 = vcmp.eq.f32.partialorder %v2312, 8.507059e+37
    %v2314 = vand.u32 %v2287, 2147483648
    %v2315 = vor.u32 1.1754944e-38, %v2314
    %v2316 = vsel %vm2313, %v2315, %v2311
    %v2317 = vmul.f32 1.0, %v2316
    %v2318 = vtanh.pop %v2278
    %v2319 = vtanh.pop %v2279
    %v2322 = vrot.slane %v2222, 7
    %v2323 = vrot.slane %v2223, 7
    %v2326 = vmul.f32 %v2302, %v2322
    %v2327 = vmul.f32 %v2317, %v2323
    %2330 = vrot.lane.b32.xlu0 %v2318, 32
    %v2331 = vpop.permute.xlu0 %2330
    %2332 = vrot.lane.b32.xlu0 %v2319, 32
    %v2333 = vpop.permute.xlu0 %2332
    %v2336 = vmul.f32 %v2302, %v2331
    %v2337 = vmul.f32 %v2317, %v2333
    %2340 = vrot.lane.b32.xlu0 %v2336, 32
    %v2341 = vpop.permute.xlu0 %2340
    %2342 = vrot.lane.b32.xlu0 %v2337, 32
    %v2343 = vpop.permute.xlu0 %2342
    %v2346 = vadd.f32 %v2326, %v2341
    %v2347 = vadd.f32 %v2327, %v2343
    %v2348 = vtanh.pop %v2346
    %v2349 = vtanh.pop %v2347
    %2352 = vrot.lane.b32.xlu0 %v2348, 32
    %v2353 = vpop.permute.xlu0 %2352
    %2354 = vrot.lane.b32.xlu0 %v2349, 32
    %v2355 = vpop.permute.xlu0 %2354
    %v2358 = vmul.f32 %v2302, %v2353
    %v2359 = vmul.f32 %v2317, %v2355
    %2362 = vrot.lane.b32.xlu0 %v2358, 64
    %v2363 = vpop.permute.xlu0 %2362
    %2364 = vrot.lane.b32.xlu0 %v2359, 64
    %v2365 = vpop.permute.xlu0 %2364
    %2368 = vst.msk [vmem:[#allocation5] sm:$0x8] %vm575, %v2363
    %2369 = vst.msk [vmem:[#allocation5 + $0x8] sm:$0x8] %vm575, %v2365
    %v2370 = vrot.slane %v2358, 3
    %v2371 = vrot.slane %v2359, 2
    %v2372 = vsel %vm206, %v2371, %v2370
    %2373 = vrot.lane.b32.xlu0 %v2372, 64
    %v2374 = vpop.permute.xlu0 %2373
    %v2375 = vsel %vm90, %v2374, 0
    %2377 = vmatpush.msra.mxu0 0.0
    %2378 = vmatpush.msra.mxu0 0.0
    %2379 = vmatpush.msra.mxu0 0.0
    %2380 = vmatpush.msra.mxu0 0.0
    %2381 = vmatpush.msra.mxu0 0.0
    %2382 = vmatpush.msra.mxu0 0.0
    %2383 = vmatpush.msra.mxu0 0.0
    %2384 = vmatpush.msra.mxu0 0.0
    %2385 = vmatpush.msra.mxu0 0.0
    %2386 = vmatpush.msra.mxu0 0.0
    %2387 = vmatpush.msra.mxu0 0.0
    %2388 = vmatpush.msra.mxu0 0.0
    %2389 = vmatpush.msra.mxu0 %v1877
    %2390 = vmatpush.msra.mxu0 %v1876
    %2391 = vmatpush.msra.mxu0 %v1875
    %2392 = vmatpush.msra.mxu0 %v1874
    %2393 = vmatmul.f32.gmra.mxu0 %v2375
    %v2394 = vpop.f32.mrf.mxu0
    %v2395 = vadd.f32 0.0, %v2394
    %2396 = vdwg.mxu0
    %v2398 = vrot.slane %v2395, 4
    %v2399 = vrot.slane %v2395, 5
    %v2402 = vadd.f32 %v1869, %v2398
    %v2403 = vadd.f32 %v1872, %v2399
    %v2404 = vxor.u32 %v2402, 2147483648
    %v2405 = vxor.u32 %v2403, 2147483648
    %v2406 = vmul.f32 %v2404, 1.442695
    %v2407 = vpow.pop %v2406
    %v2408 = vmul.f32 %v2405, 1.442695
    %v2409 = vpow.pop %v2408
    %v2410 = vadd.f32 %v2407, 1.0
    %v2411 = vadd.f32 %v2409, 1.0
    %v2412 = vrcp.pop %v2410
    %v2413 = vmul.f32 %v2410, %v2412
    %v2414 = vsub.f32 1.0, %v2413
    %v2415 = vmul.f32 %v2412, %v2414
    %v2416 = vadd.f32 %v2412, %v2415
    %vm2417 = vweird.f32 %v2410
    %vm2418 = vweird.f32 %v2412
    %vm2419 = vmor %vm2417, %vm2418
    %v2420 = vsel %vm2419, %v2412, %v2416
    %v2421 = vand.u32 2147483647, %v2410
    %vm2422 = vcmp.eq.f32.partialorder %v2421, 8.507059e+37
    %v2423 = vand.u32 %v2410, 2147483648
    %v2424 = vor.u32 1.1754944e-38, %v2423
    %v2425 = vsel %vm2422, %v2424, %v2420
    %v2426 = vmul.f32 1.0, %v2425
    %v2427 = vrcp.pop %v2411
    %v2428 = vmul.f32 %v2411, %v2427
    %v2429 = vsub.f32 1.0, %v2428
    %v2430 = vmul.f32 %v2427, %v2429
    %v2431 = vadd.f32 %v2427, %v2430
    %vm2432 = vweird.f32 %v2411
    %vm2433 = vweird.f32 %v2427
    %vm2434 = vmor %vm2432, %vm2433
    %v2435 = vsel %vm2434, %v2427, %v2431
    %v2436 = vand.u32 2147483647, %v2411
    %vm2437 = vcmp.eq.f32.partialorder %v2436, 8.507059e+37
    %v2438 = vand.u32 %v2411, 2147483648
    %v2439 = vor.u32 1.1754944e-38, %v2438
    %v2440 = vsel %vm2437, %v2439, %v2435
    %v2441 = vmul.f32 1.0, %v2440
    %v2442 = vtanh.pop %v2402
    %v2443 = vtanh.pop %v2403
    %v2446 = vrot.slane %v2346, 7
    %v2447 = vrot.slane %v2347, 7
    %v2450 = vmul.f32 %v2426, %v2446
    %v2451 = vmul.f32 %v2441, %v2447
    %2454 = vrot.lane.b32.xlu0 %v2442, 32
    %v2455 = vpop.permute.xlu0 %2454
    %2456 = vrot.lane.b32.xlu0 %v2443, 32
    %v2457 = vpop.permute.xlu0 %2456
    %v2460 = vmul.f32 %v2426, %v2455
    %v2461 = vmul.f32 %v2441, %v2457
    %2464 = vrot.lane.b32.xlu0 %v2460, 32
    %v2465 = vpop.permute.xlu0 %2464
    %2466 = vrot.lane.b32.xlu0 %v2461, 32
    %v2467 = vpop.permute.xlu0 %2466
    %v2470 = vadd.f32 %v2450, %v2465
    %v2471 = vadd.f32 %v2451, %v2467
    %v2472 = vtanh.pop %v2470
    %v2473 = vtanh.pop %v2471
    %2476 = vrot.lane.b32.xlu0 %v2472, 32
    %v2477 = vpop.permute.xlu0 %2476
    %2478 = vrot.lane.b32.xlu0 %v2473, 32
    %v2479 = vpop.permute.xlu0 %2478
    %v2482 = vmul.f32 %v2426, %v2477
    %v2483 = vmul.f32 %v2441, %v2479
    %2486 = vrot.lane.b32.xlu0 %v2482, 64
    %v2487 = vpop.permute.xlu0 %2486
    %2488 = vrot.lane.b32.xlu0 %v2483, 64
    %v2489 = vpop.permute.xlu0 %2488
    %2492 = vst.msk [vmem:[#allocation5] sm:$0x10] %vm700, %v2487
    %2493 = vst.msk [vmem:[#allocation5 + $0x8] sm:$0x10] %vm700, %v2489
    %v2494 = vrot.slane %v2482, 4
    %v2495 = vrot.slane %v2483, 3
    %v2496 = vsel %vm206, %v2495, %v2494
    %2497 = vrot.lane.b32.xlu0 %v2496, 64
    %v2498 = vpop.permute.xlu0 %2497
    %v2499 = vsel %vm90, %v2498, 0
    %2501 = vmatpush.msra.mxu0 0.0
    %2502 = vmatpush.msra.mxu0 0.0
    %2503 = vmatpush.msra.mxu0 0.0
    %2504 = vmatpush.msra.mxu0 0.0
    %2505 = vmatpush.msra.mxu0 0.0
    %2506 = vmatpush.msra.mxu0 0.0
    %2507 = vmatpush.msra.mxu0 0.0
    %2508 = vmatpush.msra.mxu0 0.0
    %2509 = vmatpush.msra.mxu0 0.0
    %2510 = vmatpush.msra.mxu0 0.0
    %2511 = vmatpush.msra.mxu0 0.0
    %2512 = vmatpush.msra.mxu0 0.0
    %2513 = vmatpush.msra.mxu0 %v1877
    %2514 = vmatpush.msra.mxu0 %v1876
    %2515 = vmatpush.msra.mxu0 %v1875
    %2516 = vmatpush.msra.mxu0 %v1874
    %2517 = vmatmul.f32.gmra.mxu0 %v2499
    %v2518 = vpop.f32.mrf.mxu0
    %v2519 = vadd.f32 0.0, %v2518
    %2520 = vdwg.mxu0
    %v2522 = vrot.slane %v2519, 3
    %v2523 = vrot.slane %v2519, 4
    %v2526 = vadd.f32 %v1869, %v2522
    %v2527 = vadd.f32 %v1872, %v2523
    %v2528 = vxor.u32 %v2526, 2147483648
    %v2529 = vxor.u32 %v2527, 2147483648
    %v2530 = vmul.f32 %v2528, 1.442695
    %v2531 = vpow.pop %v2530
    %v2532 = vmul.f32 %v2529, 1.442695
    %v2533 = vpow.pop %v2532
    %v2534 = vadd.f32 %v2531, 1.0
    %v2535 = vadd.f32 %v2533, 1.0
    %v2536 = vrcp.pop %v2534
    %v2537 = vmul.f32 %v2534, %v2536
    %v2538 = vsub.f32 1.0, %v2537
    %v2539 = vmul.f32 %v2536, %v2538
    %v2540 = vadd.f32 %v2536, %v2539
    %vm2541 = vweird.f32 %v2534
    %vm2542 = vweird.f32 %v2536
    %vm2543 = vmor %vm2541, %vm2542
    %v2544 = vsel %vm2543, %v2536, %v2540
    %v2545 = vand.u32 2147483647, %v2534
    %vm2546 = vcmp.eq.f32.partialorder %v2545, 8.507059e+37
    %v2547 = vand.u32 %v2534, 2147483648
    %v2548 = vor.u32 1.1754944e-38, %v2547
    %v2549 = vsel %vm2546, %v2548, %v2544
    %v2550 = vmul.f32 1.0, %v2549
    %v2551 = vrcp.pop %v2535
    %v2552 = vmul.f32 %v2535, %v2551
    %v2553 = vsub.f32 1.0, %v2552
    %v2554 = vmul.f32 %v2551, %v2553
    %v2555 = vadd.f32 %v2551, %v2554
    %vm2556 = vweird.f32 %v2535
    %vm2557 = vweird.f32 %v2551
    %vm2558 = vmor %vm2556, %vm2557
    %v2559 = vsel %vm2558, %v2551, %v2555
    %v2560 = vand.u32 2147483647, %v2535
    %vm2561 = vcmp.eq.f32.partialorder %v2560, 8.507059e+37
    %v2562 = vand.u32 %v2535, 2147483648
    %v2563 = vor.u32 1.1754944e-38, %v2562
    %v2564 = vsel %vm2561, %v2563, %v2559
    %v2565 = vmul.f32 1.0, %v2564
    %v2566 = vtanh.pop %v2526
    %v2567 = vtanh.pop %v2527
    %v2570 = vrot.slane %v2470, 7
    %v2571 = vrot.slane %v2471, 7
    %v2574 = vmul.f32 %v2550, %v2570
    %v2575 = vmul.f32 %v2565, %v2571
    %2578 = vrot.lane.b32.xlu0 %v2566, 32
    %v2579 = vpop.permute.xlu0 %2578
    %2580 = vrot.lane.b32.xlu0 %v2567, 32
    %v2581 = vpop.permute.xlu0 %2580
    %v2584 = vmul.f32 %v2550, %v2579
    %v2585 = vmul.f32 %v2565, %v2581
    %2588 = vrot.lane.b32.xlu0 %v2584, 32
    %v2589 = vpop.permute.xlu0 %2588
    %2590 = vrot.lane.b32.xlu0 %v2585, 32
    %v2591 = vpop.permute.xlu0 %2590
    %v2594 = vadd.f32 %v2574, %v2589
    %v2595 = vadd.f32 %v2575, %v2591
    %v2596 = vtanh.pop %v2594
    %v2597 = vtanh.pop %v2595
    %2600 = vrot.lane.b32.xlu0 %v2596, 32
    %v2601 = vpop.permute.xlu0 %2600
    %2602 = vrot.lane.b32.xlu0 %v2597, 32
    %v2603 = vpop.permute.xlu0 %2602
    %v2606 = vmul.f32 %v2550, %v2601
    %v2607 = vmul.f32 %v2565, %v2603
    %2610 = vrot.lane.b32.xlu0 %v2606, 64
    %v2611 = vpop.permute.xlu0 %2610
    %2612 = vrot.lane.b32.xlu0 %v2607, 64
    %v2613 = vpop.permute.xlu0 %2612
    %2616 = vst.msk [vmem:[#allocation5] sm:$0x20] %vm825, %v2611
    %2617 = vst.msk [vmem:[#allocation5 + $0x8] sm:$0x20] %vm825, %v2613
    %v2618 = vrot.slane %v2606, 5
    %v2619 = vrot.slane %v2607, 4
    %v2620 = vsel %vm206, %v2619, %v2618
    %2621 = vrot.lane.b32.xlu0 %v2620, 64
    %v2622 = vpop.permute.xlu0 %2621
    %v2623 = vsel %vm90, %v2622, 0
    %2625 = vmatpush.msra.mxu0 0.0
    %2626 = vmatpush.msra.mxu0 0.0
    %2627 = vmatpush.msra.mxu0 0.0
    %2628 = vmatpush.msra.mxu0 0.0
    %2629 = vmatpush.msra.mxu0 0.0
    %2630 = vmatpush.msra.mxu0 0.0
    %2631 = vmatpush.msra.mxu0 0.0
    %2632 = vmatpush.msra.mxu0 0.0
    %2633 = vmatpush.msra.mxu0 0.0
    %2634 = vmatpush.msra.mxu0 0.0
    %2635 = vmatpush.msra.mxu0 0.0
    %2636 = vmatpush.msra.mxu0 0.0
    %2637 = vmatpush.msra.mxu0 %v1877
    %2638 = vmatpush.msra.mxu0 %v1876
    %2639 = vmatpush.msra.mxu0 %v1875
    %2640 = vmatpush.msra.mxu0 %v1874
    %2641 = vmatmul.f32.gmra.mxu0 %v2623
    %v2642 = vpop.f32.mrf.mxu0
    %v2643 = vadd.f32 0.0, %v2642
    %2644 = vdwg.mxu0
    %v2646 = vrot.slane %v2643, 2
    %v2647 = vrot.slane %v2643, 3
    %v2650 = vadd.f32 %v1869, %v2646
    %v2651 = vadd.f32 %v1872, %v2647
    %v2652 = vxor.u32 %v2650, 2147483648
    %v2653 = vxor.u32 %v2651, 2147483648
    %v2654 = vmul.f32 %v2652, 1.442695
    %v2655 = vpow.pop %v2654
    %v2656 = vmul.f32 %v2653, 1.442695
    %v2657 = vpow.pop %v2656
    %v2658 = vadd.f32 %v2655, 1.0
    %v2659 = vadd.f32 %v2657, 1.0
    %v2660 = vrcp.pop %v2658
    %v2661 = vmul.f32 %v2658, %v2660
    %v2662 = vsub.f32 1.0, %v2661
    %v2663 = vmul.f32 %v2660, %v2662
    %v2664 = vadd.f32 %v2660, %v2663
    %vm2665 = vweird.f32 %v2658
    %vm2666 = vweird.f32 %v2660
    %vm2667 = vmor %vm2665, %vm2666
    %v2668 = vsel %vm2667, %v2660, %v2664
    %v2669 = vand.u32 2147483647, %v2658
    %vm2670 = vcmp.eq.f32.partialorder %v2669, 8.507059e+37
    %v2671 = vand.u32 %v2658, 2147483648
    %v2672 = vor.u32 1.1754944e-38, %v2671
    %v2673 = vsel %vm2670, %v2672, %v2668
    %v2674 = vmul.f32 1.0, %v2673
    %v2675 = vrcp.pop %v2659
    %v2676 = vmul.f32 %v2659, %v2675
    %v2677 = vsub.f32 1.0, %v2676
    %v2678 = vmul.f32 %v2675, %v2677
    %v2679 = vadd.f32 %v2675, %v2678
    %vm2680 = vweird.f32 %v2659
    %vm2681 = vweird.f32 %v2675
    %vm2682 = vmor %vm2680, %vm2681
    %v2683 = vsel %vm2682, %v2675, %v2679
    %v2684 = vand.u32 2147483647, %v2659
    %vm2685 = vcmp.eq.f32.partialorder %v2684, 8.507059e+37
    %v2686 = vand.u32 %v2659, 2147483648
    %v2687 = vor.u32 1.1754944e-38, %v2686
    %v2688 = vsel %vm2685, %v2687, %v2683
    %v2689 = vmul.f32 1.0, %v2688
    %v2690 = vtanh.pop %v2650
    %v2691 = vtanh.pop %v2651
    %v2694 = vrot.slane %v2594, 7
    %v2695 = vrot.slane %v2595, 7
    %v2698 = vmul.f32 %v2674, %v2694
    %v2699 = vmul.f32 %v2689, %v2695
    %2702 = vrot.lane.b32.xlu0 %v2690, 32
    %v2703 = vpop.permute.xlu0 %2702
    %2704 = vrot.lane.b32.xlu0 %v2691, 32
    %v2705 = vpop.permute.xlu0 %2704
    %v2708 = vmul.f32 %v2674, %v2703
    %v2709 = vmul.f32 %v2689, %v2705
    %2712 = vrot.lane.b32.xlu0 %v2708, 32
    %v2713 = vpop.permute.xlu0 %2712
    %2714 = vrot.lane.b32.xlu0 %v2709, 32
    %v2715 = vpop.permute.xlu0 %2714
    %v2718 = vadd.f32 %v2698, %v2713
    %v2719 = vadd.f32 %v2699, %v2715
    %v2720 = vtanh.pop %v2718
    %v2721 = vtanh.pop %v2719
    %2724 = vrot.lane.b32.xlu0 %v2720, 32
    %v2725 = vpop.permute.xlu0 %2724
    %2726 = vrot.lane.b32.xlu0 %v2721, 32
    %v2727 = vpop.permute.xlu0 %2726
    %v2730 = vmul.f32 %v2674, %v2725
    %v2731 = vmul.f32 %v2689, %v2727
    %2734 = vrot.lane.b32.xlu0 %v2730, 64
    %v2735 = vpop.permute.xlu0 %2734
    %2736 = vrot.lane.b32.xlu0 %v2731, 64
    %v2737 = vpop.permute.xlu0 %2736
    %2740 = vst.msk [vmem:[#allocation5] sm:$0x40] %vm950, %v2735
    %2741 = vst.msk [vmem:[#allocation5 + $0x8] sm:$0x40] %vm950, %v2737
    %v2742 = vrot.slane %v2730, 6
    %v2743 = vrot.slane %v2731, 5
    %v2744 = vsel %vm206, %v2743, %v2742
    %2745 = vrot.lane.b32.xlu0 %v2744, 64
    %v2746 = vpop.permute.xlu0 %2745
    %v2747 = vsel %vm90, %v2746, 0
    %2749 = vmatpush.msra.mxu0 0.0
    %2750 = vmatpush.msra.mxu0 0.0
    %2751 = vmatpush.msra.mxu0 0.0
    %2752 = vmatpush.msra.mxu0 0.0
    %2753 = vmatpush.msra.mxu0 0.0
    %2754 = vmatpush.msra.mxu0 0.0
    %2755 = vmatpush.msra.mxu0 0.0
    %2756 = vmatpush.msra.mxu0 0.0
    %2757 = vmatpush.msra.mxu0 0.0
    %2758 = vmatpush.msra.mxu0 0.0
    %2759 = vmatpush.msra.mxu0 0.0
    %2760 = vmatpush.msra.mxu0 0.0
    %2761 = vmatpush.msra.mxu0 %v1877
    %2762 = vmatpush.msra.mxu0 %v1876
    %2763 = vmatpush.msra.mxu0 %v1875
    %2764 = vmatpush.msra.mxu0 %v1874
    %2765 = vmatmul.f32.gmra.mxu0 %v2747
    %v2766 = vpop.f32.mrf.mxu0
    %v2767 = vadd.f32 0.0, %v2766
    %2768 = vdwg.mxu0
    %v2770 = vrot.slane %v2767, 1
    %v2771 = vrot.slane %v2767, 2
    %v2774 = vadd.f32 %v1869, %v2770
    %v2775 = vadd.f32 %v1872, %v2771
    %v2776 = vxor.u32 %v2774, 2147483648
    %v2777 = vxor.u32 %v2775, 2147483648
    %v2778 = vmul.f32 %v2776, 1.442695
    %v2779 = vpow.pop %v2778
    %v2780 = vmul.f32 %v2777, 1.442695
    %v2781 = vpow.pop %v2780
    %v2782 = vadd.f32 %v2779, 1.0
    %v2783 = vadd.f32 %v2781, 1.0
    %v2784 = vrcp.pop %v2782
    %v2785 = vmul.f32 %v2782, %v2784
    %v2786 = vsub.f32 1.0, %v2785
    %v2787 = vmul.f32 %v2784, %v2786
    %v2788 = vadd.f32 %v2784, %v2787
    %vm2789 = vweird.f32 %v2782
    %vm2790 = vweird.f32 %v2784
    %vm2791 = vmor %vm2789, %vm2790
    %v2792 = vsel %vm2791, %v2784, %v2788
    %v2793 = vand.u32 2147483647, %v2782
    %vm2794 = vcmp.eq.f32.partialorder %v2793, 8.507059e+37
    %v2795 = vand.u32 %v2782, 2147483648
    %v2796 = vor.u32 1.1754944e-38, %v2795
    %v2797 = vsel %vm2794, %v2796, %v2792
    %v2798 = vmul.f32 1.0, %v2797
    %v2799 = vrcp.pop %v2783
    %v2800 = vmul.f32 %v2783, %v2799
    %v2801 = vsub.f32 1.0, %v2800
    %v2802 = vmul.f32 %v2799, %v2801
    %v2803 = vadd.f32 %v2799, %v2802
    %vm2804 = vweird.f32 %v2783
    %vm2805 = vweird.f32 %v2799
    %vm2806 = vmor %vm2804, %vm2805
    %v2807 = vsel %vm2806, %v2799, %v2803
    %v2808 = vand.u32 2147483647, %v2783
    %vm2809 = vcmp.eq.f32.partialorder %v2808, 8.507059e+37
    %v2810 = vand.u32 %v2783, 2147483648
    %v2811 = vor.u32 1.1754944e-38, %v2810
    %v2812 = vsel %vm2809, %v2811, %v2807
    %v2813 = vmul.f32 1.0, %v2812
    %v2814 = vtanh.pop %v2774
    %v2815 = vtanh.pop %v2775
    %v2818 = vrot.slane %v2718, 7
    %v2819 = vrot.slane %v2719, 7
    %v2822 = vmul.f32 %v2798, %v2818
    %v2823 = vmul.f32 %v2813, %v2819
    %2826 = vrot.lane.b32.xlu0 %v2814, 32
    %v2827 = vpop.permute.xlu0 %2826
    %2828 = vrot.lane.b32.xlu0 %v2815, 32
    %v2829 = vpop.permute.xlu0 %2828
    %v2832 = vmul.f32 %v2798, %v2827
    %v2833 = vmul.f32 %v2813, %v2829
    %2836 = vrot.lane.b32.xlu0 %v2832, 32
    %v2837 = vpop.permute.xlu0 %2836
    %2838 = vrot.lane.b32.xlu0 %v2833, 32
    %v2839 = vpop.permute.xlu0 %2838
    %v2842 = vadd.f32 %v2822, %v2837
    %v2843 = vadd.f32 %v2823, %v2839
    %v2844 = vtanh.pop %v2842
    %v2845 = vtanh.pop %v2843
    %2848 = vrot.lane.b32.xlu0 %v2844, 32
    %v2849 = vpop.permute.xlu0 %2848
    %2850 = vrot.lane.b32.xlu0 %v2845, 32
    %v2851 = vpop.permute.xlu0 %2850
    %v2854 = vmul.f32 %v2798, %v2849
    %v2855 = vmul.f32 %v2813, %v2851
    %2858 = vrot.lane.b32.xlu0 %v2854, 64
    %v2859 = vpop.permute.xlu0 %2858
    %2860 = vrot.lane.b32.xlu0 %v2855, 64
    %v2861 = vpop.permute.xlu0 %2860
    %2864 = vst.msk [vmem:[#allocation5] sm:$0x80] %vm1075, %v2859
    %2865 = vst.msk [vmem:[#allocation5 + $0x8] sm:$0x80] %vm1075, %v2861
    // Predicated region
    $region54: #{seq2seq_attention_forward.1} parent=1 // pred_check
      _
    $region55: #{seq2seq_attention_forward.1} parent=1 // pred_check_branch
      %2867 = sbr.rel (0) target = $region57
    $region56: #{seq2seq_attention_forward.1} parent=1 // pred_region
      %2869 = vsyncadd [#allocation4], 0
      %s2871 = sshll.u32 [#allocation3], 4
      %s2872 = int_to_ptr.vmem [resolvable:$true] %s2871
      %s2873 = sshll.u32 %s13, 4
      %s2874 = int_to_ptr.hbm [resolvable:$true] %s2873
      %2876 = dma.vmem_to_hbm [thread:$0]  %s2872, 32, %s2874, [#allocation4]
    $region57: #{seq2seq_attention_forward.1} parent=1 // pred_fallthru
      _
    // Predicated region
    $region58: #{seq2seq_attention_forward.1} parent=1 // pred_check
      _
    $region59: #{seq2seq_attention_forward.1} parent=1 // pred_check_branch
      %2878 = sbr.rel (0) target = $region61
    $region60: #{seq2seq_attention_forward.1} parent=1 // pred_region
      %2880 = vsyncadd [#allocation6], 0
      %s2881 = sshll.u32 [#allocation5], 4
      %s2882 = int_to_ptr.vmem [resolvable:$true] %s2881
      %s2883 = sshll.u32 %s14, 4
      %s2884 = int_to_ptr.hbm [resolvable:$true] %s2883
      %2889 = dma.vmem_to_hbm [thread:$0]  %s2882, 256, %s2884, [#allocation6], 128, 128, 8
    $region61: #{seq2seq_attention_forward.1} parent=1 // pred_fallthru
      _
    // Predicated region
    $region62: #{seq2seq_attention_forward.1} parent=1 // pred_check
      _
    $region63: #{seq2seq_attention_forward.1} parent=1 // pred_check_branch
      %2891 = sbr.rel (0) target = $region65
    $region64: #{seq2seq_attention_forward.1} parent=1 // pred_region
      %2893 = dma.done [#allocation4], 32
    $region65: #{seq2seq_attention_forward.1} parent=1 // pred_fallthru
      _
    // Predicated region
    $region66: #{seq2seq_attention_forward.1} parent=1 // pred_check
      _
    $region67: #{seq2seq_attention_forward.1} parent=1 // pred_check_branch
      %2895 = sbr.rel (0) target = $region69
    $region68: #{seq2seq_attention_forward.1} parent=1 // pred_region
      %2897 = dma.done [#allocation6], 256
    $region69: #{seq2seq_attention_forward.1} parent=1 // pred_fallthru
      _
    %2898 = vsyncpa [#allocation4], 1
    %2899 = vsyncpa [#allocation6], 1

</llo_original>
